<compile_context>
chip_gen: v7x
topology: tpu7x:2x2x1
jax: 0.10.0
libtpu: 0.0.40
codegen_flags: <defaults>
</compile_context>

<pallas_src>
import functools

import numpy as np
import jax
import jax.numpy as jnp
from jax import lax
from jax.experimental import pallas as pl
from jax.experimental.pallas import tpu as pltpu

BN_EPS = 1e-5
BLOB_LANES = 128
HEADS = (("gender", 1), ("handed", 1), ("years", 3), ("level", 4))


def _align8(n):
    return ((n + 7) // 8) * 8


# ---------------------------------------------------------------------------
# Static (shape-dependent) constants, built once in numpy.
# ---------------------------------------------------------------------------
def _conv_tap_masks(B, H, W):
    """(N, 9) 0/1 masks implementing the 3x3 conv's zero padding on a flat
    (b, h, w)-row-major activation.  mask[p, 3*dh+dw] == 1 iff that tap of output
    row p reads a position inside the image."""
    N = B * H * W
    r = np.arange(N)
    h = (r // W) % H
    w = r % W
    m = np.zeros((N, 9), np.float32)
    for dh in range(3):
        for dw in range(3):
            ok = ((h + dh - 1 >= 0) & (h + dh - 1 < H) &
                  (w + dw - 1 >= 0) & (w + dw - 1 < W))
            m[:, 3 * dh + dw] = ok
    return m


def _maxpool_selection(B, H, W, kh, kw):
    """MaxPool((kh,kw), stride=(kh,kw)) as kh*kw stacked 0/1 selection matrices:
    rows [t*Nout:(t+1)*Nout) pick window element t of every pooled output row."""
    Ho, Wo = H // kh, W // kw
    Nin, Nout = B * H * W, B * Ho * Wo
    P = np.zeros((kh * kw * Nout, Nin), np.float32)
    for b in range(B):
        for ho in range(Ho):
            for wo in range(Wo):
                q = (b * Ho + ho) * Wo + wo
                for i in range(kh):
                    for j in range(kw):
                        pin = (b * H + ho * kh + i) * W + wo * kw + j
                        P[(i * kw + j) * Nout + q, pin] = 1.0
    return P


# ---------------------------------------------------------------------------
# The fused Pallas kernel (whole forward pass, activations never leave VMEM).
# ---------------------------------------------------------------------------
def _fused_cnn_kernel(cfg, x_ref, wb_ref, fb_ref, out_ref, y1_s, x2_s, x3_s, y3_s):
    f32, bf16 = jnp.float32, jnp.bfloat16
    off = cfg["off"]
    n1, n2, n3 = cfg["N1"], cfg["N2"], cfg["N3"]

    def conv_bn_relu(xpad, wcol, mask, scale, bias, W, n, pad):
        """3x3 / stride-1 / pad-1 conv + folded BN + ReLU on a flat (b,h,w)-row
        activation, as ONE im2col matmul.

        xpad : (n + 2*pad, cin) bf16, interior rows at [pad, pad+n).
        mask : (n, 9) bf16 0/1; zeroes taps that fall outside the image (this is
               the conv's zero padding).  Applied on the cin-wide input side.
        wcol : (9*cin, cout) bf16, rows ordered (dh, dw, cin).
        """
        cols = []
        for dh in range(3):
            for dw in range(3):
                t = 3 * dh + dw
                s = (dh - 1) * W + (dw - 1)
                cols.append(xpad[pad + s:pad + s + n, :] * mask[:, t:t + 1])
        xcol = jnp.concatenate(cols, axis=1)                       # (n, 9*cin) bf16
        acc = jnp.dot(xcol, wcol, preferred_element_type=f32)      # (n, cout) f32
        return jnp.maximum(acc * scale + bias, 0.0)

    # ---- Block 1: Conv(2->16)+BN+ReLU, then MaxPool(1,4) via strided-row max ----
    x1 = x_ref[...].astype(bf16)                                   # single cast/layer
    y1_s[...] = conv_bn_relu(
        x1,
        wb_ref[off["w1"]:off["w1"] + 9 * cfg["C0"], 0:cfg["C1"]],
        wb_ref[off["m1"]:off["m1"] + n1, 0:9],
        fb_ref[0:1, 0:cfg["C1"]], fb_ref[1:2, 0:cfg["C1"]],
        cfg["W1"], n1, cfg["pad1"])                                # (N1, 16) f32

    kw1 = cfg["W1"] // cfg["W2"]                                   # pool width = 4
    pooled = y1_s[pl.ds(0, n2, stride=kw1), :]
    for j in range(1, kw1):
        pooled = jnp.maximum(pooled, y1_s[pl.ds(j, n2, stride=kw1), :])
    x2_s[...] = jnp.zeros_like(x2_s)                               # bounds-pad rows = 0
    x2_s[cfg["pad2"]:cfg["pad2"] + n2, :] = pooled

    # ---- Block 2: Conv(16->32)+BN+ReLU, then MaxPool(3,2) via 0/1 selection dots ----
    x2 = x2_s[...].astype(bf16)
    y2 = conv_bn_relu(
        x2,
        wb_ref[off["w2"]:off["w2"] + 9 * cfg["C1"], 0:cfg["C2"]],
        wb_ref[off["m2"]:off["m2"] + n2, 0:9],
        fb_ref[2:3, 0:cfg["C2"]], fb_ref[3:4, 0:cfg["C2"]],
        cfg["W2"], n2, cfg["pad2"])                                # (N2, 32) f32
    y2b = y2.astype(bf16)
    p2 = wb_ref[off["pool2"]:off["pool2"] + 6 * n3, 0:n2]          # (6*N3, N2) bf16
    pooled2 = jnp.dot(p2[0:n3, :], y2b, preferred_element_type=f32)
    for t in range(1, 6):
        pooled2 = jnp.maximum(
            pooled2,
            jnp.dot(p2[t * n3:(t + 1) * n3, :], y2b, preferred_element_type=f32))
    x3_s[...] = jnp.zeros_like(x3_s)
    x3_s[cfg["pad3"]:cfg["pad3"] + n3, :] = pooled2

    # ---- Block 3: Conv(32->64)+BN+ReLU, then global average pool (exact, f32) ----
    x3 = x3_s[...].astype(bf16)
    y3_s[...] = conv_bn_relu(
        x3,
        wb_ref[off["w3"]:off["w3"] + 9 * cfg["C2"], 0:cfg["C3"]],
        wb_ref[off["m3"]:off["m3"] + n3, 0:9],
        fb_ref[4:5, 0:cfg["C3"]], fb_ref[5:6, 0:cfg["C3"]],
        cfg["W3"], n3, cfg["pad3"])                                # (N3, 64) f32

    hw3 = cfg["H3"] * cfg["W3"]
    feats = y3_s[pl.ds(0, cfg["B"], stride=hw3), :]
    for k in range(1, hw3):
        feats = feats + y3_s[pl.ds(k, cfg["B"], stride=hw3), :]
    feats = feats * (1.0 / hw3)                                    # (B, 64) f32

    # ---- Fused 4 heads: Linear(64->128)+ReLU, block-diag Linear(128->128-padded) ----
    n_hidden = cfg["n_hidden"]
    h = jnp.dot(feats.astype(bf16),
                wb_ref[off["head_w1"]:off["head_w1"] + cfg["C3"], 0:n_hidden],
                preferred_element_type=f32) + fb_ref[6:7, 0:n_hidden]
    h = jnp.maximum(h, 0.0)
    out_ref[...] = jnp.dot(h.astype(bf16),
                           wb_ref[off["head_w2"]:off["head_w2"] + n_hidden, :],
                           preferred_element_type=f32) + fb_ref[7:8, :]


# ---------------------------------------------------------------------------
# Parameters (PyTorch-layout) and the packed-blob model build.
# ---------------------------------------------------------------------------
def init_raw_params(key):
    kc1, kc2, kc3, kg, kh, ky, kl = jax.random.split(key, 7)

    def conv_block(k, cin, cout):
        kk = jax.random.split(k, 6)
        return dict(
            w=0.1 * jax.random.normal(kk[0], (cout, cin, 3, 3), jnp.float32),
            b=0.05 * jax.random.normal(kk[1], (cout,), jnp.float32),
            gamma=1.0 + 0.1 * jax.random.normal(kk[2], (cout,), jnp.float32),
            beta=0.1 * jax.random.normal(kk[3], (cout,), jnp.float32),
            mean=0.1 * jax.random.normal(kk[4], (cout,), jnp.float32),
            var=1.0 + 0.5 * jax.random.uniform(kk[5], (cout,), jnp.float32),
        )

    def head(k, k_out):
        kk = jax.random.split(k, 4)
        return dict(
            w1=0.1 * jax.random.normal(kk[0], (64, 32), jnp.float32),
            b1=0.05 * jax.random.normal(kk[1], (32,), jnp.float32),
            w2=0.1 * jax.random.normal(kk[2], (32, k_out), jnp.float32),
            b2=0.05 * jax.random.normal(kk[3], (k_out,), jnp.float32),
        )

    return dict(conv1=conv_block(kc1, 2, 16), conv2=conv_block(kc2, 16, 32),
                conv3=conv_block(kc3, 32, 64),
                gender=head(kg, 1), handed=head(kh, 1),
                years=head(ky, 3), level=head(kl, 4))


def build_model(raw, B, H, W):
    """Fold eval-mode BN, reshape conv weights to im2col layout, build masks and the
    MaxPool(3,2) selection matrix, fuse the 4 heads, and pack everything into one bf16
    blob + one f32 blob (single DMA each)."""
    C0, C1, C2, C3 = 2, 16, 32, 64
    H1, W1 = H, W
    assert W1 % 4 == 0
    H2, W2 = H1, W1 // 4                          # after MaxPool(1, 4)
    assert H2 % 3 == 0 and W2 % 2 == 0
    H3, W3 = H2 // 3, W2 // 2                     # after MaxPool(3, 2)
    N1, N2, N3 = B * H1 * W1, B * H2 * W2, B * H3 * W3
    pad1, pad2, pad3 = _align8(W1 + 1), _align8(W2 + 1), _align8(W3 + 1)
    assert N2 <= BLOB_LANES                       # pool-2 selection fits blob lanes

    def fold(p):
        scale = np.asarray(p["gamma"]) / np.sqrt(np.asarray(p["var"]) + BN_EPS)
        bias = (np.asarray(p["b"]) - np.asarray(p["mean"])) * scale + np.asarray(p["beta"])
        w = np.asarray(p["w"])                                    # (cout, cin, 3, 3)
        wcol = np.transpose(w, (2, 3, 1, 0)).reshape(9 * w.shape[1], w.shape[0])
        return wcol, scale, bias

    w1c, s1, b1 = fold(raw["conv1"])
    w2c, s2, b2 = fold(raw["conv2"])
    w3c, s3, b3 = fold(raw["conv3"])

    m1 = _conv_tap_masks(B, H1, W1)
    m2 = _conv_tap_masks(B, H2, W2)
    m3 = _conv_tap_masks(B, H3, W3)
    p2 = _maxpool_selection(B, H2, W2, 3, 2)                      # (6*N3, N2)

    # Fused heads: hidden lanes [32*i, 32*(i+1)) per head; second layer block-diagonal
    # into logit columns [gender:1 | handed:1 | years:3 | level:4], padded to 128 lanes.
    n_hidden = 32 * len(HEADS)
    hw1 = np.zeros((C3, BLOB_LANES), np.float32)
    hb1 = np.zeros((BLOB_LANES,), np.float32)
    hw2 = np.zeros((BLOB_LANES, BLOB_LANES), np.float32)
    hb2 = np.zeros((BLOB_LANES,), np.float32)
    col = 0
    for i, (name, k_out) in enumerate(HEADS):
        hp = raw[name]
        hw1[:, 32 * i:32 * (i + 1)] = np.asarray(hp["w1"])
        hb1[32 * i:32 * (i + 1)] = np.asarray(hp["b1"])
        hw2[32 * i:32 * (i + 1), col:col + k_out] = np.asarray(hp["w2"])
        hb2[col:col + k_out] = np.asarray(hp["b2"])
        col += k_out

    # --- pack everything MXU-facing (bf16) into one blob; starts 8-row aligned ---
    off, rows = {}, 0

    def alloc(name, nrows):
        nonlocal rows
        off[name] = rows
        rows += _align8(nrows)

    alloc("w1", 9 * C0); alloc("w2", 9 * C1); alloc("w3", 9 * C2)
    alloc("pool2", p2.shape[0]); alloc("head_w1", C3); alloc("head_w2", n_hidden)
    alloc("m1", N1); alloc("m2", N2); alloc("m3", N3)

    wblob = np.zeros((rows, BLOB_LANES), np.float32)

    def put(name, arr):
        wblob[off[name]:off[name] + arr.shape[0], :arr.shape[1]] = arr

    put("w1", w1c); put("w2", w2c); put("w3", w3c); put("pool2", p2)
    put("head_w1", hw1); put("head_w2", hw2)
    put("m1", m1); put("m2", m2); put("m3", m3)

    # --- small f32 blob: folded-BN scale/bias per layer + fused head biases ---
    fblob = np.zeros((8, BLOB_LANES), np.float32)
    for r, v in enumerate((s1, b1, s2, b2, s3, b3, hb1, hb2)):
        fblob[r, :v.shape[0]] = v

    cfg = dict(B=B, C0=C0, C1=C1, C2=C2, C3=C3,
               H1=H1, W1=W1, H2=H2, W2=W2, H3=H3, W3=W3,
               N1=N1, N2=N2, N3=N3, pad1=pad1, pad2=pad2, pad3=pad3,
               n_hidden=n_hidden, off=off)
    return dict(cfg=cfg,
                wblob=jnp.asarray(wblob, jnp.bfloat16),
                fblob=jnp.asarray(fblob, jnp.float32))


# ---------------------------------------------------------------------------
# Forward pass (matches CNNClassifier.forward semantics, eval-mode BatchNorm).
# ---------------------------------------------------------------------------
def forward(model, x_nchw):
    cfg = model["cfg"]
    B, C, H, W = x_nchw.shape
    assert (B, C, H, W) == (cfg["B"], cfg["C0"], cfg["H1"], cfg["W1"])

    # NCHW -> flat rows (b, h, w) row-major, channels in lanes; add bounds-padding rows
    # so the in-kernel shifted tap slices stay in range (the conv zero padding itself is
    # implemented by the per-tap masks).
    x = jnp.transpose(x_nchw, (0, 2, 3, 1)).reshape(B * H * W, C).astype(jnp.float32)
    x_pad = jnp.pad(x, ((cfg["pad1"], cfg["pad1"]), (0, 0)))

    kernel = functools.partial(_fused_cnn_kernel, cfg)
    logits = pl.pallas_call(
        kernel,
        out_shape=jax.ShapeDtypeStruct((B, BLOB_LANES), jnp.float32),
        in_specs=[pl.BlockSpec(memory_space=pltpu.MemorySpace.VMEM)] * 3,
        out_specs=pl.BlockSpec(memory_space=pltpu.MemorySpace.VMEM),
        scratch_shapes=[
            pltpu.VMEM((cfg["N1"], cfg["C1"]), jnp.float32),                     # y1
            pltpu.VMEM((cfg["N2"] + 2 * cfg["pad2"], cfg["C1"]), jnp.float32),   # x2 (padded)
            pltpu.VMEM((cfg["N3"] + 2 * cfg["pad3"], cfg["C2"]), jnp.float32),   # x3 (padded)
            pltpu.VMEM((cfg["N3"], cfg["C3"]), jnp.float32),                     # y3
        ],
    )(x_pad, model["wblob"], model["fblob"])

    return {
        "gender": logits[:, 0:1],
        "handed": logits[:, 1:2],
        "years": logits[:, 2:5],
        "level": logits[:, 5:9],
    }


# ---------------------------------------------------------------------------
# Plain-JAX f32 reference of the PyTorch module (for validation).
# ---------------------------------------------------------------------------
def reference_forward(raw, x):
    def conv_bn_relu(x, p):
        y = lax.conv_general_dilated(x, p["w"], window_strides=(1, 1),
                                     padding=((1, 1), (1, 1)),
                                     dimension_numbers=("NCHW", "OIHW", "NCHW"))
        y = y + p["b"][None, :, None, None]
        scale = p["gamma"] / jnp.sqrt(p["var"] + BN_EPS)
        y = (y - p["mean"][None, :, None, None]) * scale[None, :, None, None] \
            + p["beta"][None, :, None, None]
        return jnp.maximum(y, 0.0)

    def maxpool(x, kh, kw):
        return lax.reduce_window(x, -jnp.inf, lax.max,
                                 (1, 1, kh, kw), (1, 1, kh, kw), "VALID")

    y = maxpool(conv_bn_relu(x, raw["conv1"]), 1, 4)
    y = maxpool(conv_bn_relu(y, raw["conv2"]), 3, 2)
    y = conv_bn_relu(y, raw["conv3"])
    feats = jnp.mean(y, axis=(2, 3))                               # AdaptiveAvgPool(1,1)

    def head(p):
        h = jnp.maximum(feats @ p["w1"] + p["b1"], 0.0)
        return h @ p["w2"] + p["b2"]

    return {name: head(raw[name]) for name, _ in HEADS}


if __name__ == "__main__":
    key = jax.random.PRNGKey(0)
    kx, kp = jax.random.split(key)

    # Input spatial size chosen so the pooling chain is exact:
    # (6,16) -MaxPool(1,4)-> (6,4) -MaxPool(3,2)-> (2,2) -AdaptiveAvgPool-> (1,1)
    B, Cin, H, W = 2, 2, 6, 16
    x = jax.random.normal(kx, (B, Cin, H, W), dtype=jnp.float32)

    raw = init_raw_params(kp)
    model = build_model(raw, B, H, W)

    fwd = jax.jit(functools.partial(forward, model))
    out = fwd(x)
    jax.block_until_ready(out)

    assert out["gender"].shape == (B, 1)
    assert out["handed"].shape == (B, 1)
    assert out["years"].shape == (B, 3)
    assert out["level"].shape == (B, 4)

    # Validate the fused bf16/f32 kernel against the plain-JAX f32 reference.
    ref = reference_forward(raw, x)
    for name, _ in HEADS:
        np.testing.assert_allclose(np.asarray(out[name]), np.asarray(ref[name]),
                                   rtol=1e-1, atol=5e-2)

    print("KERNEL_OK")
</pallas_src>

<mosaic_0001>
module attributes {stable_mosaic.version = 11 : i64} {
  func.func @_fused_cnn_kernel(%arg0: memref<240x2xf32, #tpu.memory_space<vmem>>, %arg1: memref<944x128xbf16, #tpu.memory_space<vmem>>, %arg2: memref<8x128xf32, #tpu.memory_space<vmem>>, %arg3: memref<2x128xf32, #tpu.memory_space<vmem>>, %arg4: memref<192x16xf32, #tpu.memory_space<vmem>>, %arg5: memref<64x16xf32, #tpu.memory_space<vmem>>, %arg6: memref<24x32xf32, #tpu.memory_space<vmem>>, %arg7: memref<8x64xf32, #tpu.memory_space<vmem>>) attributes {dimension_semantics = [], scalar_prefetch = 0 : i64, scratch_operands = 4 : i64, tpu.core_type = #tpu.core_type<tc>} {
    %c0 = arith.constant 0 : index
    %c0_0 = arith.constant 0 : index
    %0 = vector.load %arg0[%c0, %c0_0] : memref<240x2xf32, #tpu.memory_space<vmem>>, vector<240x2xf32>
    %1 = arith.truncf %0 : vector<240x2xf32> to vector<240x2xbf16>
    %c0_1 = arith.constant 0 : index
    %c0_2 = arith.constant 0 : index
    %2 = vector.load %arg1[%c0_1, %c0_2] : memref<944x128xbf16, #tpu.memory_space<vmem>>, vector<18x16xbf16>
    %c696 = arith.constant 696 : index
    %c0_3 = arith.constant 0 : index
    %3 = vector.load %arg1[%c696, %c0_3] : memref<944x128xbf16, #tpu.memory_space<vmem>>, vector<192x9xbf16>
    %c0_4 = arith.constant 0 : index
    %c0_5 = arith.constant 0 : index
    %4 = vector.load %arg2[%c0_4, %c0_5] : memref<8x128xf32, #tpu.memory_space<vmem>>, vector<1x16xf32>
    %c1 = arith.constant 1 : index
    %c0_6 = arith.constant 0 : index
    %5 = vector.load %arg2[%c1, %c0_6] : memref<8x128xf32, #tpu.memory_space<vmem>>, vector<1x16xf32>
    %6 = vector.extract_strided_slice %1 {offsets = [7, 0], sizes = [192, 2], strides = [1, 1]} : vector<240x2xbf16> to vector<192x2xbf16>
    %7 = vector.extract_strided_slice %3 {offsets = [0, 0], sizes = [192, 1], strides = [1, 1]} : vector<192x9xbf16> to vector<192x1xbf16>
    %8 = vector.broadcast %7 : vector<192x1xbf16> to vector<192x2xbf16>
    %9 = arith.mulf %6, %8 : vector<192x2xbf16>
    %10 = vector.extract_strided_slice %1 {offsets = [8, 0], sizes = [192, 2], strides = [1, 1]} : vector<240x2xbf16> to vector<192x2xbf16>
    %11 = vector.extract_strided_slice %3 {offsets = [0, 1], sizes = [192, 1], strides = [1, 1]} : vector<192x9xbf16> to vector<192x1xbf16>
    %12 = vector.broadcast %11 : vector<192x1xbf16> to vector<192x2xbf16>
    %13 = arith.mulf %10, %12 : vector<192x2xbf16>
    %14 = vector.extract_strided_slice %1 {offsets = [9, 0], sizes = [192, 2], strides = [1, 1]} : vector<240x2xbf16> to vector<192x2xbf16>
    %15 = vector.extract_strided_slice %3 {offsets = [0, 2], sizes = [192, 1], strides = [1, 1]} : vector<192x9xbf16> to vector<192x1xbf16>
    %16 = vector.broadcast %15 : vector<192x1xbf16> to vector<192x2xbf16>
    %17 = arith.mulf %14, %16 : vector<192x2xbf16>
    %18 = vector.extract_strided_slice %1 {offsets = [23, 0], sizes = [192, 2], strides = [1, 1]} : vector<240x2xbf16> to vector<192x2xbf16>
    %19 = vector.extract_strided_slice %3 {offsets = [0, 3], sizes = [192, 1], strides = [1, 1]} : vector<192x9xbf16> to vector<192x1xbf16>
    %20 = vector.broadcast %19 : vector<192x1xbf16> to vector<192x2xbf16>
    %21 = arith.mulf %18, %20 : vector<192x2xbf16>
    %22 = vector.extract_strided_slice %1 {offsets = [24, 0], sizes = [192, 2], strides = [1, 1]} : vector<240x2xbf16> to vector<192x2xbf16>
    %23 = vector.extract_strided_slice %3 {offsets = [0, 4], sizes = [192, 1], strides = [1, 1]} : vector<192x9xbf16> to vector<192x1xbf16>
    %24 = vector.broadcast %23 : vector<192x1xbf16> to vector<192x2xbf16>
    %25 = arith.mulf %22, %24 : vector<192x2xbf16>
    %26 = vector.extract_strided_slice %1 {offsets = [25, 0], sizes = [192, 2], strides = [1, 1]} : vector<240x2xbf16> to vector<192x2xbf16>
    %27 = vector.extract_strided_slice %3 {offsets = [0, 5], sizes = [192, 1], strides = [1, 1]} : vector<192x9xbf16> to vector<192x1xbf16>
    %28 = vector.broadcast %27 : vector<192x1xbf16> to vector<192x2xbf16>
    %29 = arith.mulf %26, %28 : vector<192x2xbf16>
    %30 = vector.extract_strided_slice %1 {offsets = [39, 0], sizes = [192, 2], strides = [1, 1]} : vector<240x2xbf16> to vector<192x2xbf16>
    %31 = vector.extract_strided_slice %3 {offsets = [0, 6], sizes = [192, 1], strides = [1, 1]} : vector<192x9xbf16> to vector<192x1xbf16>
    %32 = vector.broadcast %31 : vector<192x1xbf16> to vector<192x2xbf16>
    %33 = arith.mulf %30, %32 : vector<192x2xbf16>
    %34 = vector.extract_strided_slice %1 {offsets = [40, 0], sizes = [192, 2], strides = [1, 1]} : vector<240x2xbf16> to vector<192x2xbf16>
    %35 = vector.extract_strided_slice %3 {offsets = [0, 7], sizes = [192, 1], strides = [1, 1]} : vector<192x9xbf16> to vector<192x1xbf16>
    %36 = vector.broadcast %35 : vector<192x1xbf16> to vector<192x2xbf16>
    %37 = arith.mulf %34, %36 : vector<192x2xbf16>
    %38 = vector.extract_strided_slice %1 {offsets = [41, 0], sizes = [192, 2], strides = [1, 1]} : vector<240x2xbf16> to vector<192x2xbf16>
    %39 = vector.extract_strided_slice %3 {offsets = [0, 8], sizes = [192, 1], strides = [1, 1]} : vector<192x9xbf16> to vector<192x1xbf16>
    %40 = vector.broadcast %39 : vector<192x1xbf16> to vector<192x2xbf16>
    %41 = arith.mulf %38, %40 : vector<192x2xbf16>
    %42 = tpu.concatenate %9, %13, %17, %21, %25, %29, %33, %37, %41 in 1 : vector<192x2xbf16>, vector<192x2xbf16>, vector<192x2xbf16>, vector<192x2xbf16>, vector<192x2xbf16>, vector<192x2xbf16>, vector<192x2xbf16>, vector<192x2xbf16>, vector<192x2xbf16> -> vector<192x18xbf16>
    %cst = arith.constant dense<0.000000e+00> : vector<192x16xf32>
    %43 = tpu.matmul %42, %2, %cst {dimension_numbers = #tpu.dot_dimension_numbers<[1], [0], [0], [1], [0, 0, 1, 1], [], []>} : vector<192x18xbf16>, vector<18x16xbf16>, vector<192x16xf32> -> vector<192x16xf32>
    %44 = vector.broadcast %4 : vector<1x16xf32> to vector<192x16xf32>
    %45 = arith.mulf %43, %44 : vector<192x16xf32>
    %46 = vector.broadcast %5 : vector<1x16xf32> to vector<192x16xf32>
    %47 = arith.addf %45, %46 : vector<192x16xf32>
    %cst_7 = arith.constant 0.000000e+00 : f32
    %48 = vector.broadcast %cst_7 : f32 to vector<192x16xf32>
    %49 = arith.maximumf %47, %48 : vector<192x16xf32>
    %c0_8 = arith.constant 0 : index
    %c0_9 = arith.constant 0 : index
    %50 = vector.load %arg4[%c0_8, %c0_9] : memref<192x16xf32, #tpu.memory_space<vmem>>, vector<192x16xf32>
    tpu.vector_store %arg4[%c0_8, %c0_9], %49 {strides = array<i32>} : memref<192x16xf32, #tpu.memory_space<vmem>>, vector<192x16xf32>,
    %c0_10 = arith.constant 0 : index
    %c0_11 = arith.constant 0 : index
    %51 = tpu.strided_load %arg4[%c0_10, %c0_11] {strides = array<i32: 4, 1>} : memref<192x16xf32, #tpu.memory_space<vmem>>, vector<48x16xf32>
    %c1_12 = arith.constant 1 : index
    %c0_13 = arith.constant 0 : index
    %52 = tpu.strided_load %arg4[%c1_12, %c0_13] {strides = array<i32: 4, 1>} : memref<192x16xf32, #tpu.memory_space<vmem>>, vector<48x16xf32>
    %53 = arith.maximumf %51, %52 : vector<48x16xf32>
    %c2 = arith.constant 2 : index
    %c0_14 = arith.constant 0 : index
    %54 = tpu.strided_load %arg4[%c2, %c0_14] {strides = array<i32: 4, 1>} : memref<192x16xf32, #tpu.memory_space<vmem>>, vector<48x16xf32>
    %55 = arith.maximumf %53, %54 : vector<48x16xf32>
    %c3 = arith.constant 3 : index
    %c0_15 = arith.constant 0 : index
    %56 = tpu.strided_load %arg4[%c3, %c0_15] {strides = array<i32: 4, 1>} : memref<192x16xf32, #tpu.memory_space<vmem>>, vector<48x16xf32>
    %57 = arith.maximumf %55, %56 : vector<48x16xf32>
    %cst_16 = arith.constant 0.000000e+00 : f32
    %58 = vector.broadcast %cst_16 : f32 to vector<64x16xf32>
    %c0_17 = arith.constant 0 : index
    %c0_18 = arith.constant 0 : index
    %59 = vector.load %arg5[%c0_17, %c0_18] : memref<64x16xf32, #tpu.memory_space<vmem>>, vector<64x16xf32>
    tpu.vector_store %arg5[%c0_17, %c0_18], %58 {strides = array<i32>} : memref<64x16xf32, #tpu.memory_space<vmem>>, vector<64x16xf32>,
    %c8 = arith.constant 8 : index
    %c0_19 = arith.constant 0 : index
    %60 = vector.load %arg5[%c8, %c0_19] : memref<64x16xf32, #tpu.memory_space<vmem>>, vector<48x16xf32>
    tpu.vector_store %arg5[%c8, %c0_19], %57 {strides = array<i32>} : memref<64x16xf32, #tpu.memory_space<vmem>>, vector<48x16xf32>,
    %c0_20 = arith.constant 0 : index
    %c0_21 = arith.constant 0 : index
    %61 = vector.load %arg5[%c0_20, %c0_21] : memref<64x16xf32, #tpu.memory_space<vmem>>, vector<64x16xf32>
    %62 = arith.truncf %61 : vector<64x16xf32> to vector<64x16xbf16>
    %c24 = arith.constant 24 : index
    %c0_22 = arith.constant 0 : index
    %63 = vector.load %arg1[%c24, %c0_22] : memref<944x128xbf16, #tpu.memory_space<vmem>>, vector<144x32xbf16>
    %c888 = arith.constant 888 : index
    %c0_23 = arith.constant 0 : index
    %64 = vector.load %arg1[%c888, %c0_23] : memref<944x128xbf16, #tpu.memory_space<vmem>>, vector<48x9xbf16>
    %c2_24 = arith.constant 2 : index
    %c0_25 = arith.constant 0 : index
    %65 = vector.load %arg2[%c2_24, %c0_25] : memref<8x128xf32, #tpu.memory_space<vmem>>, vector<1x32xf32>
    %c3_26 = arith.constant 3 : index
    %c0_27 = arith.constant 0 : index
    %66 = vector.load %arg2[%c3_26, %c0_27] : memref<8x128xf32, #tpu.memory_space<vmem>>, vector<1x32xf32>
    %67 = vector.extract_strided_slice %62 {offsets = [3, 0], sizes = [48, 16], strides = [1, 1]} : vector<64x16xbf16> to vector<48x16xbf16>
    %68 = vector.extract_strided_slice %64 {offsets = [0, 0], sizes = [48, 1], strides = [1, 1]} : vector<48x9xbf16> to vector<48x1xbf16>
    %69 = vector.broadcast %68 : vector<48x1xbf16> to vector<48x16xbf16>
    %70 = arith.mulf %67, %69 : vector<48x16xbf16>
    %71 = vector.extract_strided_slice %62 {offsets = [4, 0], sizes = [48, 16], strides = [1, 1]} : vector<64x16xbf16> to vector<48x16xbf16>
    %72 = vector.extract_strided_slice %64 {offsets = [0, 1], sizes = [48, 1], strides = [1, 1]} : vector<48x9xbf16> to vector<48x1xbf16>
    %73 = vector.broadcast %72 : vector<48x1xbf16> to vector<48x16xbf16>
    %74 = arith.mulf %71, %73 : vector<48x16xbf16>
    %75 = vector.extract_strided_slice %62 {offsets = [5, 0], sizes = [48, 16], strides = [1, 1]} : vector<64x16xbf16> to vector<48x16xbf16>
    %76 = vector.extract_strided_slice %64 {offsets = [0, 2], sizes = [48, 1], strides = [1, 1]} : vector<48x9xbf16> to vector<48x1xbf16>
    %77 = vector.broadcast %76 : vector<48x1xbf16> to vector<48x16xbf16>
    %78 = arith.mulf %75, %77 : vector<48x16xbf16>
    %79 = vector.extract_strided_slice %62 {offsets = [7, 0], sizes = [48, 16], strides = [1, 1]} : vector<64x16xbf16> to vector<48x16xbf16>
    %80 = vector.extract_strided_slice %64 {offsets = [0, 3], sizes = [48, 1], strides = [1, 1]} : vector<48x9xbf16> to vector<48x1xbf16>
    %81 = vector.broadcast %80 : vector<48x1xbf16> to vector<48x16xbf16>
    %82 = arith.mulf %79, %81 : vector<48x16xbf16>
    %83 = vector.extract_strided_slice %62 {offsets = [8, 0], sizes = [48, 16], strides = [1, 1]} : vector<64x16xbf16> to vector<48x16xbf16>
    %84 = vector.extract_strided_slice %64 {offsets = [0, 4], sizes = [48, 1], strides = [1, 1]} : vector<48x9xbf16> to vector<48x1xbf16>
    %85 = vector.broadcast %84 : vector<48x1xbf16> to vector<48x16xbf16>
    %86 = arith.mulf %83, %85 : vector<48x16xbf16>
    %87 = vector.extract_strided_slice %62 {offsets = [9, 0], sizes = [48, 16], strides = [1, 1]} : vector<64x16xbf16> to vector<48x16xbf16>
    %88 = vector.extract_strided_slice %64 {offsets = [0, 5], sizes = [48, 1], strides = [1, 1]} : vector<48x9xbf16> to vector<48x1xbf16>
    %89 = vector.broadcast %88 : vector<48x1xbf16> to vector<48x16xbf16>
    %90 = arith.mulf %87, %89 : vector<48x16xbf16>
    %91 = vector.extract_strided_slice %62 {offsets = [11, 0], sizes = [48, 16], strides = [1, 1]} : vector<64x16xbf16> to vector<48x16xbf16>
    %92 = vector.extract_strided_slice %64 {offsets = [0, 6], sizes = [48, 1], strides = [1, 1]} : vector<48x9xbf16> to vector<48x1xbf16>
    %93 = vector.broadcast %92 : vector<48x1xbf16> to vector<48x16xbf16>
    %94 = arith.mulf %91, %93 : vector<48x16xbf16>
    %95 = vector.extract_strided_slice %62 {offsets = [12, 0], sizes = [48, 16], strides = [1, 1]} : vector<64x16xbf16> to vector<48x16xbf16>
    %96 = vector.extract_strided_slice %64 {offsets = [0, 7], sizes = [48, 1], strides = [1, 1]} : vector<48x9xbf16> to vector<48x1xbf16>
    %97 = vector.broadcast %96 : vector<48x1xbf16> to vector<48x16xbf16>
    %98 = arith.mulf %95, %97 : vector<48x16xbf16>
    %99 = vector.extract_strided_slice %62 {offsets = [13, 0], sizes = [48, 16], strides = [1, 1]} : vector<64x16xbf16> to vector<48x16xbf16>
    %100 = vector.extract_strided_slice %64 {offsets = [0, 8], sizes = [48, 1], strides = [1, 1]} : vector<48x9xbf16> to vector<48x1xbf16>
    %101 = vector.broadcast %100 : vector<48x1xbf16> to vector<48x16xbf16>
    %102 = arith.mulf %99, %101 : vector<48x16xbf16>
    %103 = tpu.concatenate %70, %74, %78, %82, %86, %90, %94, %98, %102 in 1 : vector<48x16xbf16>, vector<48x16xbf16>, vector<48x16xbf16>, vector<48x16xbf16>, vector<48x16xbf16>, vector<48x16xbf16>, vector<48x16xbf16>, vector<48x16xbf16>, vector<48x16xbf16> -> vector<48x144xbf16>
    %cst_28 = arith.constant dense<0.000000e+00> : vector<48x32xf32>
    %104 = tpu.matmul %103, %63, %cst_28 {dimension_numbers = #tpu.dot_dimension_numbers<[1], [0], [0], [1], [0, 0, 1, 1], [], []>} : vector<48x144xbf16>, vector<144x32xbf16>, vector<48x32xf32> -> vector<48x32xf32>
    %105 = vector.broadcast %65 : vector<1x32xf32> to vector<48x32xf32>
    %106 = arith.mulf %104, %105 : vector<48x32xf32>
    %107 = vector.broadcast %66 : vector<1x32xf32> to vector<48x32xf32>
    %108 = arith.addf %106, %107 : vector<48x32xf32>
    %cst_29 = arith.constant 0.000000e+00 : f32
    %109 = vector.broadcast %cst_29 : f32 to vector<48x32xf32>
    %110 = arith.maximumf %108, %109 : vector<48x32xf32>
    %111 = arith.truncf %110 : vector<48x32xf32> to vector<48x32xbf16>
    %c456 = arith.constant 456 : index
    %c0_30 = arith.constant 0 : index
    %112 = vector.load %arg1[%c456, %c0_30] : memref<944x128xbf16, #tpu.memory_space<vmem>>, vector<48x48xbf16>
    %113 = vector.extract_strided_slice %112 {offsets = [0, 0], sizes = [8, 48], strides = [1, 1]} : vector<48x48xbf16> to vector<8x48xbf16>
    %cst_31 = arith.constant dense<0.000000e+00> : vector<8x32xf32>
    %114 = tpu.matmul %113, %111, %cst_31 {dimension_numbers = #tpu.dot_dimension_numbers<[1], [0], [0], [1], [0, 0, 1, 1], [], []>} : vector<8x48xbf16>, vector<48x32xbf16>, vector<8x32xf32> -> vector<8x32xf32>
    %115 = vector.extract_strided_slice %112 {offsets = [8, 0], sizes = [8, 48], strides = [1, 1]} : vector<48x48xbf16> to vector<8x48xbf16>
    %cst_32 = arith.constant dense<0.000000e+00> : vector<8x32xf32>
    %116 = tpu.matmul %115, %111, %cst_32 {dimension_numbers = #tpu.dot_dimension_numbers<[1], [0], [0], [1], [0, 0, 1, 1], [], []>} : vector<8x48xbf16>, vector<48x32xbf16>, vector<8x32xf32> -> vector<8x32xf32>
    %117 = arith.maximumf %114, %116 : vector<8x32xf32>
    %118 = vector.extract_strided_slice %112 {offsets = [16, 0], sizes = [8, 48], strides = [1, 1]} : vector<48x48xbf16> to vector<8x48xbf16>
    %cst_33 = arith.constant dense<0.000000e+00> : vector<8x32xf32>
    %119 = tpu.matmul %118, %111, %cst_33 {dimension_numbers = #tpu.dot_dimension_numbers<[1], [0], [0], [1], [0, 0, 1, 1], [], []>} : vector<8x48xbf16>, vector<48x32xbf16>, vector<8x32xf32> -> vector<8x32xf32>
    %120 = arith.maximumf %117, %119 : vector<8x32xf32>
    %121 = vector.extract_strided_slice %112 {offsets = [24, 0], sizes = [8, 48], strides = [1, 1]} : vector<48x48xbf16> to vector<8x48xbf16>
    %cst_34 = arith.constant dense<0.000000e+00> : vector<8x32xf32>
    %122 = tpu.matmul %121, %111, %cst_34 {dimension_numbers = #tpu.dot_dimension_numbers<[1], [0], [0], [1], [0, 0, 1, 1], [], []>} : vector<8x48xbf16>, vector<48x32xbf16>, vector<8x32xf32> -> vector<8x32xf32>
    %123 = arith.maximumf %120, %122 : vector<8x32xf32>
    %124 = vector.extract_strided_slice %112 {offsets = [32, 0], sizes = [8, 48], strides = [1, 1]} : vector<48x48xbf16> to vector<8x48xbf16>
    %cst_35 = arith.constant dense<0.000000e+00> : vector<8x32xf32>
    %125 = tpu.matmul %124, %111, %cst_35 {dimension_numbers = #tpu.dot_dimension_numbers<[1], [0], [0], [1], [0, 0, 1, 1], [], []>} : vector<8x48xbf16>, vector<48x32xbf16>, vector<8x32xf32> -> vector<8x32xf32>
    %126 = arith.maximumf %123, %125 : vector<8x32xf32>
    %127 = vector.extract_strided_slice %112 {offsets = [40, 0], sizes = [8, 48], strides = [1, 1]} : vector<48x48xbf16> to vector<8x48xbf16>
    %cst_36 = arith.constant dense<0.000000e+00> : vector<8x32xf32>
    %128 = tpu.matmul %127, %111, %cst_36 {dimension_numbers = #tpu.dot_dimension_numbers<[1], [0], [0], [1], [0, 0, 1, 1], [], []>} : vector<8x48xbf16>, vector<48x32xbf16>, vector<8x32xf32> -> vector<8x32xf32>
    %129 = arith.maximumf %126, %128 : vector<8x32xf32>
    %cst_37 = arith.constant 0.000000e+00 : f32
    %130 = vector.broadcast %cst_37 : f32 to vector<24x32xf32>
    %c0_38 = arith.constant 0 : index
    %c0_39 = arith.constant 0 : index
    %131 = vector.load %arg6[%c0_38, %c0_39] : memref<24x32xf32, #tpu.memory_space<vmem>>, vector<24x32xf32>
    tpu.vector_store %arg6[%c0_38, %c0_39], %130 {strides = array<i32>} : memref<24x32xf32, #tpu.memory_space<vmem>>, vector<24x32xf32>,
    %c8_40 = arith.constant 8 : index
    %c0_41 = arith.constant 0 : index
    %132 = vector.load %arg6[%c8_40, %c0_41] : memref<24x32xf32, #tpu.memory_space<vmem>>, vector<8x32xf32>
    tpu.vector_store %arg6[%c8_40, %c0_41], %129 {strides = array<i32>} : memref<24x32xf32, #tpu.memory_space<vmem>>, vector<8x32xf32>,
    %c0_42 = arith.constant 0 : index
    %c0_43 = arith.constant 0 : index
    %133 = vector.load %arg6[%c0_42, %c0_43] : memref<24x32xf32, #tpu.memory_space<vmem>>, vector<24x32xf32>
    %134 = arith.truncf %133 : vector<24x32xf32> to vector<24x32xbf16>
    %c168 = arith.constant 168 : index
    %c0_44 = arith.constant 0 : index
    %135 = vector.load %arg1[%c168, %c0_44] : memref<944x128xbf16, #tpu.memory_space<vmem>>, vector<288x64xbf16>
    %c936 = arith.constant 936 : index
    %c0_45 = arith.constant 0 : index
    %136 = vector.load %arg1[%c936, %c0_45] : memref<944x128xbf16, #tpu.memory_space<vmem>>, vector<8x9xbf16>
    %c4 = arith.constant 4 : index
    %c0_46 = arith.constant 0 : index
    %137 = vector.load %arg2[%c4, %c0_46] : memref<8x128xf32, #tpu.memory_space<vmem>>, vector<1x64xf32>
    %c5 = arith.constant 5 : index
    %c0_47 = arith.constant 0 : index
    %138 = vector.load %arg2[%c5, %c0_47] : memref<8x128xf32, #tpu.memory_space<vmem>>, vector<1x64xf32>
    %139 = vector.extract_strided_slice %134 {offsets = [5, 0], sizes = [8, 32], strides = [1, 1]} : vector<24x32xbf16> to vector<8x32xbf16>
    %140 = vector.extract_strided_slice %136 {offsets = [0, 0], sizes = [8, 1], strides = [1, 1]} : vector<8x9xbf16> to vector<8x1xbf16>
    %141 = vector.broadcast %140 : vector<8x1xbf16> to vector<8x32xbf16>
    %142 = arith.mulf %139, %141 : vector<8x32xbf16>
    %143 = vector.extract_strided_slice %134 {offsets = [6, 0], sizes = [8, 32], strides = [1, 1]} : vector<24x32xbf16> to vector<8x32xbf16>
    %144 = vector.extract_strided_slice %136 {offsets = [0, 1], sizes = [8, 1], strides = [1, 1]} : vector<8x9xbf16> to vector<8x1xbf16>
    %145 = vector.broadcast %144 : vector<8x1xbf16> to vector<8x32xbf16>
    %146 = arith.mulf %143, %145 : vector<8x32xbf16>
    %147 = vector.extract_strided_slice %134 {offsets = [7, 0], sizes = [8, 32], strides = [1, 1]} : vector<24x32xbf16> to vector<8x32xbf16>
    %148 = vector.extract_strided_slice %136 {offsets = [0, 2], sizes = [8, 1], strides = [1, 1]} : vector<8x9xbf16> to vector<8x1xbf16>
    %149 = vector.broadcast %148 : vector<8x1xbf16> to vector<8x32xbf16>
    %150 = arith.mulf %147, %149 : vector<8x32xbf16>
    %151 = vector.extract_strided_slice %134 {offsets = [7, 0], sizes = [8, 32], strides = [1, 1]} : vector<24x32xbf16> to vector<8x32xbf16>
    %152 = vector.extract_strided_slice %136 {offsets = [0, 3], sizes = [8, 1], strides = [1, 1]} : vector<8x9xbf16> to vector<8x1xbf16>
    %153 = vector.broadcast %152 : vector<8x1xbf16> to vector<8x32xbf16>
    %154 = arith.mulf %151, %153 : vector<8x32xbf16>
    %155 = vector.extract_strided_slice %134 {offsets = [8, 0], sizes = [8, 32], strides = [1, 1]} : vector<24x32xbf16> to vector<8x32xbf16>
    %156 = vector.extract_strided_slice %136 {offsets = [0, 4], sizes = [8, 1], strides = [1, 1]} : vector<8x9xbf16> to vector<8x1xbf16>
    %157 = vector.broadcast %156 : vector<8x1xbf16> to vector<8x32xbf16>
    %158 = arith.mulf %155, %157 : vector<8x32xbf16>
    %159 = vector.extract_strided_slice %134 {offsets = [9, 0], sizes = [8, 32], strides = [1, 1]} : vector<24x32xbf16> to vector<8x32xbf16>
    %160 = vector.extract_strided_slice %136 {offsets = [0, 5], sizes = [8, 1], strides = [1, 1]} : vector<8x9xbf16> to vector<8x1xbf16>
    %161 = vector.broadcast %160 : vector<8x1xbf16> to vector<8x32xbf16>
    %162 = arith.mulf %159, %161 : vector<8x32xbf16>
    %163 = vector.extract_strided_slice %134 {offsets = [9, 0], sizes = [8, 32], strides = [1, 1]} : vector<24x32xbf16> to vector<8x32xbf16>
    %164 = vector.extract_strided_slice %136 {offsets = [0, 6], sizes = [8, 1], strides = [1, 1]} : vector<8x9xbf16> to vector<8x1xbf16>
    %165 = vector.broadcast %164 : vector<8x1xbf16> to vector<8x32xbf16>
    %166 = arith.mulf %163, %165 : vector<8x32xbf16>
    %167 = vector.extract_strided_slice %134 {offsets = [10, 0], sizes = [8, 32], strides = [1, 1]} : vector<24x32xbf16> to vector<8x32xbf16>
    %168 = vector.extract_strided_slice %136 {offsets = [0, 7], sizes = [8, 1], strides = [1, 1]} : vector<8x9xbf16> to vector<8x1xbf16>
    %169 = vector.broadcast %168 : vector<8x1xbf16> to vector<8x32xbf16>
    %170 = arith.mulf %167, %169 : vector<8x32xbf16>
    %171 = vector.extract_strided_slice %134 {offsets = [11, 0], sizes = [8, 32], strides = [1, 1]} : vector<24x32xbf16> to vector<8x32xbf16>
    %172 = vector.extract_strided_slice %136 {offsets = [0, 8], sizes = [8, 1], strides = [1, 1]} : vector<8x9xbf16> to vector<8x1xbf16>
    %173 = vector.broadcast %172 : vector<8x1xbf16> to vector<8x32xbf16>
    %174 = arith.mulf %171, %173 : vector<8x32xbf16>
    %175 = tpu.concatenate %142, %146, %150, %154, %158, %162, %166, %170, %174 in 1 : vector<8x32xbf16>, vector<8x32xbf16>, vector<8x32xbf16>, vector<8x32xbf16>, vector<8x32xbf16>, vector<8x32xbf16>, vector<8x32xbf16>, vector<8x32xbf16>, vector<8x32xbf16> -> vector<8x288xbf16>
    %cst_48 = arith.constant dense<0.000000e+00> : vector<8x64xf32>
    %176 = tpu.matmul %175, %135, %cst_48 {dimension_numbers = #tpu.dot_dimension_numbers<[1], [0], [0], [1], [0, 0, 1, 1], [], []>} : vector<8x288xbf16>, vector<288x64xbf16>, vector<8x64xf32> -> vector<8x64xf32>
    %177 = vector.broadcast %137 : vector<1x64xf32> to vector<8x64xf32>
    %178 = arith.mulf %176, %177 : vector<8x64xf32>
    %179 = vector.broadcast %138 : vector<1x64xf32> to vector<8x64xf32>
    %180 = arith.addf %178, %179 : vector<8x64xf32>
    %cst_49 = arith.constant 0.000000e+00 : f32
    %181 = vector.broadcast %cst_49 : f32 to vector<8x64xf32>
    %182 = arith.maximumf %180, %181 : vector<8x64xf32>
    %c0_50 = arith.constant 0 : index
    %c0_51 = arith.constant 0 : index
    %183 = vector.load %arg7[%c0_50, %c0_51] : memref<8x64xf32, #tpu.memory_space<vmem>>, vector<8x64xf32>
    tpu.vector_store %arg7[%c0_50, %c0_51], %182 {strides = array<i32>} : memref<8x64xf32, #tpu.memory_space<vmem>>, vector<8x64xf32>,
    %c0_52 = arith.constant 0 : index
    %c0_53 = arith.constant 0 : index
    %184 = tpu.strided_load %arg7[%c0_52, %c0_53] {strides = array<i32: 4, 1>} : memref<8x64xf32, #tpu.memory_space<vmem>>, vector<2x64xf32>
    %c1_54 = arith.constant 1 : index
    %c0_55 = arith.constant 0 : index
    %185 = tpu.strided_load %arg7[%c1_54, %c0_55] {strides = array<i32: 4, 1>} : memref<8x64xf32, #tpu.memory_space<vmem>>, vector<2x64xf32>
    %186 = arith.addf %184, %185 : vector<2x64xf32>
    %c2_56 = arith.constant 2 : index
    %c0_57 = arith.constant 0 : index
    %187 = tpu.strided_load %arg7[%c2_56, %c0_57] {strides = array<i32: 4, 1>} : memref<8x64xf32, #tpu.memory_space<vmem>>, vector<2x64xf32>
    %188 = arith.addf %186, %187 : vector<2x64xf32>
    %c3_58 = arith.constant 3 : index
    %c0_59 = arith.constant 0 : index
    %189 = tpu.strided_load %arg7[%c3_58, %c0_59] {strides = array<i32: 4, 1>} : memref<8x64xf32, #tpu.memory_space<vmem>>, vector<2x64xf32>
    %190 = arith.addf %188, %189 : vector<2x64xf32>
    %cst_60 = arith.constant 2.500000e-01 : f32
    %191 = vector.broadcast %cst_60 : f32 to vector<2x64xf32>
    %192 = arith.mulf %190, %191 : vector<2x64xf32>
    %193 = arith.truncf %192 : vector<2x64xf32> to vector<2x64xbf16>
    %c504 = arith.constant 504 : index
    %c0_61 = arith.constant 0 : index
    %194 = vector.load %arg1[%c504, %c0_61] : memref<944x128xbf16, #tpu.memory_space<vmem>>, vector<64x128xbf16>
    %cst_62 = arith.constant dense<0.000000e+00> : vector<2x128xf32>
    %195 = tpu.matmul %193, %194, %cst_62 {dimension_numbers = #tpu.dot_dimension_numbers<[1], [0], [0], [1], [0, 0, 1, 1], [], []>} : vector<2x64xbf16>, vector<64x128xbf16>, vector<2x128xf32> -> vector<2x128xf32>
    %c6 = arith.constant 6 : index
    %c0_63 = arith.constant 0 : index
    %196 = vector.load %arg2[%c6, %c0_63] : memref<8x128xf32, #tpu.memory_space<vmem>>, vector<1x128xf32>
    %197 = vector.broadcast %196 : vector<1x128xf32> to vector<2x128xf32>
    %198 = arith.addf %195, %197 : vector<2x128xf32>
    %cst_64 = arith.constant 0.000000e+00 : f32
    %199 = vector.broadcast %cst_64 : f32 to vector<2x128xf32>
    %200 = arith.maximumf %198, %199 : vector<2x128xf32>
    %201 = arith.truncf %200 : vector<2x128xf32> to vector<2x128xbf16>
    %c568 = arith.constant 568 : index
    %c0_65 = arith.constant 0 : index
    %202 = vector.load %arg1[%c568, %c0_65] : memref<944x128xbf16, #tpu.memory_space<vmem>>, vector<128x128xbf16>
    %cst_66 = arith.constant dense<0.000000e+00> : vector<2x128xf32>
    %203 = tpu.matmul %201, %202, %cst_66 {dimension_numbers = #tpu.dot_dimension_numbers<[1], [0], [0], [1], [0, 0, 1, 1], [], []>} : vector<2x128xbf16>, vector<128x128xbf16>, vector<2x128xf32> -> vector<2x128xf32>
    %c7 = arith.constant 7 : index
    %c0_67 = arith.constant 0 : index
    %204 = vector.load %arg2[%c7, %c0_67] : memref<8x128xf32, #tpu.memory_space<vmem>>, vector<1x128xf32>
    %205 = vector.broadcast %204 : vector<1x128xf32> to vector<2x128xf32>
    %206 = arith.addf %203, %205 : vector<2x128xf32>
    %c0_68 = arith.constant 0 : index
    %c0_69 = arith.constant 0 : index
    %207 = vector.load %arg3[%c0_68, %c0_69] : memref<2x128xf32, #tpu.memory_space<vmem>>, vector<2x128xf32>
    tpu.vector_store %arg3[%c0_68, %c0_69], %206 {strides = array<i32>} : memref<2x128xf32, #tpu.memory_space<vmem>>, vector<2x128xf32>,
    return
  }
}

</mosaic_0001>

<llo_original>
// kernel: forward.1
$region0: #{forward.1}
  #allocation0 [shape = 'u32[]', space=smem, size = 0x4, offset = 0x4, fixed_abs, tag = 'smem constant byte address 0x4 - core index']
  #allocation1 [shape = 'u32[144,128]{1,0:T(1,128)}', space=vmem, size = 0x12000, scoped, tag = 'internal scratch']
  #allocation2 [shape = 'f32[192,16]{1,0:T(8,128)}', space=vmem, size = 0x18000, scoped, tag = 'scratch operand']
  #allocation3 [shape = 'f32[64,16]{1,0:T(8,128)}', space=vmem, size = 0x8000, scoped, tag = 'scratch operand']
  #allocation4 [shape = 'f32[24,32]{1,0:T(8,128)}', space=vmem, size = 0x3000, scoped, tag = 'scratch operand']
  #allocation5 [shape = 'f32[8,64]{1,0:T(8,128)}', space=vmem, size = 0x1000, scoped, tag = 'scratch operand']
  %s0 = inlined_call_operand.vmem [shape: f32[240,2], index: 0, kind: input, shape index: {}]
  %s1 = inlined_call_operand.vmem [shape: bf16[944,128], index: 1, kind: input, shape index: {}]
  %s2 = inlined_call_operand.vmem [shape: f32[8,128], index: 2, kind: input, shape index: {}]
  %s3 = inlined_call_operand.vmem [shape: f32[2,128], index: 3, kind: output, shape index: {}]
  %s4 = sld [smem:[#allocation0]]
  $region22: #{forward.1} parent=0
    _
  %s6 = ssub.s32 1, %s4
  %s7 = scalar_select 0, %s6, %s4
  // Predicated region
  $region2: #{forward.1} parent=0 // pred_check
    _
  $region3: #{forward.1} parent=0 // pred_check_branch
    %9 = sbr.rel (0) target = $region5
  $region4: #{forward.1} parent=0 // pred_region
    _
  $region5: #{forward.1} parent=0 // pred_fallthru
    _
  // Predicated region
  $region6: #{forward.1} parent=0 // pred_check
    _
  $region7: #{forward.1} parent=0 // pred_check_branch
    %11 = sbr.rel (0) target = $region9
  $region8: #{forward.1} parent=0 // pred_region
    _
  $region9: #{forward.1} parent=0 // pred_fallthru
    _
  // Predicated region
  $region10: #{forward.1} parent=0 // pred_check
    _
  $region11: #{forward.1} parent=0 // pred_check_branch
    %13 = sbr.rel (0) target = $region13
  $region12: #{forward.1} parent=0 // pred_region
    _
  $region13: #{forward.1} parent=0 // pred_fallthru
    _
  %v15 = vld [vmem:[%s0] sm:$0xff]
  %v16 = vld [vmem:[%s0 + $0x8] sm:$0xff]
  %v17 = vld [vmem:[%s0 + $0x10] sm:$0xff]
  %v18 = vld [vmem:[%s0 + $0x18] sm:$0xff]
  %v19 = vld [vmem:[%s0 + $0x20] sm:$0xff]
  %v20 = vld [vmem:[%s0 + $0x28] sm:$0xff]
  %v21 = vld [vmem:[%s0 + $0x30] sm:$0xff]
  %v22 = vld [vmem:[%s0 + $0x38] sm:$0xff]
  %v23 = vld [vmem:[%s0 + $0x40] sm:$0xff]
  %v24 = vld [vmem:[%s0 + $0x48] sm:$0xff]
  %v25 = vld [vmem:[%s0 + $0x50] sm:$0xff]
  %v26 = vld [vmem:[%s0 + $0x58] sm:$0xff]
  %v27 = vld [vmem:[%s0 + $0x60] sm:$0xff]
  %v28 = vld [vmem:[%s0 + $0x68] sm:$0xff]
  %v29 = vld [vmem:[%s0 + $0x70] sm:$0xff]
  %v30 = vld [vmem:[%s0 + $0x78] sm:$0xff]
  %v31 = vld [vmem:[%s0 + $0x80] sm:$0xff]
  %v32 = vld [vmem:[%s0 + $0x88] sm:$0xff]
  %v33 = vld [vmem:[%s0 + $0x90] sm:$0xff]
  %v34 = vld [vmem:[%s0 + $0x98] sm:$0xff]
  %v35 = vld [vmem:[%s0 + $0xa0] sm:$0xff]
  %v36 = vld [vmem:[%s0 + $0xa8] sm:$0xff]
  %v37 = vld [vmem:[%s0 + $0xb0] sm:$0xff]
  %v38 = vld [vmem:[%s0 + $0xb8] sm:$0xff]
  %v39 = vld [vmem:[%s0 + $0xc0] sm:$0xff]
  %v40 = vld [vmem:[%s0 + $0xc8] sm:$0xff]
  %v41 = vld [vmem:[%s0 + $0xd0] sm:$0xff]
  %v42 = vld [vmem:[%s0 + $0xd8] sm:$0xff]
  %v43 = vld [vmem:[%s0 + $0xe0] sm:$0xff]
  %v44 = vld [vmem:[%s0 + $0xe8] sm:$0xff]
  %v45 = vpack.c.bf16 %v16, %v15
  %v46 = vpack.c.bf16 %v18, %v17
  %v47 = vpack.c.bf16 %v20, %v19
  %v48 = vpack.c.bf16 %v22, %v21
  %v49 = vpack.c.bf16 %v24, %v23
  %v50 = vpack.c.bf16 %v26, %v25
  %v51 = vpack.c.bf16 %v28, %v27
  %v52 = vpack.c.bf16 %v30, %v29
  %v53 = vpack.c.bf16 %v32, %v31
  %v54 = vpack.c.bf16 %v34, %v33
  %v55 = vpack.c.bf16 %v36, %v35
  %v56 = vpack.c.bf16 %v38, %v37
  %v57 = vpack.c.bf16 %v40, %v39
  %v58 = vpack.c.bf16 %v42, %v41
  %v59 = vpack.c.bf16 %v44, %v43
  %v60 = vld [vmem:[%s1] sm:$0xf]
  %v61 = vld [vmem:[%s1 + $0x4] sm:$0xf]
  %v62 = vld [vmem:[%s1 + $0x8] sm:$0x1]
  %v63 = vld [vmem:[%s1 + $0x15c] sm:$0xf]
  %v64 = vld [vmem:[%s1 + $0x160] sm:$0xf]
  %v65 = vld [vmem:[%s1 + $0x164] sm:$0xf]
  %v66 = vld [vmem:[%s1 + $0x168] sm:$0xf]
  %v67 = vld [vmem:[%s1 + $0x16c] sm:$0xf]
  %v68 = vld [vmem:[%s1 + $0x170] sm:$0xf]
  %v69 = vld [vmem:[%s1 + $0x174] sm:$0xf]
  %v70 = vld [vmem:[%s1 + $0x178] sm:$0xf]
  %v71 = vld [vmem:[%s1 + $0x17c] sm:$0xf]
  %v72 = vld [vmem:[%s1 + $0x180] sm:$0xf]
  %v73 = vld [vmem:[%s1 + $0x184] sm:$0xf]
  %v74 = vld [vmem:[%s1 + $0x188] sm:$0xf]
  %v75 = vld [vmem:[%s1 + $0x18c] sm:$0xf]
  %v76 = vld [vmem:[%s1 + $0x190] sm:$0xf]
  %v77 = vld [vmem:[%s1 + $0x194] sm:$0xf]
  %v78 = vld [vmem:[%s1 + $0x198] sm:$0xf]
  %v79 = vld [vmem:[%s1 + $0x19c] sm:$0xf]
  %v80 = vld [vmem:[%s1 + $0x1a0] sm:$0xf]
  %v81 = vld [vmem:[%s1 + $0x1a4] sm:$0xf]
  %v82 = vld [vmem:[%s1 + $0x1a8] sm:$0xf]
  %v83 = vld [vmem:[%s1 + $0x1ac] sm:$0xf]
  %v84 = vld [vmem:[%s1 + $0x1b0] sm:$0xf]
  %v85 = vld [vmem:[%s1 + $0x1b4] sm:$0xf]
  %v86 = vld [vmem:[%s1 + $0x1b8] sm:$0xf]
  %v87 = vld [vmem:[%s2] sm:$0x1]
  %v88 = vld [vmem:[%s2 + $0x1] sm:$0x1]
  %90 = vset.pattern.permute.xlu0 0
  %91 = vperm.xlu0 %90, %v63
  %v92 = vpop.permute.xlu0 %91
  %v95 = vunpack.c.l.s4 839922192
  %v96 = vunpack.c.0.s8 %v95
  %v97 = vlaneseq
  %v98 = vshrl.u32 %v97, 7
  %v99 = vsub.s32 %v96, %v98
  %v100 = vrot.slane %v92, %v99
  %102 = vset.pattern.permute.xlu0 0
  %103 = vperm.xlu0 %102, %v64
  %v104 = vpop.permute.xlu0 %103
  %v107 = vunpack.c.l.s4 839922192
  %v108 = vunpack.c.0.s8 %v107
  %v109 = vlaneseq
  %v110 = vshrl.u32 %v109, 7
  %v111 = vsub.s32 %v108, %v110
  %v112 = vrot.slane %v104, %v111
  %114 = vset.pattern.permute.xlu0 0
  %115 = vperm.xlu0 %114, %v65
  %v116 = vpop.permute.xlu0 %115
  %v119 = vunpack.c.l.s4 839922192
  %v120 = vunpack.c.0.s8 %v119
  %v121 = vlaneseq
  %v122 = vshrl.u32 %v121, 7
  %v123 = vsub.s32 %v120, %v122
  %v124 = vrot.slane %v116, %v123
  %126 = vset.pattern.permute.xlu0 0
  %127 = vperm.xlu0 %126, %v66
  %v128 = vpop.permute.xlu0 %127
  %v131 = vunpack.c.l.s4 839922192
  %v132 = vunpack.c.0.s8 %v131
  %v133 = vlaneseq
  %v134 = vshrl.u32 %v133, 7
  %v135 = vsub.s32 %v132, %v134
  %v136 = vrot.slane %v128, %v135
  %138 = vset.pattern.permute.xlu0 0
  %139 = vperm.xlu0 %138, %v67
  %v140 = vpop.permute.xlu0 %139
  %v143 = vunpack.c.l.s4 839922192
  %v144 = vunpack.c.0.s8 %v143
  %v145 = vlaneseq
  %v146 = vshrl.u32 %v145, 7
  %v147 = vsub.s32 %v144, %v146
  %v148 = vrot.slane %v140, %v147
  %150 = vset.pattern.permute.xlu0 0
  %151 = vperm.xlu0 %150, %v68
  %v152 = vpop.permute.xlu0 %151
  %v155 = vunpack.c.l.s4 839922192
  %v156 = vunpack.c.0.s8 %v155
  %v157 = vlaneseq
  %v158 = vshrl.u32 %v157, 7
  %v159 = vsub.s32 %v156, %v158
  %v160 = vrot.slane %v152, %v159
  %162 = vset.pattern.permute.xlu0 0
  %163 = vperm.xlu0 %162, %v69
  %v164 = vpop.permute.xlu0 %163
  %v167 = vunpack.c.l.s4 839922192
  %v168 = vunpack.c.0.s8 %v167
  %v169 = vlaneseq
  %v170 = vshrl.u32 %v169, 7
  %v171 = vsub.s32 %v168, %v170
  %v172 = vrot.slane %v164, %v171
  %174 = vset.pattern.permute.xlu0 0
  %175 = vperm.xlu0 %174, %v70
  %v176 = vpop.permute.xlu0 %175
  %v179 = vunpack.c.l.s4 839922192
  %v180 = vunpack.c.0.s8 %v179
  %v181 = vlaneseq
  %v182 = vshrl.u32 %v181, 7
  %v183 = vsub.s32 %v180, %v182
  %v184 = vrot.slane %v176, %v183
  %186 = vset.pattern.permute.xlu0 0
  %187 = vperm.xlu0 %186, %v71
  %v188 = vpop.permute.xlu0 %187
  %v191 = vunpack.c.l.s4 839922192
  %v192 = vunpack.c.0.s8 %v191
  %v193 = vlaneseq
  %v194 = vshrl.u32 %v193, 7
  %v195 = vsub.s32 %v192, %v194
  %v196 = vrot.slane %v188, %v195
  %198 = vset.pattern.permute.xlu0 0
  %199 = vperm.xlu0 %198, %v72
  %v200 = vpop.permute.xlu0 %199
  %v203 = vunpack.c.l.s4 839922192
  %v204 = vunpack.c.0.s8 %v203
  %v205 = vlaneseq
  %v206 = vshrl.u32 %v205, 7
  %v207 = vsub.s32 %v204, %v206
  %v208 = vrot.slane %v200, %v207
  %210 = vset.pattern.permute.xlu0 0
  %211 = vperm.xlu0 %210, %v73
  %v212 = vpop.permute.xlu0 %211
  %v215 = vunpack.c.l.s4 839922192
  %v216 = vunpack.c.0.s8 %v215
  %v217 = vlaneseq
  %v218 = vshrl.u32 %v217, 7
  %v219 = vsub.s32 %v216, %v218
  %v220 = vrot.slane %v212, %v219
  %222 = vset.pattern.permute.xlu0 0
  %223 = vperm.xlu0 %222, %v74
  %v224 = vpop.permute.xlu0 %223
  %v227 = vunpack.c.l.s4 839922192
  %v228 = vunpack.c.0.s8 %v227
  %v229 = vlaneseq
  %v230 = vshrl.u32 %v229, 7
  %v231 = vsub.s32 %v228, %v230
  %v232 = vrot.slane %v224, %v231
  %234 = vset.pattern.permute.xlu0 0
  %235 = vperm.xlu0 %234, %v75
  %v236 = vpop.permute.xlu0 %235
  %v239 = vunpack.c.l.s4 839922192
  %v240 = vunpack.c.0.s8 %v239
  %v241 = vlaneseq
  %v242 = vshrl.u32 %v241, 7
  %v243 = vsub.s32 %v240, %v242
  %v244 = vrot.slane %v236, %v243
  %246 = vset.pattern.permute.xlu0 0
  %247 = vperm.xlu0 %246, %v76
  %v248 = vpop.permute.xlu0 %247
  %v251 = vunpack.c.l.s4 839922192
  %v252 = vunpack.c.0.s8 %v251
  %v253 = vlaneseq
  %v254 = vshrl.u32 %v253, 7
  %v255 = vsub.s32 %v252, %v254
  %v256 = vrot.slane %v248, %v255
  %258 = vset.pattern.permute.xlu0 0
  %259 = vperm.xlu0 %258, %v77
  %v260 = vpop.permute.xlu0 %259
  %v263 = vunpack.c.l.s4 839922192
  %v264 = vunpack.c.0.s8 %v263
  %v265 = vlaneseq
  %v266 = vshrl.u32 %v265, 7
  %v267 = vsub.s32 %v264, %v266
  %v268 = vrot.slane %v260, %v267
  %270 = vset.pattern.permute.xlu0 0
  %271 = vperm.xlu0 %270, %v78
  %v272 = vpop.permute.xlu0 %271
  %v275 = vunpack.c.l.s4 839922192
  %v276 = vunpack.c.0.s8 %v275
  %v277 = vlaneseq
  %v278 = vshrl.u32 %v277, 7
  %v279 = vsub.s32 %v276, %v278
  %v280 = vrot.slane %v272, %v279
  %282 = vset.pattern.permute.xlu0 0
  %283 = vperm.xlu0 %282, %v79
  %v284 = vpop.permute.xlu0 %283
  %v287 = vunpack.c.l.s4 839922192
  %v288 = vunpack.c.0.s8 %v287
  %v289 = vlaneseq
  %v290 = vshrl.u32 %v289, 7
  %v291 = vsub.s32 %v288, %v290
  %v292 = vrot.slane %v284, %v291
  %294 = vset.pattern.permute.xlu0 0
  %295 = vperm.xlu0 %294, %v80
  %v296 = vpop.permute.xlu0 %295
  %v299 = vunpack.c.l.s4 839922192
  %v300 = vunpack.c.0.s8 %v299
  %v301 = vlaneseq
  %v302 = vshrl.u32 %v301, 7
  %v303 = vsub.s32 %v300, %v302
  %v304 = vrot.slane %v296, %v303
  %306 = vset.pattern.permute.xlu0 0
  %307 = vperm.xlu0 %306, %v81
  %v308 = vpop.permute.xlu0 %307
  %v311 = vunpack.c.l.s4 839922192
  %v312 = vunpack.c.0.s8 %v311
  %v313 = vlaneseq
  %v314 = vshrl.u32 %v313, 7
  %v315 = vsub.s32 %v312, %v314
  %v316 = vrot.slane %v308, %v315
  %318 = vset.pattern.permute.xlu0 0
  %319 = vperm.xlu0 %318, %v82
  %v320 = vpop.permute.xlu0 %319
  %v323 = vunpack.c.l.s4 839922192
  %v324 = vunpack.c.0.s8 %v323
  %v325 = vlaneseq
  %v326 = vshrl.u32 %v325, 7
  %v327 = vsub.s32 %v324, %v326
  %v328 = vrot.slane %v320, %v327
  %330 = vset.pattern.permute.xlu0 0
  %331 = vperm.xlu0 %330, %v83
  %v332 = vpop.permute.xlu0 %331
  %v335 = vunpack.c.l.s4 839922192
  %v336 = vunpack.c.0.s8 %v335
  %v337 = vlaneseq
  %v338 = vshrl.u32 %v337, 7
  %v339 = vsub.s32 %v336, %v338
  %v340 = vrot.slane %v332, %v339
  %342 = vset.pattern.permute.xlu0 0
  %343 = vperm.xlu0 %342, %v84
  %v344 = vpop.permute.xlu0 %343
  %v347 = vunpack.c.l.s4 839922192
  %v348 = vunpack.c.0.s8 %v347
  %v349 = vlaneseq
  %v350 = vshrl.u32 %v349, 7
  %v351 = vsub.s32 %v348, %v350
  %v352 = vrot.slane %v344, %v351
  %354 = vset.pattern.permute.xlu0 0
  %355 = vperm.xlu0 %354, %v85
  %v356 = vpop.permute.xlu0 %355
  %v359 = vunpack.c.l.s4 839922192
  %v360 = vunpack.c.0.s8 %v359
  %v361 = vlaneseq
  %v362 = vshrl.u32 %v361, 7
  %v363 = vsub.s32 %v360, %v362
  %v364 = vrot.slane %v356, %v363
  %366 = vset.pattern.permute.xlu0 0
  %367 = vperm.xlu0 %366, %v86
  %v368 = vpop.permute.xlu0 %367
  %v371 = vunpack.c.l.s4 839922192
  %v372 = vunpack.c.0.s8 %v371
  %v373 = vlaneseq
  %v374 = vshrl.u32 %v373, 7
  %v375 = vsub.s32 %v372, %v374
  %v376 = vrot.slane %v368, %v375
  %v401 = vunpack.c.l.b16 %v100
  %v402 = vunpack.c.l.b16 %v112
  %v403 = vunpack.c.l.b16 %v124
  %v404 = vunpack.c.l.b16 %v136
  %v405 = vunpack.c.l.b16 %v148
  %v406 = vunpack.c.l.b16 %v160
  %v407 = vunpack.c.l.b16 %v172
  %v408 = vunpack.c.l.b16 %v184
  %v409 = vunpack.c.l.b16 %v196
  %v410 = vunpack.c.l.b16 %v208
  %v411 = vunpack.c.l.b16 %v220
  %v412 = vunpack.c.l.b16 %v232
  %v413 = vunpack.c.l.b16 %v244
  %v414 = vunpack.c.l.b16 %v256
  %v415 = vunpack.c.l.b16 %v268
  %v416 = vunpack.c.l.b16 %v280
  %v417 = vunpack.c.l.b16 %v292
  %v418 = vunpack.c.l.b16 %v304
  %v419 = vunpack.c.l.b16 %v316
  %v420 = vunpack.c.l.b16 %v328
  %v421 = vunpack.c.l.b16 %v340
  %v422 = vunpack.c.l.b16 %v352
  %v423 = vunpack.c.l.b16 %v364
  %v424 = vunpack.c.l.b16 %v376
  %v425 = vpack.c.b16 %v402, %v401
  %v426 = vpack.c.b16 %v404, %v403
  %v427 = vpack.c.b16 %v406, %v405
  %v428 = vpack.c.b16 %v408, %v407
  %v429 = vpack.c.b16 %v410, %v409
  %v430 = vpack.c.b16 %v412, %v411
  %v431 = vpack.c.b16 %v414, %v413
  %v432 = vpack.c.b16 %v416, %v415
  %v433 = vpack.c.b16 %v418, %v417
  %v434 = vpack.c.b16 %v420, %v419
  %v435 = vpack.c.b16 %v422, %v421
  %v436 = vpack.c.b16 %v424, %v423
  %vm437 = vsmask.f32 3328
  %v439 = vshrl.u32 %v425, 16
  %v441 = vrot.slane %v439, 4
  %v442 = vshll.u32 %v425, 16
  %v444 = vrot.slane %v442, 5
  %v445 = vor.u32 %v441, %v444
  %v447 = vshrl.u32 %v426, 16
  %v449 = vrot.slane %v447, 4
  %v450 = vshll.u32 %v426, 16
  %v452 = vrot.slane %v450, 5
  %v453 = vor.u32 %v449, %v452
  %v454 = vsel %vm437, %v445, %v453
  %v456 = vshrl.u32 %v427, 16
  %v458 = vrot.slane %v456, 4
  %v459 = vshll.u32 %v427, 16
  %v461 = vrot.slane %v459, 5
  %v462 = vor.u32 %v458, %v461
  %v463 = vsel %vm437, %v453, %v462
  %v465 = vshrl.u32 %v428, 16
  %v467 = vrot.slane %v465, 4
  %v468 = vshll.u32 %v428, 16
  %v470 = vrot.slane %v468, 5
  %v471 = vor.u32 %v467, %v470
  %v472 = vsel %vm437, %v462, %v471
  %v474 = vshrl.u32 %v429, 16
  %v476 = vrot.slane %v474, 4
  %v477 = vshll.u32 %v429, 16
  %v479 = vrot.slane %v477, 5
  %v480 = vor.u32 %v476, %v479
  %v481 = vsel %vm437, %v471, %v480
  %v483 = vshrl.u32 %v430, 16
  %v485 = vrot.slane %v483, 4
  %v486 = vshll.u32 %v430, 16
  %v488 = vrot.slane %v486, 5
  %v489 = vor.u32 %v485, %v488
  %v490 = vsel %vm437, %v480, %v489
  %v492 = vshrl.u32 %v431, 16
  %v494 = vrot.slane %v492, 4
  %v495 = vshll.u32 %v431, 16
  %v497 = vrot.slane %v495, 5
  %v498 = vor.u32 %v494, %v497
  %v499 = vsel %vm437, %v489, %v498
  %v501 = vshrl.u32 %v432, 16
  %v503 = vrot.slane %v501, 4
  %v504 = vshll.u32 %v432, 16
  %v506 = vrot.slane %v504, 5
  %v507 = vor.u32 %v503, %v506
  %v508 = vsel %vm437, %v498, %v507
  %v510 = vshrl.u32 %v433, 16
  %v512 = vrot.slane %v510, 4
  %v513 = vshll.u32 %v433, 16
  %v515 = vrot.slane %v513, 5
  %v516 = vor.u32 %v512, %v515
  %v517 = vsel %vm437, %v507, %v516
  %v519 = vshrl.u32 %v434, 16
  %v521 = vrot.slane %v519, 4
  %v522 = vshll.u32 %v434, 16
  %v524 = vrot.slane %v522, 5
  %v525 = vor.u32 %v521, %v524
  %v526 = vsel %vm437, %v516, %v525
  %v528 = vshrl.u32 %v435, 16
  %v530 = vrot.slane %v528, 4
  %v531 = vshll.u32 %v435, 16
  %v533 = vrot.slane %v531, 5
  %v534 = vor.u32 %v530, %v533
  %v535 = vsel %vm437, %v525, %v534
  %v537 = vshrl.u32 %v436, 16
  %v539 = vrot.slane %v537, 4
  %v540 = vshll.u32 %v436, 16
  %v542 = vrot.slane %v540, 5
  %v543 = vor.u32 %v539, %v542
  %v544 = vsel %vm437, %v534, %v543
  %v558 = vmul.bf16 %v45, %v445
  %v559 = vmul.bf16 %v46, %v454
  %v560 = vmul.bf16 %v47, %v463
  %v561 = vmul.bf16 %v48, %v472
  %v562 = vmul.bf16 %v49, %v481
  %v563 = vmul.bf16 %v50, %v490
  %v564 = vmul.bf16 %v51, %v499
  %v565 = vmul.bf16 %v52, %v508
  %v566 = vmul.bf16 %v53, %v517
  %v567 = vmul.bf16 %v54, %v526
  %v568 = vmul.bf16 %v55, %v535
  %v569 = vmul.bf16 %v56, %v544
  %v570 = vmul.bf16 %v57, %v543
  %571 = vset.pattern.permute.xlu0 1
  %572 = vperm.xlu0 %571, %v63
  %v573 = vpop.permute.xlu0 %572
  %v576 = vunpack.c.l.s4 839922192
  %v577 = vunpack.c.0.s8 %v576
  %v578 = vlaneseq
  %v579 = vshrl.u32 %v578, 7
  %v580 = vsub.s32 %v577, %v579
  %v581 = vrot.slane %v573, %v580
  %582 = vset.pattern.permute.xlu0 1
  %583 = vperm.xlu0 %582, %v64
  %v584 = vpop.permute.xlu0 %583
  %v587 = vunpack.c.l.s4 839922192
  %v588 = vunpack.c.0.s8 %v587
  %v589 = vlaneseq
  %v590 = vshrl.u32 %v589, 7
  %v591 = vsub.s32 %v588, %v590
  %v592 = vrot.slane %v584, %v591
  %593 = vset.pattern.permute.xlu0 1
  %594 = vperm.xlu0 %593, %v65
  %v595 = vpop.permute.xlu0 %594
  %v598 = vunpack.c.l.s4 839922192
  %v599 = vunpack.c.0.s8 %v598
  %v600 = vlaneseq
  %v601 = vshrl.u32 %v600, 7
  %v602 = vsub.s32 %v599, %v601
  %v603 = vrot.slane %v595, %v602
  %604 = vset.pattern.permute.xlu0 1
  %605 = vperm.xlu0 %604, %v66
  %v606 = vpop.permute.xlu0 %605
  %v609 = vunpack.c.l.s4 839922192
  %v610 = vunpack.c.0.s8 %v609
  %v611 = vlaneseq
  %v612 = vshrl.u32 %v611, 7
  %v613 = vsub.s32 %v610, %v612
  %v614 = vrot.slane %v606, %v613
  %615 = vset.pattern.permute.xlu0 1
  %616 = vperm.xlu0 %615, %v67
  %v617 = vpop.permute.xlu0 %616
  %v620 = vunpack.c.l.s4 839922192
  %v621 = vunpack.c.0.s8 %v620
  %v622 = vlaneseq
  %v623 = vshrl.u32 %v622, 7
  %v624 = vsub.s32 %v621, %v623
  %v625 = vrot.slane %v617, %v624
  %626 = vset.pattern.permute.xlu0 1
  %627 = vperm.xlu0 %626, %v68
  %v628 = vpop.permute.xlu0 %627
  %v631 = vunpack.c.l.s4 839922192
  %v632 = vunpack.c.0.s8 %v631
  %v633 = vlaneseq
  %v634 = vshrl.u32 %v633, 7
  %v635 = vsub.s32 %v632, %v634
  %v636 = vrot.slane %v628, %v635
  %637 = vset.pattern.permute.xlu0 1
  %638 = vperm.xlu0 %637, %v69
  %v639 = vpop.permute.xlu0 %638
  %v642 = vunpack.c.l.s4 839922192
  %v643 = vunpack.c.0.s8 %v642
  %v644 = vlaneseq
  %v645 = vshrl.u32 %v644, 7
  %v646 = vsub.s32 %v643, %v645
  %v647 = vrot.slane %v639, %v646
  %648 = vset.pattern.permute.xlu0 1
  %649 = vperm.xlu0 %648, %v70
  %v650 = vpop.permute.xlu0 %649
  %v653 = vunpack.c.l.s4 839922192
  %v654 = vunpack.c.0.s8 %v653
  %v655 = vlaneseq
  %v656 = vshrl.u32 %v655, 7
  %v657 = vsub.s32 %v654, %v656
  %v658 = vrot.slane %v650, %v657
  %659 = vset.pattern.permute.xlu0 1
  %660 = vperm.xlu0 %659, %v71
  %v661 = vpop.permute.xlu0 %660
  %v664 = vunpack.c.l.s4 839922192
  %v665 = vunpack.c.0.s8 %v664
  %v666 = vlaneseq
  %v667 = vshrl.u32 %v666, 7
  %v668 = vsub.s32 %v665, %v667
  %v669 = vrot.slane %v661, %v668
  %670 = vset.pattern.permute.xlu0 1
  %671 = vperm.xlu0 %670, %v72
  %v672 = vpop.permute.xlu0 %671
  %v675 = vunpack.c.l.s4 839922192
  %v676 = vunpack.c.0.s8 %v675
  %v677 = vlaneseq
  %v678 = vshrl.u32 %v677, 7
  %v679 = vsub.s32 %v676, %v678
  %v680 = vrot.slane %v672, %v679
  %681 = vset.pattern.permute.xlu0 1
  %682 = vperm.xlu0 %681, %v73
  %v683 = vpop.permute.xlu0 %682
  %v686 = vunpack.c.l.s4 839922192
  %v687 = vunpack.c.0.s8 %v686
  %v688 = vlaneseq
  %v689 = vshrl.u32 %v688, 7
  %v690 = vsub.s32 %v687, %v689
  %v691 = vrot.slane %v683, %v690
  %692 = vset.pattern.permute.xlu0 1
  %693 = vperm.xlu0 %692, %v74
  %v694 = vpop.permute.xlu0 %693
  %v697 = vunpack.c.l.s4 839922192
  %v698 = vunpack.c.0.s8 %v697
  %v699 = vlaneseq
  %v700 = vshrl.u32 %v699, 7
  %v701 = vsub.s32 %v698, %v700
  %v702 = vrot.slane %v694, %v701
  %703 = vset.pattern.permute.xlu0 1
  %704 = vperm.xlu0 %703, %v75
  %v705 = vpop.permute.xlu0 %704
  %v708 = vunpack.c.l.s4 839922192
  %v709 = vunpack.c.0.s8 %v708
  %v710 = vlaneseq
  %v711 = vshrl.u32 %v710, 7
  %v712 = vsub.s32 %v709, %v711
  %v713 = vrot.slane %v705, %v712
  %714 = vset.pattern.permute.xlu0 1
  %715 = vperm.xlu0 %714, %v76
  %v716 = vpop.permute.xlu0 %715
  %v719 = vunpack.c.l.s4 839922192
  %v720 = vunpack.c.0.s8 %v719
  %v721 = vlaneseq
  %v722 = vshrl.u32 %v721, 7
  %v723 = vsub.s32 %v720, %v722
  %v724 = vrot.slane %v716, %v723
  %725 = vset.pattern.permute.xlu0 1
  %726 = vperm.xlu0 %725, %v77
  %v727 = vpop.permute.xlu0 %726
  %v730 = vunpack.c.l.s4 839922192
  %v731 = vunpack.c.0.s8 %v730
  %v732 = vlaneseq
  %v733 = vshrl.u32 %v732, 7
  %v734 = vsub.s32 %v731, %v733
  %v735 = vrot.slane %v727, %v734
  %736 = vset.pattern.permute.xlu0 1
  %737 = vperm.xlu0 %736, %v78
  %v738 = vpop.permute.xlu0 %737
  %v741 = vunpack.c.l.s4 839922192
  %v742 = vunpack.c.0.s8 %v741
  %v743 = vlaneseq
  %v744 = vshrl.u32 %v743, 7
  %v745 = vsub.s32 %v742, %v744
  %v746 = vrot.slane %v738, %v745
  %747 = vset.pattern.permute.xlu0 1
  %748 = vperm.xlu0 %747, %v79
  %v749 = vpop.permute.xlu0 %748
  %v752 = vunpack.c.l.s4 839922192
  %v753 = vunpack.c.0.s8 %v752
  %v754 = vlaneseq
  %v755 = vshrl.u32 %v754, 7
  %v756 = vsub.s32 %v753, %v755
  %v757 = vrot.slane %v749, %v756
  %758 = vset.pattern.permute.xlu0 1
  %759 = vperm.xlu0 %758, %v80
  %v760 = vpop.permute.xlu0 %759
  %v763 = vunpack.c.l.s4 839922192
  %v764 = vunpack.c.0.s8 %v763
  %v765 = vlaneseq
  %v766 = vshrl.u32 %v765, 7
  %v767 = vsub.s32 %v764, %v766
  %v768 = vrot.slane %v760, %v767
  %769 = vset.pattern.permute.xlu0 1
  %770 = vperm.xlu0 %769, %v81
  %v771 = vpop.permute.xlu0 %770
  %v774 = vunpack.c.l.s4 839922192
  %v775 = vunpack.c.0.s8 %v774
  %v776 = vlaneseq
  %v777 = vshrl.u32 %v776, 7
  %v778 = vsub.s32 %v775, %v777
  %v779 = vrot.slane %v771, %v778
  %780 = vset.pattern.permute.xlu0 1
  %781 = vperm.xlu0 %780, %v82
  %v782 = vpop.permute.xlu0 %781
  %v785 = vunpack.c.l.s4 839922192
  %v786 = vunpack.c.0.s8 %v785
  %v787 = vlaneseq
  %v788 = vshrl.u32 %v787, 7
  %v789 = vsub.s32 %v786, %v788
  %v790 = vrot.slane %v782, %v789
  %791 = vset.pattern.permute.xlu0 1
  %792 = vperm.xlu0 %791, %v83
  %v793 = vpop.permute.xlu0 %792
  %v796 = vunpack.c.l.s4 839922192
  %v797 = vunpack.c.0.s8 %v796
  %v798 = vlaneseq
  %v799 = vshrl.u32 %v798, 7
  %v800 = vsub.s32 %v797, %v799
  %v801 = vrot.slane %v793, %v800
  %802 = vset.pattern.permute.xlu0 1
  %803 = vperm.xlu0 %802, %v84
  %v804 = vpop.permute.xlu0 %803
  %v807 = vunpack.c.l.s4 839922192
  %v808 = vunpack.c.0.s8 %v807
  %v809 = vlaneseq
  %v810 = vshrl.u32 %v809, 7
  %v811 = vsub.s32 %v808, %v810
  %v812 = vrot.slane %v804, %v811
  %813 = vset.pattern.permute.xlu0 1
  %814 = vperm.xlu0 %813, %v85
  %v815 = vpop.permute.xlu0 %814
  %v818 = vunpack.c.l.s4 839922192
  %v819 = vunpack.c.0.s8 %v818
  %v820 = vlaneseq
  %v821 = vshrl.u32 %v820, 7
  %v822 = vsub.s32 %v819, %v821
  %v823 = vrot.slane %v815, %v822
  %824 = vset.pattern.permute.xlu0 1
  %825 = vperm.xlu0 %824, %v86
  %v826 = vpop.permute.xlu0 %825
  %v829 = vunpack.c.l.s4 839922192
  %v830 = vunpack.c.0.s8 %v829
  %v831 = vlaneseq
  %v832 = vshrl.u32 %v831, 7
  %v833 = vsub.s32 %v830, %v832
  %v834 = vrot.slane %v826, %v833
  %v859 = vunpack.c.l.b16 %v581
  %v860 = vunpack.c.l.b16 %v592
  %v861 = vunpack.c.l.b16 %v603
  %v862 = vunpack.c.l.b16 %v614
  %v863 = vunpack.c.l.b16 %v625
  %v864 = vunpack.c.l.b16 %v636
  %v865 = vunpack.c.l.b16 %v647
  %v866 = vunpack.c.l.b16 %v658
  %v867 = vunpack.c.l.b16 %v669
  %v868 = vunpack.c.l.b16 %v680
  %v869 = vunpack.c.l.b16 %v691
  %v870 = vunpack.c.l.b16 %v702
  %v871 = vunpack.c.l.b16 %v713
  %v872 = vunpack.c.l.b16 %v724
  %v873 = vunpack.c.l.b16 %v735
  %v874 = vunpack.c.l.b16 %v746
  %v875 = vunpack.c.l.b16 %v757
  %v876 = vunpack.c.l.b16 %v768
  %v877 = vunpack.c.l.b16 %v779
  %v878 = vunpack.c.l.b16 %v790
  %v879 = vunpack.c.l.b16 %v801
  %v880 = vunpack.c.l.b16 %v812
  %v881 = vunpack.c.l.b16 %v823
  %v882 = vunpack.c.l.b16 %v834
  %v883 = vpack.c.b16 %v859, %v859
  %v884 = vpack.c.b16 %v861, %v860
  %v885 = vpack.c.b16 %v863, %v862
  %v886 = vpack.c.b16 %v865, %v864
  %v887 = vpack.c.b16 %v867, %v866
  %v888 = vpack.c.b16 %v869, %v868
  %v889 = vpack.c.b16 %v871, %v870
  %v890 = vpack.c.b16 %v873, %v872
  %v891 = vpack.c.b16 %v875, %v874
  %v892 = vpack.c.b16 %v877, %v876
  %v893 = vpack.c.b16 %v879, %v878
  %v894 = vpack.c.b16 %v881, %v880
  %v895 = vpack.c.b16 %v882, %v882
  %v909 = vmul.bf16 %v45, %v883
  %v910 = vmul.bf16 %v46, %v884
  %v911 = vmul.bf16 %v47, %v885
  %v912 = vmul.bf16 %v48, %v886
  %v913 = vmul.bf16 %v49, %v887
  %v914 = vmul.bf16 %v50, %v888
  %v915 = vmul.bf16 %v51, %v889
  %v916 = vmul.bf16 %v52, %v890
  %v917 = vmul.bf16 %v53, %v891
  %v918 = vmul.bf16 %v54, %v892
  %v919 = vmul.bf16 %v55, %v893
  %v920 = vmul.bf16 %v56, %v894
  %v921 = vmul.bf16 %v57, %v895
  %922 = vset.pattern.permute.xlu0 2
  %923 = vperm.xlu0 %922, %v63
  %v924 = vpop.permute.xlu0 %923
  %v927 = vunpack.c.l.s4 839922192
  %v928 = vunpack.c.0.s8 %v927
  %v929 = vlaneseq
  %v930 = vshrl.u32 %v929, 7
  %v931 = vsub.s32 %v928, %v930
  %v932 = vrot.slane %v924, %v931
  %933 = vset.pattern.permute.xlu0 2
  %934 = vperm.xlu0 %933, %v64
  %v935 = vpop.permute.xlu0 %934
  %v938 = vunpack.c.l.s4 839922192
  %v939 = vunpack.c.0.s8 %v938
  %v940 = vlaneseq
  %v941 = vshrl.u32 %v940, 7
  %v942 = vsub.s32 %v939, %v941
  %v943 = vrot.slane %v935, %v942
  %944 = vset.pattern.permute.xlu0 2
  %945 = vperm.xlu0 %944, %v65
  %v946 = vpop.permute.xlu0 %945
  %v949 = vunpack.c.l.s4 839922192
  %v950 = vunpack.c.0.s8 %v949
  %v951 = vlaneseq
  %v952 = vshrl.u32 %v951, 7
  %v953 = vsub.s32 %v950, %v952
  %v954 = vrot.slane %v946, %v953
  %955 = vset.pattern.permute.xlu0 2
  %956 = vperm.xlu0 %955, %v66
  %v957 = vpop.permute.xlu0 %956
  %v960 = vunpack.c.l.s4 839922192
  %v961 = vunpack.c.0.s8 %v960
  %v962 = vlaneseq
  %v963 = vshrl.u32 %v962, 7
  %v964 = vsub.s32 %v961, %v963
  %v965 = vrot.slane %v957, %v964
  %966 = vset.pattern.permute.xlu0 2
  %967 = vperm.xlu0 %966, %v67
  %v968 = vpop.permute.xlu0 %967
  %v971 = vunpack.c.l.s4 839922192
  %v972 = vunpack.c.0.s8 %v971
  %v973 = vlaneseq
  %v974 = vshrl.u32 %v973, 7
  %v975 = vsub.s32 %v972, %v974
  %v976 = vrot.slane %v968, %v975
  %977 = vset.pattern.permute.xlu0 2
  %978 = vperm.xlu0 %977, %v68
  %v979 = vpop.permute.xlu0 %978
  %v982 = vunpack.c.l.s4 839922192
  %v983 = vunpack.c.0.s8 %v982
  %v984 = vlaneseq
  %v985 = vshrl.u32 %v984, 7
  %v986 = vsub.s32 %v983, %v985
  %v987 = vrot.slane %v979, %v986
  %988 = vset.pattern.permute.xlu0 2
  %989 = vperm.xlu0 %988, %v69
  %v990 = vpop.permute.xlu0 %989
  %v993 = vunpack.c.l.s4 839922192
  %v994 = vunpack.c.0.s8 %v993
  %v995 = vlaneseq
  %v996 = vshrl.u32 %v995, 7
  %v997 = vsub.s32 %v994, %v996
  %v998 = vrot.slane %v990, %v997
  %999 = vset.pattern.permute.xlu0 2
  %1000 = vperm.xlu0 %999, %v70
  %v1001 = vpop.permute.xlu0 %1000
  %v1004 = vunpack.c.l.s4 839922192
  %v1005 = vunpack.c.0.s8 %v1004
  %v1006 = vlaneseq
  %v1007 = vshrl.u32 %v1006, 7
  %v1008 = vsub.s32 %v1005, %v1007
  %v1009 = vrot.slane %v1001, %v1008
  %1010 = vset.pattern.permute.xlu0 2
  %1011 = vperm.xlu0 %1010, %v71
  %v1012 = vpop.permute.xlu0 %1011
  %v1015 = vunpack.c.l.s4 839922192
  %v1016 = vunpack.c.0.s8 %v1015
  %v1017 = vlaneseq
  %v1018 = vshrl.u32 %v1017, 7
  %v1019 = vsub.s32 %v1016, %v1018
  %v1020 = vrot.slane %v1012, %v1019
  %1021 = vset.pattern.permute.xlu0 2
  %1022 = vperm.xlu0 %1021, %v72
  %v1023 = vpop.permute.xlu0 %1022
  %v1026 = vunpack.c.l.s4 839922192
  %v1027 = vunpack.c.0.s8 %v1026
  %v1028 = vlaneseq
  %v1029 = vshrl.u32 %v1028, 7
  %v1030 = vsub.s32 %v1027, %v1029
  %v1031 = vrot.slane %v1023, %v1030
  %1032 = vset.pattern.permute.xlu0 2
  %1033 = vperm.xlu0 %1032, %v73
  %v1034 = vpop.permute.xlu0 %1033
  %v1037 = vunpack.c.l.s4 839922192
  %v1038 = vunpack.c.0.s8 %v1037
  %v1039 = vlaneseq
  %v1040 = vshrl.u32 %v1039, 7
  %v1041 = vsub.s32 %v1038, %v1040
  %v1042 = vrot.slane %v1034, %v1041
  %1043 = vset.pattern.permute.xlu0 2
  %1044 = vperm.xlu0 %1043, %v74
  %v1045 = vpop.permute.xlu0 %1044
  %v1048 = vunpack.c.l.s4 839922192
  %v1049 = vunpack.c.0.s8 %v1048
  %v1050 = vlaneseq
  %v1051 = vshrl.u32 %v1050, 7
  %v1052 = vsub.s32 %v1049, %v1051
  %v1053 = vrot.slane %v1045, %v1052
  %1054 = vset.pattern.permute.xlu0 2
  %1055 = vperm.xlu0 %1054, %v75
  %v1056 = vpop.permute.xlu0 %1055
  %v1059 = vunpack.c.l.s4 839922192
  %v1060 = vunpack.c.0.s8 %v1059
  %v1061 = vlaneseq
  %v1062 = vshrl.u32 %v1061, 7
  %v1063 = vsub.s32 %v1060, %v1062
  %v1064 = vrot.slane %v1056, %v1063
  %1065 = vset.pattern.permute.xlu0 2
  %1066 = vperm.xlu0 %1065, %v76
  %v1067 = vpop.permute.xlu0 %1066
  %v1070 = vunpack.c.l.s4 839922192
  %v1071 = vunpack.c.0.s8 %v1070
  %v1072 = vlaneseq
  %v1073 = vshrl.u32 %v1072, 7
  %v1074 = vsub.s32 %v1071, %v1073
  %v1075 = vrot.slane %v1067, %v1074
  %1076 = vset.pattern.permute.xlu0 2
  %1077 = vperm.xlu0 %1076, %v77
  %v1078 = vpop.permute.xlu0 %1077
  %v1081 = vunpack.c.l.s4 839922192
  %v1082 = vunpack.c.0.s8 %v1081
  %v1083 = vlaneseq
  %v1084 = vshrl.u32 %v1083, 7
  %v1085 = vsub.s32 %v1082, %v1084
  %v1086 = vrot.slane %v1078, %v1085
  %1087 = vset.pattern.permute.xlu0 2
  %1088 = vperm.xlu0 %1087, %v78
  %v1089 = vpop.permute.xlu0 %1088
  %v1092 = vunpack.c.l.s4 839922192
  %v1093 = vunpack.c.0.s8 %v1092
  %v1094 = vlaneseq
  %v1095 = vshrl.u32 %v1094, 7
  %v1096 = vsub.s32 %v1093, %v1095
  %v1097 = vrot.slane %v1089, %v1096
  %1098 = vset.pattern.permute.xlu0 2
  %1099 = vperm.xlu0 %1098, %v79
  %v1100 = vpop.permute.xlu0 %1099
  %v1103 = vunpack.c.l.s4 839922192
  %v1104 = vunpack.c.0.s8 %v1103
  %v1105 = vlaneseq
  %v1106 = vshrl.u32 %v1105, 7
  %v1107 = vsub.s32 %v1104, %v1106
  %v1108 = vrot.slane %v1100, %v1107
  %1109 = vset.pattern.permute.xlu0 2
  %1110 = vperm.xlu0 %1109, %v80
  %v1111 = vpop.permute.xlu0 %1110
  %v1114 = vunpack.c.l.s4 839922192
  %v1115 = vunpack.c.0.s8 %v1114
  %v1116 = vlaneseq
  %v1117 = vshrl.u32 %v1116, 7
  %v1118 = vsub.s32 %v1115, %v1117
  %v1119 = vrot.slane %v1111, %v1118
  %1120 = vset.pattern.permute.xlu0 2
  %1121 = vperm.xlu0 %1120, %v81
  %v1122 = vpop.permute.xlu0 %1121
  %v1125 = vunpack.c.l.s4 839922192
  %v1126 = vunpack.c.0.s8 %v1125
  %v1127 = vlaneseq
  %v1128 = vshrl.u32 %v1127, 7
  %v1129 = vsub.s32 %v1126, %v1128
  %v1130 = vrot.slane %v1122, %v1129
  %1131 = vset.pattern.permute.xlu0 2
  %1132 = vperm.xlu0 %1131, %v82
  %v1133 = vpop.permute.xlu0 %1132
  %v1136 = vunpack.c.l.s4 839922192
  %v1137 = vunpack.c.0.s8 %v1136
  %v1138 = vlaneseq
  %v1139 = vshrl.u32 %v1138, 7
  %v1140 = vsub.s32 %v1137, %v1139
  %v1141 = vrot.slane %v1133, %v1140
  %1142 = vset.pattern.permute.xlu0 2
  %1143 = vperm.xlu0 %1142, %v83
  %v1144 = vpop.permute.xlu0 %1143
  %v1147 = vunpack.c.l.s4 839922192
  %v1148 = vunpack.c.0.s8 %v1147
  %v1149 = vlaneseq
  %v1150 = vshrl.u32 %v1149, 7
  %v1151 = vsub.s32 %v1148, %v1150
  %v1152 = vrot.slane %v1144, %v1151
  %1153 = vset.pattern.permute.xlu0 2
  %1154 = vperm.xlu0 %1153, %v84
  %v1155 = vpop.permute.xlu0 %1154
  %v1158 = vunpack.c.l.s4 839922192
  %v1159 = vunpack.c.0.s8 %v1158
  %v1160 = vlaneseq
  %v1161 = vshrl.u32 %v1160, 7
  %v1162 = vsub.s32 %v1159, %v1161
  %v1163 = vrot.slane %v1155, %v1162
  %1164 = vset.pattern.permute.xlu0 2
  %1165 = vperm.xlu0 %1164, %v85
  %v1166 = vpop.permute.xlu0 %1165
  %v1169 = vunpack.c.l.s4 839922192
  %v1170 = vunpack.c.0.s8 %v1169
  %v1171 = vlaneseq
  %v1172 = vshrl.u32 %v1171, 7
  %v1173 = vsub.s32 %v1170, %v1172
  %v1174 = vrot.slane %v1166, %v1173
  %1175 = vset.pattern.permute.xlu0 2
  %1176 = vperm.xlu0 %1175, %v86
  %v1177 = vpop.permute.xlu0 %1176
  %v1180 = vunpack.c.l.s4 839922192
  %v1181 = vunpack.c.0.s8 %v1180
  %v1182 = vlaneseq
  %v1183 = vshrl.u32 %v1182, 7
  %v1184 = vsub.s32 %v1181, %v1183
  %v1185 = vrot.slane %v1177, %v1184
  %v1210 = vunpack.c.l.b16 %v932
  %v1211 = vunpack.c.l.b16 %v943
  %v1212 = vunpack.c.l.b16 %v954
  %v1213 = vunpack.c.l.b16 %v965
  %v1214 = vunpack.c.l.b16 %v976
  %v1215 = vunpack.c.l.b16 %v987
  %v1216 = vunpack.c.l.b16 %v998
  %v1217 = vunpack.c.l.b16 %v1009
  %v1218 = vunpack.c.l.b16 %v1020
  %v1219 = vunpack.c.l.b16 %v1031
  %v1220 = vunpack.c.l.b16 %v1042
  %v1221 = vunpack.c.l.b16 %v1053
  %v1222 = vunpack.c.l.b16 %v1064
  %v1223 = vunpack.c.l.b16 %v1075
  %v1224 = vunpack.c.l.b16 %v1086
  %v1225 = vunpack.c.l.b16 %v1097
  %v1226 = vunpack.c.l.b16 %v1108
  %v1227 = vunpack.c.l.b16 %v1119
  %v1228 = vunpack.c.l.b16 %v1130
  %v1229 = vunpack.c.l.b16 %v1141
  %v1230 = vunpack.c.l.b16 %v1152
  %v1231 = vunpack.c.l.b16 %v1163
  %v1232 = vunpack.c.l.b16 %v1174
  %v1233 = vunpack.c.l.b16 %v1185
  %v1234 = vpack.c.b16 %v1211, %v1210
  %v1235 = vpack.c.b16 %v1213, %v1212
  %v1236 = vpack.c.b16 %v1215, %v1214
  %v1237 = vpack.c.b16 %v1217, %v1216
  %v1238 = vpack.c.b16 %v1219, %v1218
  %v1239 = vpack.c.b16 %v1221, %v1220
  %v1240 = vpack.c.b16 %v1223, %v1222
  %v1241 = vpack.c.b16 %v1225, %v1224
  %v1242 = vpack.c.b16 %v1227, %v1226
  %v1243 = vpack.c.b16 %v1229, %v1228
  %v1244 = vpack.c.b16 %v1231, %v1230
  %v1245 = vpack.c.b16 %v1233, %v1232
  %vm1246 = vsmask.f32 4352
  %v1248 = vshrl.u32 %v1234, 16
  %v1250 = vrot.slane %v1248, 3
  %v1251 = vshll.u32 %v1234, 16
  %v1253 = vrot.slane %v1251, 4
  %v1254 = vor.u32 %v1250, %v1253
  %v1256 = vshrl.u32 %v1235, 16
  %v1258 = vrot.slane %v1256, 3
  %v1259 = vshll.u32 %v1235, 16
  %v1261 = vrot.slane %v1259, 4
  %v1262 = vor.u32 %v1258, %v1261
  %v1263 = vsel %vm1246, %v1254, %v1262
  %v1265 = vshrl.u32 %v1236, 16
  %v1267 = vrot.slane %v1265, 3
  %v1268 = vshll.u32 %v1236, 16
  %v1270 = vrot.slane %v1268, 4
  %v1271 = vor.u32 %v1267, %v1270
  %v1272 = vsel %vm1246, %v1262, %v1271
  %v1274 = vshrl.u32 %v1237, 16
  %v1276 = vrot.slane %v1274, 3
  %v1277 = vshll.u32 %v1237, 16
  %v1279 = vrot.slane %v1277, 4
  %v1280 = vor.u32 %v1276, %v1279
  %v1281 = vsel %vm1246, %v1271, %v1280
  %v1283 = vshrl.u32 %v1238, 16
  %v1285 = vrot.slane %v1283, 3
  %v1286 = vshll.u32 %v1238, 16
  %v1288 = vrot.slane %v1286, 4
  %v1289 = vor.u32 %v1285, %v1288
  %v1290 = vsel %vm1246, %v1280, %v1289
  %v1292 = vshrl.u32 %v1239, 16
  %v1294 = vrot.slane %v1292, 3
  %v1295 = vshll.u32 %v1239, 16
  %v1297 = vrot.slane %v1295, 4
  %v1298 = vor.u32 %v1294, %v1297
  %v1299 = vsel %vm1246, %v1289, %v1298
  %v1301 = vshrl.u32 %v1240, 16
  %v1303 = vrot.slane %v1301, 3
  %v1304 = vshll.u32 %v1240, 16
  %v1306 = vrot.slane %v1304, 4
  %v1307 = vor.u32 %v1303, %v1306
  %v1308 = vsel %vm1246, %v1298, %v1307
  %v1310 = vshrl.u32 %v1241, 16
  %v1312 = vrot.slane %v1310, 3
  %v1313 = vshll.u32 %v1241, 16
  %v1315 = vrot.slane %v1313, 4
  %v1316 = vor.u32 %v1312, %v1315
  %v1317 = vsel %vm1246, %v1307, %v1316
  %v1319 = vshrl.u32 %v1242, 16
  %v1321 = vrot.slane %v1319, 3
  %v1322 = vshll.u32 %v1242, 16
  %v1324 = vrot.slane %v1322, 4
  %v1325 = vor.u32 %v1321, %v1324
  %v1326 = vsel %vm1246, %v1316, %v1325
  %v1328 = vshrl.u32 %v1243, 16
  %v1330 = vrot.slane %v1328, 3
  %v1331 = vshll.u32 %v1243, 16
  %v1333 = vrot.slane %v1331, 4
  %v1334 = vor.u32 %v1330, %v1333
  %v1335 = vsel %vm1246, %v1325, %v1334
  %v1337 = vshrl.u32 %v1244, 16
  %v1339 = vrot.slane %v1337, 3
  %v1340 = vshll.u32 %v1244, 16
  %v1342 = vrot.slane %v1340, 4
  %v1343 = vor.u32 %v1339, %v1342
  %v1344 = vsel %vm1246, %v1334, %v1343
  %v1346 = vshrl.u32 %v1245, 16
  %v1348 = vrot.slane %v1346, 3
  %v1349 = vshll.u32 %v1245, 16
  %v1351 = vrot.slane %v1349, 4
  %v1352 = vor.u32 %v1348, %v1351
  %v1353 = vsel %vm1246, %v1343, %v1352
  %v1367 = vmul.bf16 %v45, %v1254
  %v1368 = vmul.bf16 %v46, %v1263
  %v1369 = vmul.bf16 %v47, %v1272
  %v1370 = vmul.bf16 %v48, %v1281
  %v1371 = vmul.bf16 %v49, %v1290
  %v1372 = vmul.bf16 %v50, %v1299
  %v1373 = vmul.bf16 %v51, %v1308
  %v1374 = vmul.bf16 %v52, %v1317
  %v1375 = vmul.bf16 %v53, %v1326
  %v1376 = vmul.bf16 %v54, %v1335
  %v1377 = vmul.bf16 %v55, %v1344
  %v1378 = vmul.bf16 %v56, %v1353
  %v1379 = vmul.bf16 %v57, %v1352
  %1380 = vset.pattern.permute.xlu0 3
  %1381 = vperm.xlu0 %1380, %v63
  %v1382 = vpop.permute.xlu0 %1381
  %v1385 = vunpack.c.l.s4 839922192
  %v1386 = vunpack.c.0.s8 %v1385
  %v1387 = vlaneseq
  %v1388 = vshrl.u32 %v1387, 7
  %v1389 = vsub.s32 %v1386, %v1388
  %v1390 = vrot.slane %v1382, %v1389
  %1391 = vset.pattern.permute.xlu0 3
  %1392 = vperm.xlu0 %1391, %v64
  %v1393 = vpop.permute.xlu0 %1392
  %v1396 = vunpack.c.l.s4 839922192
  %v1397 = vunpack.c.0.s8 %v1396
  %v1398 = vlaneseq
  %v1399 = vshrl.u32 %v1398, 7
  %v1400 = vsub.s32 %v1397, %v1399
  %v1401 = vrot.slane %v1393, %v1400
  %1402 = vset.pattern.permute.xlu0 3
  %1403 = vperm.xlu0 %1402, %v65
  %v1404 = vpop.permute.xlu0 %1403
  %v1407 = vunpack.c.l.s4 839922192
  %v1408 = vunpack.c.0.s8 %v1407
  %v1409 = vlaneseq
  %v1410 = vshrl.u32 %v1409, 7
  %v1411 = vsub.s32 %v1408, %v1410
  %v1412 = vrot.slane %v1404, %v1411
  %1413 = vset.pattern.permute.xlu0 3
  %1414 = vperm.xlu0 %1413, %v66
  %v1415 = vpop.permute.xlu0 %1414
  %v1418 = vunpack.c.l.s4 839922192
  %v1419 = vunpack.c.0.s8 %v1418
  %v1420 = vlaneseq
  %v1421 = vshrl.u32 %v1420, 7
  %v1422 = vsub.s32 %v1419, %v1421
  %v1423 = vrot.slane %v1415, %v1422
  %1424 = vset.pattern.permute.xlu0 3
  %1425 = vperm.xlu0 %1424, %v67
  %v1426 = vpop.permute.xlu0 %1425
  %v1429 = vunpack.c.l.s4 839922192
  %v1430 = vunpack.c.0.s8 %v1429
  %v1431 = vlaneseq
  %v1432 = vshrl.u32 %v1431, 7
  %v1433 = vsub.s32 %v1430, %v1432
  %v1434 = vrot.slane %v1426, %v1433
  %1435 = vset.pattern.permute.xlu0 3
  %1436 = vperm.xlu0 %1435, %v68
  %v1437 = vpop.permute.xlu0 %1436
  %v1440 = vunpack.c.l.s4 839922192
  %v1441 = vunpack.c.0.s8 %v1440
  %v1442 = vlaneseq
  %v1443 = vshrl.u32 %v1442, 7
  %v1444 = vsub.s32 %v1441, %v1443
  %v1445 = vrot.slane %v1437, %v1444
  %1446 = vset.pattern.permute.xlu0 3
  %1447 = vperm.xlu0 %1446, %v69
  %v1448 = vpop.permute.xlu0 %1447
  %v1451 = vunpack.c.l.s4 839922192
  %v1452 = vunpack.c.0.s8 %v1451
  %v1453 = vlaneseq
  %v1454 = vshrl.u32 %v1453, 7
  %v1455 = vsub.s32 %v1452, %v1454
  %v1456 = vrot.slane %v1448, %v1455
  %1457 = vset.pattern.permute.xlu0 3
  %1458 = vperm.xlu0 %1457, %v70
  %v1459 = vpop.permute.xlu0 %1458
  %v1462 = vunpack.c.l.s4 839922192
  %v1463 = vunpack.c.0.s8 %v1462
  %v1464 = vlaneseq
  %v1465 = vshrl.u32 %v1464, 7
  %v1466 = vsub.s32 %v1463, %v1465
  %v1467 = vrot.slane %v1459, %v1466
  %1468 = vset.pattern.permute.xlu0 3
  %1469 = vperm.xlu0 %1468, %v71
  %v1470 = vpop.permute.xlu0 %1469
  %v1473 = vunpack.c.l.s4 839922192
  %v1474 = vunpack.c.0.s8 %v1473
  %v1475 = vlaneseq
  %v1476 = vshrl.u32 %v1475, 7
  %v1477 = vsub.s32 %v1474, %v1476
  %v1478 = vrot.slane %v1470, %v1477
  %1479 = vset.pattern.permute.xlu0 3
  %1480 = vperm.xlu0 %1479, %v72
  %v1481 = vpop.permute.xlu0 %1480
  %v1484 = vunpack.c.l.s4 839922192
  %v1485 = vunpack.c.0.s8 %v1484
  %v1486 = vlaneseq
  %v1487 = vshrl.u32 %v1486, 7
  %v1488 = vsub.s32 %v1485, %v1487
  %v1489 = vrot.slane %v1481, %v1488
  %1490 = vset.pattern.permute.xlu0 3
  %1491 = vperm.xlu0 %1490, %v73
  %v1492 = vpop.permute.xlu0 %1491
  %v1495 = vunpack.c.l.s4 839922192
  %v1496 = vunpack.c.0.s8 %v1495
  %v1497 = vlaneseq
  %v1498 = vshrl.u32 %v1497, 7
  %v1499 = vsub.s32 %v1496, %v1498
  %v1500 = vrot.slane %v1492, %v1499
  %1501 = vset.pattern.permute.xlu0 3
  %1502 = vperm.xlu0 %1501, %v74
  %v1503 = vpop.permute.xlu0 %1502
  %v1506 = vunpack.c.l.s4 839922192
  %v1507 = vunpack.c.0.s8 %v1506
  %v1508 = vlaneseq
  %v1509 = vshrl.u32 %v1508, 7
  %v1510 = vsub.s32 %v1507, %v1509
  %v1511 = vrot.slane %v1503, %v1510
  %1512 = vset.pattern.permute.xlu0 3
  %1513 = vperm.xlu0 %1512, %v75
  %v1514 = vpop.permute.xlu0 %1513
  %v1517 = vunpack.c.l.s4 839922192
  %v1518 = vunpack.c.0.s8 %v1517
  %v1519 = vlaneseq
  %v1520 = vshrl.u32 %v1519, 7
  %v1521 = vsub.s32 %v1518, %v1520
  %v1522 = vrot.slane %v1514, %v1521
  %1523 = vset.pattern.permute.xlu0 3
  %1524 = vperm.xlu0 %1523, %v76
  %v1525 = vpop.permute.xlu0 %1524
  %v1528 = vunpack.c.l.s4 839922192
  %v1529 = vunpack.c.0.s8 %v1528
  %v1530 = vlaneseq
  %v1531 = vshrl.u32 %v1530, 7
  %v1532 = vsub.s32 %v1529, %v1531
  %v1533 = vrot.slane %v1525, %v1532
  %1534 = vset.pattern.permute.xlu0 3
  %1535 = vperm.xlu0 %1534, %v77
  %v1536 = vpop.permute.xlu0 %1535
  %v1539 = vunpack.c.l.s4 839922192
  %v1540 = vunpack.c.0.s8 %v1539
  %v1541 = vlaneseq
  %v1542 = vshrl.u32 %v1541, 7
  %v1543 = vsub.s32 %v1540, %v1542
  %v1544 = vrot.slane %v1536, %v1543
  %1545 = vset.pattern.permute.xlu0 3
  %1546 = vperm.xlu0 %1545, %v78
  %v1547 = vpop.permute.xlu0 %1546
  %v1550 = vunpack.c.l.s4 839922192
  %v1551 = vunpack.c.0.s8 %v1550
  %v1552 = vlaneseq
  %v1553 = vshrl.u32 %v1552, 7
  %v1554 = vsub.s32 %v1551, %v1553
  %v1555 = vrot.slane %v1547, %v1554
  %1556 = vset.pattern.permute.xlu0 3
  %1557 = vperm.xlu0 %1556, %v79
  %v1558 = vpop.permute.xlu0 %1557
  %v1561 = vunpack.c.l.s4 839922192
  %v1562 = vunpack.c.0.s8 %v1561
  %v1563 = vlaneseq
  %v1564 = vshrl.u32 %v1563, 7
  %v1565 = vsub.s32 %v1562, %v1564
  %v1566 = vrot.slane %v1558, %v1565
  %1567 = vset.pattern.permute.xlu0 3
  %1568 = vperm.xlu0 %1567, %v80
  %v1569 = vpop.permute.xlu0 %1568
  %v1572 = vunpack.c.l.s4 839922192
  %v1573 = vunpack.c.0.s8 %v1572
  %v1574 = vlaneseq
  %v1575 = vshrl.u32 %v1574, 7
  %v1576 = vsub.s32 %v1573, %v1575
  %v1577 = vrot.slane %v1569, %v1576
  %1578 = vset.pattern.permute.xlu0 3
  %1579 = vperm.xlu0 %1578, %v81
  %v1580 = vpop.permute.xlu0 %1579
  %v1583 = vunpack.c.l.s4 839922192
  %v1584 = vunpack.c.0.s8 %v1583
  %v1585 = vlaneseq
  %v1586 = vshrl.u32 %v1585, 7
  %v1587 = vsub.s32 %v1584, %v1586
  %v1588 = vrot.slane %v1580, %v1587
  %1589 = vset.pattern.permute.xlu0 3
  %1590 = vperm.xlu0 %1589, %v82
  %v1591 = vpop.permute.xlu0 %1590
  %v1594 = vunpack.c.l.s4 839922192
  %v1595 = vunpack.c.0.s8 %v1594
  %v1596 = vlaneseq
  %v1597 = vshrl.u32 %v1596, 7
  %v1598 = vsub.s32 %v1595, %v1597
  %v1599 = vrot.slane %v1591, %v1598
  %1600 = vset.pattern.permute.xlu0 3
  %1601 = vperm.xlu0 %1600, %v83
  %v1602 = vpop.permute.xlu0 %1601
  %v1605 = vunpack.c.l.s4 839922192
  %v1606 = vunpack.c.0.s8 %v1605
  %v1607 = vlaneseq
  %v1608 = vshrl.u32 %v1607, 7
  %v1609 = vsub.s32 %v1606, %v1608
  %v1610 = vrot.slane %v1602, %v1609
  %1611 = vset.pattern.permute.xlu0 3
  %1612 = vperm.xlu0 %1611, %v84
  %v1613 = vpop.permute.xlu0 %1612
  %v1616 = vunpack.c.l.s4 839922192
  %v1617 = vunpack.c.0.s8 %v1616
  %v1618 = vlaneseq
  %v1619 = vshrl.u32 %v1618, 7
  %v1620 = vsub.s32 %v1617, %v1619
  %v1621 = vrot.slane %v1613, %v1620
  %1622 = vset.pattern.permute.xlu0 3
  %1623 = vperm.xlu0 %1622, %v85
  %v1624 = vpop.permute.xlu0 %1623
  %v1627 = vunpack.c.l.s4 839922192
  %v1628 = vunpack.c.0.s8 %v1627
  %v1629 = vlaneseq
  %v1630 = vshrl.u32 %v1629, 7
  %v1631 = vsub.s32 %v1628, %v1630
  %v1632 = vrot.slane %v1624, %v1631
  %1633 = vset.pattern.permute.xlu0 3
  %1634 = vperm.xlu0 %1633, %v86
  %v1635 = vpop.permute.xlu0 %1634
  %v1638 = vunpack.c.l.s4 839922192
  %v1639 = vunpack.c.0.s8 %v1638
  %v1640 = vlaneseq
  %v1641 = vshrl.u32 %v1640, 7
  %v1642 = vsub.s32 %v1639, %v1641
  %v1643 = vrot.slane %v1635, %v1642
  %v1668 = vunpack.c.l.b16 %v1390
  %v1669 = vunpack.c.l.b16 %v1401
  %v1670 = vunpack.c.l.b16 %v1412
  %v1671 = vunpack.c.l.b16 %v1423
  %v1672 = vunpack.c.l.b16 %v1434
  %v1673 = vunpack.c.l.b16 %v1445
  %v1674 = vunpack.c.l.b16 %v1456
  %v1675 = vunpack.c.l.b16 %v1467
  %v1676 = vunpack.c.l.b16 %v1478
  %v1677 = vunpack.c.l.b16 %v1489
  %v1678 = vunpack.c.l.b16 %v1500
  %v1679 = vunpack.c.l.b16 %v1511
  %v1680 = vunpack.c.l.b16 %v1522
  %v1681 = vunpack.c.l.b16 %v1533
  %v1682 = vunpack.c.l.b16 %v1544
  %v1683 = vunpack.c.l.b16 %v1555
  %v1684 = vunpack.c.l.b16 %v1566
  %v1685 = vunpack.c.l.b16 %v1577
  %v1686 = vunpack.c.l.b16 %v1588
  %v1687 = vunpack.c.l.b16 %v1599
  %v1688 = vunpack.c.l.b16 %v1610
  %v1689 = vunpack.c.l.b16 %v1621
  %v1690 = vunpack.c.l.b16 %v1632
  %v1691 = vunpack.c.l.b16 %v1643
  %v1692 = vpack.c.b16 %v1669, %v1668
  %v1693 = vpack.c.b16 %v1671, %v1670
  %v1694 = vpack.c.b16 %v1673, %v1672
  %v1695 = vpack.c.b16 %v1675, %v1674
  %v1696 = vpack.c.b16 %v1677, %v1676
  %v1697 = vpack.c.b16 %v1679, %v1678
  %v1698 = vpack.c.b16 %v1681, %v1680
  %v1699 = vpack.c.b16 %v1683, %v1682
  %v1700 = vpack.c.b16 %v1685, %v1684
  %v1701 = vpack.c.b16 %v1687, %v1686
  %v1702 = vpack.c.b16 %v1689, %v1688
  %v1703 = vpack.c.b16 %v1691, %v1690
  %v1705 = vshrl.u32 %v1692, 16
  %v1707 = vrot.slane %v1705, 4
  %v1708 = vshll.u32 %v1692, 16
  %v1710 = vrot.slane %v1708, 5
  %v1711 = vor.u32 %v1707, %v1710
  %v1713 = vshrl.u32 %v1693, 16
  %v1715 = vrot.slane %v1713, 4
  %v1716 = vshll.u32 %v1693, 16
  %v1718 = vrot.slane %v1716, 5
  %v1719 = vor.u32 %v1715, %v1718
  %v1720 = vsel %vm437, %v1711, %v1719
  %v1722 = vshrl.u32 %v1694, 16
  %v1724 = vrot.slane %v1722, 4
  %v1725 = vshll.u32 %v1694, 16
  %v1727 = vrot.slane %v1725, 5
  %v1728 = vor.u32 %v1724, %v1727
  %v1729 = vsel %vm437, %v1719, %v1728
  %v1731 = vshrl.u32 %v1695, 16
  %v1733 = vrot.slane %v1731, 4
  %v1734 = vshll.u32 %v1695, 16
  %v1736 = vrot.slane %v1734, 5
  %v1737 = vor.u32 %v1733, %v1736
  %v1738 = vsel %vm437, %v1728, %v1737
  %v1740 = vshrl.u32 %v1696, 16
  %v1742 = vrot.slane %v1740, 4
  %v1743 = vshll.u32 %v1696, 16
  %v1745 = vrot.slane %v1743, 5
  %v1746 = vor.u32 %v1742, %v1745
  %v1747 = vsel %vm437, %v1737, %v1746
  %v1749 = vshrl.u32 %v1697, 16
  %v1751 = vrot.slane %v1749, 4
  %v1752 = vshll.u32 %v1697, 16
  %v1754 = vrot.slane %v1752, 5
  %v1755 = vor.u32 %v1751, %v1754
  %v1756 = vsel %vm437, %v1746, %v1755
  %v1758 = vshrl.u32 %v1698, 16
  %v1760 = vrot.slane %v1758, 4
  %v1761 = vshll.u32 %v1698, 16
  %v1763 = vrot.slane %v1761, 5
  %v1764 = vor.u32 %v1760, %v1763
  %v1765 = vsel %vm437, %v1755, %v1764
  %v1767 = vshrl.u32 %v1699, 16
  %v1769 = vrot.slane %v1767, 4
  %v1770 = vshll.u32 %v1699, 16
  %v1772 = vrot.slane %v1770, 5
  %v1773 = vor.u32 %v1769, %v1772
  %v1774 = vsel %vm437, %v1764, %v1773
  %v1776 = vshrl.u32 %v1700, 16
  %v1778 = vrot.slane %v1776, 4
  %v1779 = vshll.u32 %v1700, 16
  %v1781 = vrot.slane %v1779, 5
  %v1782 = vor.u32 %v1778, %v1781
  %v1783 = vsel %vm437, %v1773, %v1782
  %v1785 = vshrl.u32 %v1701, 16
  %v1787 = vrot.slane %v1785, 4
  %v1788 = vshll.u32 %v1701, 16
  %v1790 = vrot.slane %v1788, 5
  %v1791 = vor.u32 %v1787, %v1790
  %v1792 = vsel %vm437, %v1782, %v1791
  %v1794 = vshrl.u32 %v1702, 16
  %v1796 = vrot.slane %v1794, 4
  %v1797 = vshll.u32 %v1702, 16
  %v1799 = vrot.slane %v1797, 5
  %v1800 = vor.u32 %v1796, %v1799
  %v1801 = vsel %vm437, %v1791, %v1800
  %v1803 = vshrl.u32 %v1703, 16
  %v1805 = vrot.slane %v1803, 4
  %v1806 = vshll.u32 %v1703, 16
  %v1808 = vrot.slane %v1806, 5
  %v1809 = vor.u32 %v1805, %v1808
  %v1810 = vsel %vm437, %v1800, %v1809
  %v1824 = vmul.bf16 %v46, %v1711
  %v1825 = vmul.bf16 %v47, %v1720
  %v1826 = vmul.bf16 %v48, %v1729
  %v1827 = vmul.bf16 %v49, %v1738
  %v1828 = vmul.bf16 %v50, %v1747
  %v1829 = vmul.bf16 %v51, %v1756
  %v1830 = vmul.bf16 %v52, %v1765
  %v1831 = vmul.bf16 %v53, %v1774
  %v1832 = vmul.bf16 %v54, %v1783
  %v1833 = vmul.bf16 %v55, %v1792
  %v1834 = vmul.bf16 %v56, %v1801
  %v1835 = vmul.bf16 %v57, %v1810
  %v1836 = vmul.bf16 %v58, %v1809
  %1837 = vset.pattern.permute.xlu0 4
  %1838 = vperm.xlu0 %1837, %v63
  %v1839 = vpop.permute.xlu0 %1838
  %v1842 = vunpack.c.l.s4 839922192
  %v1843 = vunpack.c.0.s8 %v1842
  %v1844 = vlaneseq
  %v1845 = vshrl.u32 %v1844, 7
  %v1846 = vsub.s32 %v1843, %v1845
  %v1847 = vrot.slane %v1839, %v1846
  %1848 = vset.pattern.permute.xlu0 4
  %1849 = vperm.xlu0 %1848, %v64
  %v1850 = vpop.permute.xlu0 %1849
  %v1853 = vunpack.c.l.s4 839922192
  %v1854 = vunpack.c.0.s8 %v1853
  %v1855 = vlaneseq
  %v1856 = vshrl.u32 %v1855, 7
  %v1857 = vsub.s32 %v1854, %v1856
  %v1858 = vrot.slane %v1850, %v1857
  %1859 = vset.pattern.permute.xlu0 4
  %1860 = vperm.xlu0 %1859, %v65
  %v1861 = vpop.permute.xlu0 %1860
  %v1864 = vunpack.c.l.s4 839922192
  %v1865 = vunpack.c.0.s8 %v1864
  %v1866 = vlaneseq
  %v1867 = vshrl.u32 %v1866, 7
  %v1868 = vsub.s32 %v1865, %v1867
  %v1869 = vrot.slane %v1861, %v1868
  %1870 = vset.pattern.permute.xlu0 4
  %1871 = vperm.xlu0 %1870, %v66
  %v1872 = vpop.permute.xlu0 %1871
  %v1875 = vunpack.c.l.s4 839922192
  %v1876 = vunpack.c.0.s8 %v1875
  %v1877 = vlaneseq
  %v1878 = vshrl.u32 %v1877, 7
  %v1879 = vsub.s32 %v1876, %v1878
  %v1880 = vrot.slane %v1872, %v1879
  %1881 = vset.pattern.permute.xlu0 4
  %1882 = vperm.xlu0 %1881, %v67
  %v1883 = vpop.permute.xlu0 %1882
  %v1886 = vunpack.c.l.s4 839922192
  %v1887 = vunpack.c.0.s8 %v1886
  %v1888 = vlaneseq
  %v1889 = vshrl.u32 %v1888, 7
  %v1890 = vsub.s32 %v1887, %v1889
  %v1891 = vrot.slane %v1883, %v1890
  %1892 = vset.pattern.permute.xlu0 4
  %1893 = vperm.xlu0 %1892, %v68
  %v1894 = vpop.permute.xlu0 %1893
  %v1897 = vunpack.c.l.s4 839922192
  %v1898 = vunpack.c.0.s8 %v1897
  %v1899 = vlaneseq
  %v1900 = vshrl.u32 %v1899, 7
  %v1901 = vsub.s32 %v1898, %v1900
  %v1902 = vrot.slane %v1894, %v1901
  %1903 = vset.pattern.permute.xlu0 4
  %1904 = vperm.xlu0 %1903, %v69
  %v1905 = vpop.permute.xlu0 %1904
  %v1908 = vunpack.c.l.s4 839922192
  %v1909 = vunpack.c.0.s8 %v1908
  %v1910 = vlaneseq
  %v1911 = vshrl.u32 %v1910, 7
  %v1912 = vsub.s32 %v1909, %v1911
  %v1913 = vrot.slane %v1905, %v1912
  %1914 = vset.pattern.permute.xlu0 4
  %1915 = vperm.xlu0 %1914, %v70
  %v1916 = vpop.permute.xlu0 %1915
  %v1919 = vunpack.c.l.s4 839922192
  %v1920 = vunpack.c.0.s8 %v1919
  %v1921 = vlaneseq
  %v1922 = vshrl.u32 %v1921, 7
  %v1923 = vsub.s32 %v1920, %v1922
  %v1924 = vrot.slane %v1916, %v1923
  %1925 = vset.pattern.permute.xlu0 4
  %1926 = vperm.xlu0 %1925, %v71
  %v1927 = vpop.permute.xlu0 %1926
  %v1930 = vunpack.c.l.s4 839922192
  %v1931 = vunpack.c.0.s8 %v1930
  %v1932 = vlaneseq
  %v1933 = vshrl.u32 %v1932, 7
  %v1934 = vsub.s32 %v1931, %v1933
  %v1935 = vrot.slane %v1927, %v1934
  %1936 = vset.pattern.permute.xlu0 4
  %1937 = vperm.xlu0 %1936, %v72
  %v1938 = vpop.permute.xlu0 %1937
  %v1941 = vunpack.c.l.s4 839922192
  %v1942 = vunpack.c.0.s8 %v1941
  %v1943 = vlaneseq
  %v1944 = vshrl.u32 %v1943, 7
  %v1945 = vsub.s32 %v1942, %v1944
  %v1946 = vrot.slane %v1938, %v1945
  %1947 = vset.pattern.permute.xlu0 4
  %1948 = vperm.xlu0 %1947, %v73
  %v1949 = vpop.permute.xlu0 %1948
  %v1952 = vunpack.c.l.s4 839922192
  %v1953 = vunpack.c.0.s8 %v1952
  %v1954 = vlaneseq
  %v1955 = vshrl.u32 %v1954, 7
  %v1956 = vsub.s32 %v1953, %v1955
  %v1957 = vrot.slane %v1949, %v1956
  %1958 = vset.pattern.permute.xlu0 4
  %1959 = vperm.xlu0 %1958, %v74
  %v1960 = vpop.permute.xlu0 %1959
  %v1963 = vunpack.c.l.s4 839922192
  %v1964 = vunpack.c.0.s8 %v1963
  %v1965 = vlaneseq
  %v1966 = vshrl.u32 %v1965, 7
  %v1967 = vsub.s32 %v1964, %v1966
  %v1968 = vrot.slane %v1960, %v1967
  %1969 = vset.pattern.permute.xlu0 4
  %1970 = vperm.xlu0 %1969, %v75
  %v1971 = vpop.permute.xlu0 %1970
  %v1974 = vunpack.c.l.s4 839922192
  %v1975 = vunpack.c.0.s8 %v1974
  %v1976 = vlaneseq
  %v1977 = vshrl.u32 %v1976, 7
  %v1978 = vsub.s32 %v1975, %v1977
  %v1979 = vrot.slane %v1971, %v1978
  %1980 = vset.pattern.permute.xlu0 4
  %1981 = vperm.xlu0 %1980, %v76
  %v1982 = vpop.permute.xlu0 %1981
  %v1985 = vunpack.c.l.s4 839922192
  %v1986 = vunpack.c.0.s8 %v1985
  %v1987 = vlaneseq
  %v1988 = vshrl.u32 %v1987, 7
  %v1989 = vsub.s32 %v1986, %v1988
  %v1990 = vrot.slane %v1982, %v1989
  %1991 = vset.pattern.permute.xlu0 4
  %1992 = vperm.xlu0 %1991, %v77
  %v1993 = vpop.permute.xlu0 %1992
  %v1996 = vunpack.c.l.s4 839922192
  %v1997 = vunpack.c.0.s8 %v1996
  %v1998 = vlaneseq
  %v1999 = vshrl.u32 %v1998, 7
  %v2000 = vsub.s32 %v1997, %v1999
  %v2001 = vrot.slane %v1993, %v2000
  %2002 = vset.pattern.permute.xlu0 4
  %2003 = vperm.xlu0 %2002, %v78
  %v2004 = vpop.permute.xlu0 %2003
  %v2007 = vunpack.c.l.s4 839922192
  %v2008 = vunpack.c.0.s8 %v2007
  %v2009 = vlaneseq
  %v2010 = vshrl.u32 %v2009, 7
  %v2011 = vsub.s32 %v2008, %v2010
  %v2012 = vrot.slane %v2004, %v2011
  %2013 = vset.pattern.permute.xlu0 4
  %2014 = vperm.xlu0 %2013, %v79
  %v2015 = vpop.permute.xlu0 %2014
  %v2018 = vunpack.c.l.s4 839922192
  %v2019 = vunpack.c.0.s8 %v2018
  %v2020 = vlaneseq
  %v2021 = vshrl.u32 %v2020, 7
  %v2022 = vsub.s32 %v2019, %v2021
  %v2023 = vrot.slane %v2015, %v2022
  %2024 = vset.pattern.permute.xlu0 4
  %2025 = vperm.xlu0 %2024, %v80
  %v2026 = vpop.permute.xlu0 %2025
  %v2029 = vunpack.c.l.s4 839922192
  %v2030 = vunpack.c.0.s8 %v2029
  %v2031 = vlaneseq
  %v2032 = vshrl.u32 %v2031, 7
  %v2033 = vsub.s32 %v2030, %v2032
  %v2034 = vrot.slane %v2026, %v2033
  %2035 = vset.pattern.permute.xlu0 4
  %2036 = vperm.xlu0 %2035, %v81
  %v2037 = vpop.permute.xlu0 %2036
  %v2040 = vunpack.c.l.s4 839922192
  %v2041 = vunpack.c.0.s8 %v2040
  %v2042 = vlaneseq
  %v2043 = vshrl.u32 %v2042, 7
  %v2044 = vsub.s32 %v2041, %v2043
  %v2045 = vrot.slane %v2037, %v2044
  %2046 = vset.pattern.permute.xlu0 4
  %2047 = vperm.xlu0 %2046, %v82
  %v2048 = vpop.permute.xlu0 %2047
  %v2051 = vunpack.c.l.s4 839922192
  %v2052 = vunpack.c.0.s8 %v2051
  %v2053 = vlaneseq
  %v2054 = vshrl.u32 %v2053, 7
  %v2055 = vsub.s32 %v2052, %v2054
  %v2056 = vrot.slane %v2048, %v2055
  %2057 = vset.pattern.permute.xlu0 4
  %2058 = vperm.xlu0 %2057, %v83
  %v2059 = vpop.permute.xlu0 %2058
  %v2062 = vunpack.c.l.s4 839922192
  %v2063 = vunpack.c.0.s8 %v2062
  %v2064 = vlaneseq
  %v2065 = vshrl.u32 %v2064, 7
  %v2066 = vsub.s32 %v2063, %v2065
  %v2067 = vrot.slane %v2059, %v2066
  %2068 = vset.pattern.permute.xlu0 4
  %2069 = vperm.xlu0 %2068, %v84
  %v2070 = vpop.permute.xlu0 %2069
  %v2073 = vunpack.c.l.s4 839922192
  %v2074 = vunpack.c.0.s8 %v2073
  %v2075 = vlaneseq
  %v2076 = vshrl.u32 %v2075, 7
  %v2077 = vsub.s32 %v2074, %v2076
  %v2078 = vrot.slane %v2070, %v2077
  %2079 = vset.pattern.permute.xlu0 4
  %2080 = vperm.xlu0 %2079, %v85
  %v2081 = vpop.permute.xlu0 %2080
  %v2084 = vunpack.c.l.s4 839922192
  %v2085 = vunpack.c.0.s8 %v2084
  %v2086 = vlaneseq
  %v2087 = vshrl.u32 %v2086, 7
  %v2088 = vsub.s32 %v2085, %v2087
  %v2089 = vrot.slane %v2081, %v2088
  %2090 = vset.pattern.permute.xlu0 4
  %2091 = vperm.xlu0 %2090, %v86
  %v2092 = vpop.permute.xlu0 %2091
  %v2095 = vunpack.c.l.s4 839922192
  %v2096 = vunpack.c.0.s8 %v2095
  %v2097 = vlaneseq
  %v2098 = vshrl.u32 %v2097, 7
  %v2099 = vsub.s32 %v2096, %v2098
  %v2100 = vrot.slane %v2092, %v2099
  %v2125 = vunpack.c.l.b16 %v1847
  %v2126 = vunpack.c.l.b16 %v1858
  %v2127 = vunpack.c.l.b16 %v1869
  %v2128 = vunpack.c.l.b16 %v1880
  %v2129 = vunpack.c.l.b16 %v1891
  %v2130 = vunpack.c.l.b16 %v1902
  %v2131 = vunpack.c.l.b16 %v1913
  %v2132 = vunpack.c.l.b16 %v1924
  %v2133 = vunpack.c.l.b16 %v1935
  %v2134 = vunpack.c.l.b16 %v1946
  %v2135 = vunpack.c.l.b16 %v1957
  %v2136 = vunpack.c.l.b16 %v1968
  %v2137 = vunpack.c.l.b16 %v1979
  %v2138 = vunpack.c.l.b16 %v1990
  %v2139 = vunpack.c.l.b16 %v2001
  %v2140 = vunpack.c.l.b16 %v2012
  %v2141 = vunpack.c.l.b16 %v2023
  %v2142 = vunpack.c.l.b16 %v2034
  %v2143 = vunpack.c.l.b16 %v2045
  %v2144 = vunpack.c.l.b16 %v2056
  %v2145 = vunpack.c.l.b16 %v2067
  %v2146 = vunpack.c.l.b16 %v2078
  %v2147 = vunpack.c.l.b16 %v2089
  %v2148 = vunpack.c.l.b16 %v2100
  %v2149 = vpack.c.b16 %v2125, %v2125
  %v2150 = vpack.c.b16 %v2127, %v2126
  %v2151 = vpack.c.b16 %v2129, %v2128
  %v2152 = vpack.c.b16 %v2131, %v2130
  %v2153 = vpack.c.b16 %v2133, %v2132
  %v2154 = vpack.c.b16 %v2135, %v2134
  %v2155 = vpack.c.b16 %v2137, %v2136
  %v2156 = vpack.c.b16 %v2139, %v2138
  %v2157 = vpack.c.b16 %v2141, %v2140
  %v2158 = vpack.c.b16 %v2143, %v2142
  %v2159 = vpack.c.b16 %v2145, %v2144
  %v2160 = vpack.c.b16 %v2147, %v2146
  %v2161 = vpack.c.b16 %v2148, %v2148
  %v2175 = vmul.bf16 %v46, %v2149
  %v2176 = vmul.bf16 %v47, %v2150
  %v2177 = vmul.bf16 %v48, %v2151
  %v2178 = vmul.bf16 %v49, %v2152
  %v2179 = vmul.bf16 %v50, %v2153
  %v2180 = vmul.bf16 %v51, %v2154
  %v2181 = vmul.bf16 %v52, %v2155
  %v2182 = vmul.bf16 %v53, %v2156
  %v2183 = vmul.bf16 %v54, %v2157
  %v2184 = vmul.bf16 %v55, %v2158
  %v2185 = vmul.bf16 %v56, %v2159
  %v2186 = vmul.bf16 %v57, %v2160
  %v2187 = vmul.bf16 %v58, %v2161
  %2188 = vset.pattern.permute.xlu0 5
  %2189 = vperm.xlu0 %2188, %v63
  %v2190 = vpop.permute.xlu0 %2189
  %v2193 = vunpack.c.l.s4 839922192
  %v2194 = vunpack.c.0.s8 %v2193
  %v2195 = vlaneseq
  %v2196 = vshrl.u32 %v2195, 7
  %v2197 = vsub.s32 %v2194, %v2196
  %v2198 = vrot.slane %v2190, %v2197
  %2199 = vset.pattern.permute.xlu0 5
  %2200 = vperm.xlu0 %2199, %v64
  %v2201 = vpop.permute.xlu0 %2200
  %v2204 = vunpack.c.l.s4 839922192
  %v2205 = vunpack.c.0.s8 %v2204
  %v2206 = vlaneseq
  %v2207 = vshrl.u32 %v2206, 7
  %v2208 = vsub.s32 %v2205, %v2207
  %v2209 = vrot.slane %v2201, %v2208
  %2210 = vset.pattern.permute.xlu0 5
  %2211 = vperm.xlu0 %2210, %v65
  %v2212 = vpop.permute.xlu0 %2211
  %v2215 = vunpack.c.l.s4 839922192
  %v2216 = vunpack.c.0.s8 %v2215
  %v2217 = vlaneseq
  %v2218 = vshrl.u32 %v2217, 7
  %v2219 = vsub.s32 %v2216, %v2218
  %v2220 = vrot.slane %v2212, %v2219
  %2221 = vset.pattern.permute.xlu0 5
  %2222 = vperm.xlu0 %2221, %v66
  %v2223 = vpop.permute.xlu0 %2222
  %v2226 = vunpack.c.l.s4 839922192
  %v2227 = vunpack.c.0.s8 %v2226
  %v2228 = vlaneseq
  %v2229 = vshrl.u32 %v2228, 7
  %v2230 = vsub.s32 %v2227, %v2229
  %v2231 = vrot.slane %v2223, %v2230
  %2232 = vset.pattern.permute.xlu0 5
  %2233 = vperm.xlu0 %2232, %v67
  %v2234 = vpop.permute.xlu0 %2233
  %v2237 = vunpack.c.l.s4 839922192
  %v2238 = vunpack.c.0.s8 %v2237
  %v2239 = vlaneseq
  %v2240 = vshrl.u32 %v2239, 7
  %v2241 = vsub.s32 %v2238, %v2240
  %v2242 = vrot.slane %v2234, %v2241
  %2243 = vset.pattern.permute.xlu0 5
  %2244 = vperm.xlu0 %2243, %v68
  %v2245 = vpop.permute.xlu0 %2244
  %v2248 = vunpack.c.l.s4 839922192
  %v2249 = vunpack.c.0.s8 %v2248
  %v2250 = vlaneseq
  %v2251 = vshrl.u32 %v2250, 7
  %v2252 = vsub.s32 %v2249, %v2251
  %v2253 = vrot.slane %v2245, %v2252
  %2254 = vset.pattern.permute.xlu0 5
  %2255 = vperm.xlu0 %2254, %v69
  %v2256 = vpop.permute.xlu0 %2255
  %v2259 = vunpack.c.l.s4 839922192
  %v2260 = vunpack.c.0.s8 %v2259
  %v2261 = vlaneseq
  %v2262 = vshrl.u32 %v2261, 7
  %v2263 = vsub.s32 %v2260, %v2262
  %v2264 = vrot.slane %v2256, %v2263
  %2265 = vset.pattern.permute.xlu0 5
  %2266 = vperm.xlu0 %2265, %v70
  %v2267 = vpop.permute.xlu0 %2266
  %v2270 = vunpack.c.l.s4 839922192
  %v2271 = vunpack.c.0.s8 %v2270
  %v2272 = vlaneseq
  %v2273 = vshrl.u32 %v2272, 7
  %v2274 = vsub.s32 %v2271, %v2273
  %v2275 = vrot.slane %v2267, %v2274
  %2276 = vset.pattern.permute.xlu0 5
  %2277 = vperm.xlu0 %2276, %v71
  %v2278 = vpop.permute.xlu0 %2277
  %v2281 = vunpack.c.l.s4 839922192
  %v2282 = vunpack.c.0.s8 %v2281
  %v2283 = vlaneseq
  %v2284 = vshrl.u32 %v2283, 7
  %v2285 = vsub.s32 %v2282, %v2284
  %v2286 = vrot.slane %v2278, %v2285
  %2287 = vset.pattern.permute.xlu0 5
  %2288 = vperm.xlu0 %2287, %v72
  %v2289 = vpop.permute.xlu0 %2288
  %v2292 = vunpack.c.l.s4 839922192
  %v2293 = vunpack.c.0.s8 %v2292
  %v2294 = vlaneseq
  %v2295 = vshrl.u32 %v2294, 7
  %v2296 = vsub.s32 %v2293, %v2295
  %v2297 = vrot.slane %v2289, %v2296
  %2298 = vset.pattern.permute.xlu0 5
  %2299 = vperm.xlu0 %2298, %v73
  %v2300 = vpop.permute.xlu0 %2299
  %v2303 = vunpack.c.l.s4 839922192
  %v2304 = vunpack.c.0.s8 %v2303
  %v2305 = vlaneseq
  %v2306 = vshrl.u32 %v2305, 7
  %v2307 = vsub.s32 %v2304, %v2306
  %v2308 = vrot.slane %v2300, %v2307
  %2309 = vset.pattern.permute.xlu0 5
  %2310 = vperm.xlu0 %2309, %v74
  %v2311 = vpop.permute.xlu0 %2310
  %v2314 = vunpack.c.l.s4 839922192
  %v2315 = vunpack.c.0.s8 %v2314
  %v2316 = vlaneseq
  %v2317 = vshrl.u32 %v2316, 7
  %v2318 = vsub.s32 %v2315, %v2317
  %v2319 = vrot.slane %v2311, %v2318
  %2320 = vset.pattern.permute.xlu0 5
  %2321 = vperm.xlu0 %2320, %v75
  %v2322 = vpop.permute.xlu0 %2321
  %v2325 = vunpack.c.l.s4 839922192
  %v2326 = vunpack.c.0.s8 %v2325
  %v2327 = vlaneseq
  %v2328 = vshrl.u32 %v2327, 7
  %v2329 = vsub.s32 %v2326, %v2328
  %v2330 = vrot.slane %v2322, %v2329
  %2331 = vset.pattern.permute.xlu0 5
  %2332 = vperm.xlu0 %2331, %v76
  %v2333 = vpop.permute.xlu0 %2332
  %v2336 = vunpack.c.l.s4 839922192
  %v2337 = vunpack.c.0.s8 %v2336
  %v2338 = vlaneseq
  %v2339 = vshrl.u32 %v2338, 7
  %v2340 = vsub.s32 %v2337, %v2339
  %v2341 = vrot.slane %v2333, %v2340
  %2342 = vset.pattern.permute.xlu0 5
  %2343 = vperm.xlu0 %2342, %v77
  %v2344 = vpop.permute.xlu0 %2343
  %v2347 = vunpack.c.l.s4 839922192
  %v2348 = vunpack.c.0.s8 %v2347
  %v2349 = vlaneseq
  %v2350 = vshrl.u32 %v2349, 7
  %v2351 = vsub.s32 %v2348, %v2350
  %v2352 = vrot.slane %v2344, %v2351
  %2353 = vset.pattern.permute.xlu0 5
  %2354 = vperm.xlu0 %2353, %v78
  %v2355 = vpop.permute.xlu0 %2354
  %v2358 = vunpack.c.l.s4 839922192
  %v2359 = vunpack.c.0.s8 %v2358
  %v2360 = vlaneseq
  %v2361 = vshrl.u32 %v2360, 7
  %v2362 = vsub.s32 %v2359, %v2361
  %v2363 = vrot.slane %v2355, %v2362
  %2364 = vset.pattern.permute.xlu0 5
  %2365 = vperm.xlu0 %2364, %v79
  %v2366 = vpop.permute.xlu0 %2365
  %v2369 = vunpack.c.l.s4 839922192
  %v2370 = vunpack.c.0.s8 %v2369
  %v2371 = vlaneseq
  %v2372 = vshrl.u32 %v2371, 7
  %v2373 = vsub.s32 %v2370, %v2372
  %v2374 = vrot.slane %v2366, %v2373
  %2375 = vset.pattern.permute.xlu0 5
  %2376 = vperm.xlu0 %2375, %v80
  %v2377 = vpop.permute.xlu0 %2376
  %v2380 = vunpack.c.l.s4 839922192
  %v2381 = vunpack.c.0.s8 %v2380
  %v2382 = vlaneseq
  %v2383 = vshrl.u32 %v2382, 7
  %v2384 = vsub.s32 %v2381, %v2383
  %v2385 = vrot.slane %v2377, %v2384
  %2386 = vset.pattern.permute.xlu0 5
  %2387 = vperm.xlu0 %2386, %v81
  %v2388 = vpop.permute.xlu0 %2387
  %v2391 = vunpack.c.l.s4 839922192
  %v2392 = vunpack.c.0.s8 %v2391
  %v2393 = vlaneseq
  %v2394 = vshrl.u32 %v2393, 7
  %v2395 = vsub.s32 %v2392, %v2394
  %v2396 = vrot.slane %v2388, %v2395
  %2397 = vset.pattern.permute.xlu0 5
  %2398 = vperm.xlu0 %2397, %v82
  %v2399 = vpop.permute.xlu0 %2398
  %v2402 = vunpack.c.l.s4 839922192
  %v2403 = vunpack.c.0.s8 %v2402
  %v2404 = vlaneseq
  %v2405 = vshrl.u32 %v2404, 7
  %v2406 = vsub.s32 %v2403, %v2405
  %v2407 = vrot.slane %v2399, %v2406
  %2408 = vset.pattern.permute.xlu0 5
  %2409 = vperm.xlu0 %2408, %v83
  %v2410 = vpop.permute.xlu0 %2409
  %v2413 = vunpack.c.l.s4 839922192
  %v2414 = vunpack.c.0.s8 %v2413
  %v2415 = vlaneseq
  %v2416 = vshrl.u32 %v2415, 7
  %v2417 = vsub.s32 %v2414, %v2416
  %v2418 = vrot.slane %v2410, %v2417
  %2419 = vset.pattern.permute.xlu0 5
  %2420 = vperm.xlu0 %2419, %v84
  %v2421 = vpop.permute.xlu0 %2420
  %v2424 = vunpack.c.l.s4 839922192
  %v2425 = vunpack.c.0.s8 %v2424
  %v2426 = vlaneseq
  %v2427 = vshrl.u32 %v2426, 7
  %v2428 = vsub.s32 %v2425, %v2427
  %v2429 = vrot.slane %v2421, %v2428
  %2430 = vset.pattern.permute.xlu0 5
  %2431 = vperm.xlu0 %2430, %v85
  %v2432 = vpop.permute.xlu0 %2431
  %v2435 = vunpack.c.l.s4 839922192
  %v2436 = vunpack.c.0.s8 %v2435
  %v2437 = vlaneseq
  %v2438 = vshrl.u32 %v2437, 7
  %v2439 = vsub.s32 %v2436, %v2438
  %v2440 = vrot.slane %v2432, %v2439
  %2441 = vset.pattern.permute.xlu0 5
  %2442 = vperm.xlu0 %2441, %v86
  %v2443 = vpop.permute.xlu0 %2442
  %v2446 = vunpack.c.l.s4 839922192
  %v2447 = vunpack.c.0.s8 %v2446
  %v2448 = vlaneseq
  %v2449 = vshrl.u32 %v2448, 7
  %v2450 = vsub.s32 %v2447, %v2449
  %v2451 = vrot.slane %v2443, %v2450
  %v2476 = vunpack.c.l.b16 %v2198
  %v2477 = vunpack.c.l.b16 %v2209
  %v2478 = vunpack.c.l.b16 %v2220
  %v2479 = vunpack.c.l.b16 %v2231
  %v2480 = vunpack.c.l.b16 %v2242
  %v2481 = vunpack.c.l.b16 %v2253
  %v2482 = vunpack.c.l.b16 %v2264
  %v2483 = vunpack.c.l.b16 %v2275
  %v2484 = vunpack.c.l.b16 %v2286
  %v2485 = vunpack.c.l.b16 %v2297
  %v2486 = vunpack.c.l.b16 %v2308
  %v2487 = vunpack.c.l.b16 %v2319
  %v2488 = vunpack.c.l.b16 %v2330
  %v2489 = vunpack.c.l.b16 %v2341
  %v2490 = vunpack.c.l.b16 %v2352
  %v2491 = vunpack.c.l.b16 %v2363
  %v2492 = vunpack.c.l.b16 %v2374
  %v2493 = vunpack.c.l.b16 %v2385
  %v2494 = vunpack.c.l.b16 %v2396
  %v2495 = vunpack.c.l.b16 %v2407
  %v2496 = vunpack.c.l.b16 %v2418
  %v2497 = vunpack.c.l.b16 %v2429
  %v2498 = vunpack.c.l.b16 %v2440
  %v2499 = vunpack.c.l.b16 %v2451
  %v2500 = vpack.c.b16 %v2477, %v2476
  %v2501 = vpack.c.b16 %v2479, %v2478
  %v2502 = vpack.c.b16 %v2481, %v2480
  %v2503 = vpack.c.b16 %v2483, %v2482
  %v2504 = vpack.c.b16 %v2485, %v2484
  %v2505 = vpack.c.b16 %v2487, %v2486
  %v2506 = vpack.c.b16 %v2489, %v2488
  %v2507 = vpack.c.b16 %v2491, %v2490
  %v2508 = vpack.c.b16 %v2493, %v2492
  %v2509 = vpack.c.b16 %v2495, %v2494
  %v2510 = vpack.c.b16 %v2497, %v2496
  %v2511 = vpack.c.b16 %v2499, %v2498
  %v2513 = vshrl.u32 %v2500, 16
  %v2515 = vrot.slane %v2513, 3
  %v2516 = vshll.u32 %v2500, 16
  %v2518 = vrot.slane %v2516, 4
  %v2519 = vor.u32 %v2515, %v2518
  %v2521 = vshrl.u32 %v2501, 16
  %v2523 = vrot.slane %v2521, 3
  %v2524 = vshll.u32 %v2501, 16
  %v2526 = vrot.slane %v2524, 4
  %v2527 = vor.u32 %v2523, %v2526
  %v2528 = vsel %vm1246, %v2519, %v2527
  %v2530 = vshrl.u32 %v2502, 16
  %v2532 = vrot.slane %v2530, 3
  %v2533 = vshll.u32 %v2502, 16
  %v2535 = vrot.slane %v2533, 4
  %v2536 = vor.u32 %v2532, %v2535
  %v2537 = vsel %vm1246, %v2527, %v2536
  %v2539 = vshrl.u32 %v2503, 16
  %v2541 = vrot.slane %v2539, 3
  %v2542 = vshll.u32 %v2503, 16
  %v2544 = vrot.slane %v2542, 4
  %v2545 = vor.u32 %v2541, %v2544
  %v2546 = vsel %vm1246, %v2536, %v2545
  %v2548 = vshrl.u32 %v2504, 16
  %v2550 = vrot.slane %v2548, 3
  %v2551 = vshll.u32 %v2504, 16
  %v2553 = vrot.slane %v2551, 4
  %v2554 = vor.u32 %v2550, %v2553
  %v2555 = vsel %vm1246, %v2545, %v2554
  %v2557 = vshrl.u32 %v2505, 16
  %v2559 = vrot.slane %v2557, 3
  %v2560 = vshll.u32 %v2505, 16
  %v2562 = vrot.slane %v2560, 4
  %v2563 = vor.u32 %v2559, %v2562
  %v2564 = vsel %vm1246, %v2554, %v2563
  %v2566 = vshrl.u32 %v2506, 16
  %v2568 = vrot.slane %v2566, 3
  %v2569 = vshll.u32 %v2506, 16
  %v2571 = vrot.slane %v2569, 4
  %v2572 = vor.u32 %v2568, %v2571
  %v2573 = vsel %vm1246, %v2563, %v2572
  %v2575 = vshrl.u32 %v2507, 16
  %v2577 = vrot.slane %v2575, 3
  %v2578 = vshll.u32 %v2507, 16
  %v2580 = vrot.slane %v2578, 4
  %v2581 = vor.u32 %v2577, %v2580
  %v2582 = vsel %vm1246, %v2572, %v2581
  %v2584 = vshrl.u32 %v2508, 16
  %v2586 = vrot.slane %v2584, 3
  %v2587 = vshll.u32 %v2508, 16
  %v2589 = vrot.slane %v2587, 4
  %v2590 = vor.u32 %v2586, %v2589
  %v2591 = vsel %vm1246, %v2581, %v2590
  %v2593 = vshrl.u32 %v2509, 16
  %v2595 = vrot.slane %v2593, 3
  %v2596 = vshll.u32 %v2509, 16
  %v2598 = vrot.slane %v2596, 4
  %v2599 = vor.u32 %v2595, %v2598
  %v2600 = vsel %vm1246, %v2590, %v2599
  %v2602 = vshrl.u32 %v2510, 16
  %v2604 = vrot.slane %v2602, 3
  %v2605 = vshll.u32 %v2510, 16
  %v2607 = vrot.slane %v2605, 4
  %v2608 = vor.u32 %v2604, %v2607
  %v2609 = vsel %vm1246, %v2599, %v2608
  %v2611 = vshrl.u32 %v2511, 16
  %v2613 = vrot.slane %v2611, 3
  %v2614 = vshll.u32 %v2511, 16
  %v2616 = vrot.slane %v2614, 4
  %v2617 = vor.u32 %v2613, %v2616
  %v2618 = vsel %vm1246, %v2608, %v2617
  %v2632 = vmul.bf16 %v46, %v2519
  %v2633 = vmul.bf16 %v47, %v2528
  %v2634 = vmul.bf16 %v48, %v2537
  %v2635 = vmul.bf16 %v49, %v2546
  %v2636 = vmul.bf16 %v50, %v2555
  %v2637 = vmul.bf16 %v51, %v2564
  %v2638 = vmul.bf16 %v52, %v2573
  %v2639 = vmul.bf16 %v53, %v2582
  %v2640 = vmul.bf16 %v54, %v2591
  %v2641 = vmul.bf16 %v55, %v2600
  %v2642 = vmul.bf16 %v56, %v2609
  %v2643 = vmul.bf16 %v57, %v2618
  %v2644 = vmul.bf16 %v58, %v2617
  %2645 = vset.pattern.permute.xlu0 6
  %2646 = vperm.xlu0 %2645, %v63
  %v2647 = vpop.permute.xlu0 %2646
  %v2650 = vunpack.c.l.s4 839922192
  %v2651 = vunpack.c.0.s8 %v2650
  %v2652 = vlaneseq
  %v2653 = vshrl.u32 %v2652, 7
  %v2654 = vsub.s32 %v2651, %v2653
  %v2655 = vrot.slane %v2647, %v2654
  %2656 = vset.pattern.permute.xlu0 6
  %2657 = vperm.xlu0 %2656, %v64
  %v2658 = vpop.permute.xlu0 %2657
  %v2661 = vunpack.c.l.s4 839922192
  %v2662 = vunpack.c.0.s8 %v2661
  %v2663 = vlaneseq
  %v2664 = vshrl.u32 %v2663, 7
  %v2665 = vsub.s32 %v2662, %v2664
  %v2666 = vrot.slane %v2658, %v2665
  %2667 = vset.pattern.permute.xlu0 6
  %2668 = vperm.xlu0 %2667, %v65
  %v2669 = vpop.permute.xlu0 %2668
  %v2672 = vunpack.c.l.s4 839922192
  %v2673 = vunpack.c.0.s8 %v2672
  %v2674 = vlaneseq
  %v2675 = vshrl.u32 %v2674, 7
  %v2676 = vsub.s32 %v2673, %v2675
  %v2677 = vrot.slane %v2669, %v2676
  %2678 = vset.pattern.permute.xlu0 6
  %2679 = vperm.xlu0 %2678, %v66
  %v2680 = vpop.permute.xlu0 %2679
  %v2683 = vunpack.c.l.s4 839922192
  %v2684 = vunpack.c.0.s8 %v2683
  %v2685 = vlaneseq
  %v2686 = vshrl.u32 %v2685, 7
  %v2687 = vsub.s32 %v2684, %v2686
  %v2688 = vrot.slane %v2680, %v2687
  %2689 = vset.pattern.permute.xlu0 6
  %2690 = vperm.xlu0 %2689, %v67
  %v2691 = vpop.permute.xlu0 %2690
  %v2694 = vunpack.c.l.s4 839922192
  %v2695 = vunpack.c.0.s8 %v2694
  %v2696 = vlaneseq
  %v2697 = vshrl.u32 %v2696, 7
  %v2698 = vsub.s32 %v2695, %v2697
  %v2699 = vrot.slane %v2691, %v2698
  %2700 = vset.pattern.permute.xlu0 6
  %2701 = vperm.xlu0 %2700, %v68
  %v2702 = vpop.permute.xlu0 %2701
  %v2705 = vunpack.c.l.s4 839922192
  %v2706 = vunpack.c.0.s8 %v2705
  %v2707 = vlaneseq
  %v2708 = vshrl.u32 %v2707, 7
  %v2709 = vsub.s32 %v2706, %v2708
  %v2710 = vrot.slane %v2702, %v2709
  %2711 = vset.pattern.permute.xlu0 6
  %2712 = vperm.xlu0 %2711, %v69
  %v2713 = vpop.permute.xlu0 %2712
  %v2716 = vunpack.c.l.s4 839922192
  %v2717 = vunpack.c.0.s8 %v2716
  %v2718 = vlaneseq
  %v2719 = vshrl.u32 %v2718, 7
  %v2720 = vsub.s32 %v2717, %v2719
  %v2721 = vrot.slane %v2713, %v2720
  %2722 = vset.pattern.permute.xlu0 6
  %2723 = vperm.xlu0 %2722, %v70
  %v2724 = vpop.permute.xlu0 %2723
  %v2727 = vunpack.c.l.s4 839922192
  %v2728 = vunpack.c.0.s8 %v2727
  %v2729 = vlaneseq
  %v2730 = vshrl.u32 %v2729, 7
  %v2731 = vsub.s32 %v2728, %v2730
  %v2732 = vrot.slane %v2724, %v2731
  %2733 = vset.pattern.permute.xlu0 6
  %2734 = vperm.xlu0 %2733, %v71
  %v2735 = vpop.permute.xlu0 %2734
  %v2738 = vunpack.c.l.s4 839922192
  %v2739 = vunpack.c.0.s8 %v2738
  %v2740 = vlaneseq
  %v2741 = vshrl.u32 %v2740, 7
  %v2742 = vsub.s32 %v2739, %v2741
  %v2743 = vrot.slane %v2735, %v2742
  %2744 = vset.pattern.permute.xlu0 6
  %2745 = vperm.xlu0 %2744, %v72
  %v2746 = vpop.permute.xlu0 %2745
  %v2749 = vunpack.c.l.s4 839922192
  %v2750 = vunpack.c.0.s8 %v2749
  %v2751 = vlaneseq
  %v2752 = vshrl.u32 %v2751, 7
  %v2753 = vsub.s32 %v2750, %v2752
  %v2754 = vrot.slane %v2746, %v2753
  %2755 = vset.pattern.permute.xlu0 6
  %2756 = vperm.xlu0 %2755, %v73
  %v2757 = vpop.permute.xlu0 %2756
  %v2760 = vunpack.c.l.s4 839922192
  %v2761 = vunpack.c.0.s8 %v2760
  %v2762 = vlaneseq
  %v2763 = vshrl.u32 %v2762, 7
  %v2764 = vsub.s32 %v2761, %v2763
  %v2765 = vrot.slane %v2757, %v2764
  %2766 = vset.pattern.permute.xlu0 6
  %2767 = vperm.xlu0 %2766, %v74
  %v2768 = vpop.permute.xlu0 %2767
  %v2771 = vunpack.c.l.s4 839922192
  %v2772 = vunpack.c.0.s8 %v2771
  %v2773 = vlaneseq
  %v2774 = vshrl.u32 %v2773, 7
  %v2775 = vsub.s32 %v2772, %v2774
  %v2776 = vrot.slane %v2768, %v2775
  %2777 = vset.pattern.permute.xlu0 6
  %2778 = vperm.xlu0 %2777, %v75
  %v2779 = vpop.permute.xlu0 %2778
  %v2782 = vunpack.c.l.s4 839922192
  %v2783 = vunpack.c.0.s8 %v2782
  %v2784 = vlaneseq
  %v2785 = vshrl.u32 %v2784, 7
  %v2786 = vsub.s32 %v2783, %v2785
  %v2787 = vrot.slane %v2779, %v2786
  %2788 = vset.pattern.permute.xlu0 6
  %2789 = vperm.xlu0 %2788, %v76
  %v2790 = vpop.permute.xlu0 %2789
  %v2793 = vunpack.c.l.s4 839922192
  %v2794 = vunpack.c.0.s8 %v2793
  %v2795 = vlaneseq
  %v2796 = vshrl.u32 %v2795, 7
  %v2797 = vsub.s32 %v2794, %v2796
  %v2798 = vrot.slane %v2790, %v2797
  %2799 = vset.pattern.permute.xlu0 6
  %2800 = vperm.xlu0 %2799, %v77
  %v2801 = vpop.permute.xlu0 %2800
  %v2804 = vunpack.c.l.s4 839922192
  %v2805 = vunpack.c.0.s8 %v2804
  %v2806 = vlaneseq
  %v2807 = vshrl.u32 %v2806, 7
  %v2808 = vsub.s32 %v2805, %v2807
  %v2809 = vrot.slane %v2801, %v2808
  %2810 = vset.pattern.permute.xlu0 6
  %2811 = vperm.xlu0 %2810, %v78
  %v2812 = vpop.permute.xlu0 %2811
  %v2815 = vunpack.c.l.s4 839922192
  %v2816 = vunpack.c.0.s8 %v2815
  %v2817 = vlaneseq
  %v2818 = vshrl.u32 %v2817, 7
  %v2819 = vsub.s32 %v2816, %v2818
  %v2820 = vrot.slane %v2812, %v2819
  %2821 = vset.pattern.permute.xlu0 6
  %2822 = vperm.xlu0 %2821, %v79
  %v2823 = vpop.permute.xlu0 %2822
  %v2826 = vunpack.c.l.s4 839922192
  %v2827 = vunpack.c.0.s8 %v2826
  %v2828 = vlaneseq
  %v2829 = vshrl.u32 %v2828, 7
  %v2830 = vsub.s32 %v2827, %v2829
  %v2831 = vrot.slane %v2823, %v2830
  %2832 = vset.pattern.permute.xlu0 6
  %2833 = vperm.xlu0 %2832, %v80
  %v2834 = vpop.permute.xlu0 %2833
  %v2837 = vunpack.c.l.s4 839922192
  %v2838 = vunpack.c.0.s8 %v2837
  %v2839 = vlaneseq
  %v2840 = vshrl.u32 %v2839, 7
  %v2841 = vsub.s32 %v2838, %v2840
  %v2842 = vrot.slane %v2834, %v2841
  %2843 = vset.pattern.permute.xlu0 6
  %2844 = vperm.xlu0 %2843, %v81
  %v2845 = vpop.permute.xlu0 %2844
  %v2848 = vunpack.c.l.s4 839922192
  %v2849 = vunpack.c.0.s8 %v2848
  %v2850 = vlaneseq
  %v2851 = vshrl.u32 %v2850, 7
  %v2852 = vsub.s32 %v2849, %v2851
  %v2853 = vrot.slane %v2845, %v2852
  %2854 = vset.pattern.permute.xlu0 6
  %2855 = vperm.xlu0 %2854, %v82
  %v2856 = vpop.permute.xlu0 %2855
  %v2859 = vunpack.c.l.s4 839922192
  %v2860 = vunpack.c.0.s8 %v2859
  %v2861 = vlaneseq
  %v2862 = vshrl.u32 %v2861, 7
  %v2863 = vsub.s32 %v2860, %v2862
  %v2864 = vrot.slane %v2856, %v2863
  %2865 = vset.pattern.permute.xlu0 6
  %2866 = vperm.xlu0 %2865, %v83
  %v2867 = vpop.permute.xlu0 %2866
  %v2870 = vunpack.c.l.s4 839922192
  %v2871 = vunpack.c.0.s8 %v2870
  %v2872 = vlaneseq
  %v2873 = vshrl.u32 %v2872, 7
  %v2874 = vsub.s32 %v2871, %v2873
  %v2875 = vrot.slane %v2867, %v2874
  %2876 = vset.pattern.permute.xlu0 6
  %2877 = vperm.xlu0 %2876, %v84
  %v2878 = vpop.permute.xlu0 %2877
  %v2881 = vunpack.c.l.s4 839922192
  %v2882 = vunpack.c.0.s8 %v2881
  %v2883 = vlaneseq
  %v2884 = vshrl.u32 %v2883, 7
  %v2885 = vsub.s32 %v2882, %v2884
  %v2886 = vrot.slane %v2878, %v2885
  %2887 = vset.pattern.permute.xlu0 6
  %2888 = vperm.xlu0 %2887, %v85
  %v2889 = vpop.permute.xlu0 %2888
  %v2892 = vunpack.c.l.s4 839922192
  %v2893 = vunpack.c.0.s8 %v2892
  %v2894 = vlaneseq
  %v2895 = vshrl.u32 %v2894, 7
  %v2896 = vsub.s32 %v2893, %v2895
  %v2897 = vrot.slane %v2889, %v2896
  %2898 = vset.pattern.permute.xlu0 6
  %2899 = vperm.xlu0 %2898, %v86
  %v2900 = vpop.permute.xlu0 %2899
  %v2903 = vunpack.c.l.s4 839922192
  %v2904 = vunpack.c.0.s8 %v2903
  %v2905 = vlaneseq
  %v2906 = vshrl.u32 %v2905, 7
  %v2907 = vsub.s32 %v2904, %v2906
  %v2908 = vrot.slane %v2900, %v2907
  %v2933 = vunpack.c.l.b16 %v2655
  %v2934 = vunpack.c.l.b16 %v2666
  %v2935 = vunpack.c.l.b16 %v2677
  %v2936 = vunpack.c.l.b16 %v2688
  %v2937 = vunpack.c.l.b16 %v2699
  %v2938 = vunpack.c.l.b16 %v2710
  %v2939 = vunpack.c.l.b16 %v2721
  %v2940 = vunpack.c.l.b16 %v2732
  %v2941 = vunpack.c.l.b16 %v2743
  %v2942 = vunpack.c.l.b16 %v2754
  %v2943 = vunpack.c.l.b16 %v2765
  %v2944 = vunpack.c.l.b16 %v2776
  %v2945 = vunpack.c.l.b16 %v2787
  %v2946 = vunpack.c.l.b16 %v2798
  %v2947 = vunpack.c.l.b16 %v2809
  %v2948 = vunpack.c.l.b16 %v2820
  %v2949 = vunpack.c.l.b16 %v2831
  %v2950 = vunpack.c.l.b16 %v2842
  %v2951 = vunpack.c.l.b16 %v2853
  %v2952 = vunpack.c.l.b16 %v2864
  %v2953 = vunpack.c.l.b16 %v2875
  %v2954 = vunpack.c.l.b16 %v2886
  %v2955 = vunpack.c.l.b16 %v2897
  %v2956 = vunpack.c.l.b16 %v2908
  %v2957 = vpack.c.b16 %v2934, %v2933
  %v2958 = vpack.c.b16 %v2936, %v2935
  %v2959 = vpack.c.b16 %v2938, %v2937
  %v2960 = vpack.c.b16 %v2940, %v2939
  %v2961 = vpack.c.b16 %v2942, %v2941
  %v2962 = vpack.c.b16 %v2944, %v2943
  %v2963 = vpack.c.b16 %v2946, %v2945
  %v2964 = vpack.c.b16 %v2948, %v2947
  %v2965 = vpack.c.b16 %v2950, %v2949
  %v2966 = vpack.c.b16 %v2952, %v2951
  %v2967 = vpack.c.b16 %v2954, %v2953
  %v2968 = vpack.c.b16 %v2956, %v2955
  %v2970 = vshrl.u32 %v2957, 16
  %v2972 = vrot.slane %v2970, 4
  %v2973 = vshll.u32 %v2957, 16
  %v2975 = vrot.slane %v2973, 5
  %v2976 = vor.u32 %v2972, %v2975
  %v2978 = vshrl.u32 %v2958, 16
  %v2980 = vrot.slane %v2978, 4
  %v2981 = vshll.u32 %v2958, 16
  %v2983 = vrot.slane %v2981, 5
  %v2984 = vor.u32 %v2980, %v2983
  %v2985 = vsel %vm437, %v2976, %v2984
  %v2987 = vshrl.u32 %v2959, 16
  %v2989 = vrot.slane %v2987, 4
  %v2990 = vshll.u32 %v2959, 16
  %v2992 = vrot.slane %v2990, 5
  %v2993 = vor.u32 %v2989, %v2992
  %v2994 = vsel %vm437, %v2984, %v2993
  %v2996 = vshrl.u32 %v2960, 16
  %v2998 = vrot.slane %v2996, 4
  %v2999 = vshll.u32 %v2960, 16
  %v3001 = vrot.slane %v2999, 5
  %v3002 = vor.u32 %v2998, %v3001
  %v3003 = vsel %vm437, %v2993, %v3002
  %v3005 = vshrl.u32 %v2961, 16
  %v3007 = vrot.slane %v3005, 4
  %v3008 = vshll.u32 %v2961, 16
  %v3010 = vrot.slane %v3008, 5
  %v3011 = vor.u32 %v3007, %v3010
  %v3012 = vsel %vm437, %v3002, %v3011
  %v3014 = vshrl.u32 %v2962, 16
  %v3016 = vrot.slane %v3014, 4
  %v3017 = vshll.u32 %v2962, 16
  %v3019 = vrot.slane %v3017, 5
  %v3020 = vor.u32 %v3016, %v3019
  %v3021 = vsel %vm437, %v3011, %v3020
  %v3023 = vshrl.u32 %v2963, 16
  %v3025 = vrot.slane %v3023, 4
  %v3026 = vshll.u32 %v2963, 16
  %v3028 = vrot.slane %v3026, 5
  %v3029 = vor.u32 %v3025, %v3028
  %v3030 = vsel %vm437, %v3020, %v3029
  %v3032 = vshrl.u32 %v2964, 16
  %v3034 = vrot.slane %v3032, 4
  %v3035 = vshll.u32 %v2964, 16
  %v3037 = vrot.slane %v3035, 5
  %v3038 = vor.u32 %v3034, %v3037
  %v3039 = vsel %vm437, %v3029, %v3038
  %v3041 = vshrl.u32 %v2965, 16
  %v3043 = vrot.slane %v3041, 4
  %v3044 = vshll.u32 %v2965, 16
  %v3046 = vrot.slane %v3044, 5
  %v3047 = vor.u32 %v3043, %v3046
  %v3048 = vsel %vm437, %v3038, %v3047
  %v3050 = vshrl.u32 %v2966, 16
  %v3052 = vrot.slane %v3050, 4
  %v3053 = vshll.u32 %v2966, 16
  %v3055 = vrot.slane %v3053, 5
  %v3056 = vor.u32 %v3052, %v3055
  %v3057 = vsel %vm437, %v3047, %v3056
  %v3059 = vshrl.u32 %v2967, 16
  %v3061 = vrot.slane %v3059, 4
  %v3062 = vshll.u32 %v2967, 16
  %v3064 = vrot.slane %v3062, 5
  %v3065 = vor.u32 %v3061, %v3064
  %v3066 = vsel %vm437, %v3056, %v3065
  %v3068 = vshrl.u32 %v2968, 16
  %v3070 = vrot.slane %v3068, 4
  %v3071 = vshll.u32 %v2968, 16
  %v3073 = vrot.slane %v3071, 5
  %v3074 = vor.u32 %v3070, %v3073
  %v3075 = vsel %vm437, %v3065, %v3074
  %v3089 = vmul.bf16 %v47, %v2976
  %v3090 = vmul.bf16 %v48, %v2985
  %v3091 = vmul.bf16 %v49, %v2994
  %v3092 = vmul.bf16 %v50, %v3003
  %v3093 = vmul.bf16 %v51, %v3012
  %v3094 = vmul.bf16 %v52, %v3021
  %v3095 = vmul.bf16 %v53, %v3030
  %v3096 = vmul.bf16 %v54, %v3039
  %v3097 = vmul.bf16 %v55, %v3048
  %v3098 = vmul.bf16 %v56, %v3057
  %v3099 = vmul.bf16 %v57, %v3066
  %v3100 = vmul.bf16 %v58, %v3075
  %v3101 = vmul.bf16 %v59, %v3074
  %3102 = vset.pattern.permute.xlu0 7
  %3103 = vperm.xlu0 %3102, %v63
  %v3104 = vpop.permute.xlu0 %3103
  %v3107 = vunpack.c.l.s4 839922192
  %v3108 = vunpack.c.0.s8 %v3107
  %v3109 = vlaneseq
  %v3110 = vshrl.u32 %v3109, 7
  %v3111 = vsub.s32 %v3108, %v3110
  %v3112 = vrot.slane %v3104, %v3111
  %3113 = vset.pattern.permute.xlu0 7
  %3114 = vperm.xlu0 %3113, %v64
  %v3115 = vpop.permute.xlu0 %3114
  %v3118 = vunpack.c.l.s4 839922192
  %v3119 = vunpack.c.0.s8 %v3118
  %v3120 = vlaneseq
  %v3121 = vshrl.u32 %v3120, 7
  %v3122 = vsub.s32 %v3119, %v3121
  %v3123 = vrot.slane %v3115, %v3122
  %3124 = vset.pattern.permute.xlu0 7
  %3125 = vperm.xlu0 %3124, %v65
  %v3126 = vpop.permute.xlu0 %3125
  %v3129 = vunpack.c.l.s4 839922192
  %v3130 = vunpack.c.0.s8 %v3129
  %v3131 = vlaneseq
  %v3132 = vshrl.u32 %v3131, 7
  %v3133 = vsub.s32 %v3130, %v3132
  %v3134 = vrot.slane %v3126, %v3133
  %3135 = vset.pattern.permute.xlu0 7
  %3136 = vperm.xlu0 %3135, %v66
  %v3137 = vpop.permute.xlu0 %3136
  %v3140 = vunpack.c.l.s4 839922192
  %v3141 = vunpack.c.0.s8 %v3140
  %v3142 = vlaneseq
  %v3143 = vshrl.u32 %v3142, 7
  %v3144 = vsub.s32 %v3141, %v3143
  %v3145 = vrot.slane %v3137, %v3144
  %3146 = vset.pattern.permute.xlu0 7
  %3147 = vperm.xlu0 %3146, %v67
  %v3148 = vpop.permute.xlu0 %3147
  %v3151 = vunpack.c.l.s4 839922192
  %v3152 = vunpack.c.0.s8 %v3151
  %v3153 = vlaneseq
  %v3154 = vshrl.u32 %v3153, 7
  %v3155 = vsub.s32 %v3152, %v3154
  %v3156 = vrot.slane %v3148, %v3155
  %3157 = vset.pattern.permute.xlu0 7
  %3158 = vperm.xlu0 %3157, %v68
  %v3159 = vpop.permute.xlu0 %3158
  %v3162 = vunpack.c.l.s4 839922192
  %v3163 = vunpack.c.0.s8 %v3162
  %v3164 = vlaneseq
  %v3165 = vshrl.u32 %v3164, 7
  %v3166 = vsub.s32 %v3163, %v3165
  %v3167 = vrot.slane %v3159, %v3166
  %3168 = vset.pattern.permute.xlu0 7
  %3169 = vperm.xlu0 %3168, %v69
  %v3170 = vpop.permute.xlu0 %3169
  %v3173 = vunpack.c.l.s4 839922192
  %v3174 = vunpack.c.0.s8 %v3173
  %v3175 = vlaneseq
  %v3176 = vshrl.u32 %v3175, 7
  %v3177 = vsub.s32 %v3174, %v3176
  %v3178 = vrot.slane %v3170, %v3177
  %3179 = vset.pattern.permute.xlu0 7
  %3180 = vperm.xlu0 %3179, %v70
  %v3181 = vpop.permute.xlu0 %3180
  %v3184 = vunpack.c.l.s4 839922192
  %v3185 = vunpack.c.0.s8 %v3184
  %v3186 = vlaneseq
  %v3187 = vshrl.u32 %v3186, 7
  %v3188 = vsub.s32 %v3185, %v3187
  %v3189 = vrot.slane %v3181, %v3188
  %3190 = vset.pattern.permute.xlu0 7
  %3191 = vperm.xlu0 %3190, %v71
  %v3192 = vpop.permute.xlu0 %3191
  %v3195 = vunpack.c.l.s4 839922192
  %v3196 = vunpack.c.0.s8 %v3195
  %v3197 = vlaneseq
  %v3198 = vshrl.u32 %v3197, 7
  %v3199 = vsub.s32 %v3196, %v3198
  %v3200 = vrot.slane %v3192, %v3199
  %3201 = vset.pattern.permute.xlu0 7
  %3202 = vperm.xlu0 %3201, %v72
  %v3203 = vpop.permute.xlu0 %3202
  %v3206 = vunpack.c.l.s4 839922192
  %v3207 = vunpack.c.0.s8 %v3206
  %v3208 = vlaneseq
  %v3209 = vshrl.u32 %v3208, 7
  %v3210 = vsub.s32 %v3207, %v3209
  %v3211 = vrot.slane %v3203, %v3210
  %3212 = vset.pattern.permute.xlu0 7
  %3213 = vperm.xlu0 %3212, %v73
  %v3214 = vpop.permute.xlu0 %3213
  %v3217 = vunpack.c.l.s4 839922192
  %v3218 = vunpack.c.0.s8 %v3217
  %v3219 = vlaneseq
  %v3220 = vshrl.u32 %v3219, 7
  %v3221 = vsub.s32 %v3218, %v3220
  %v3222 = vrot.slane %v3214, %v3221
  %3223 = vset.pattern.permute.xlu0 7
  %3224 = vperm.xlu0 %3223, %v74
  %v3225 = vpop.permute.xlu0 %3224
  %v3228 = vunpack.c.l.s4 839922192
  %v3229 = vunpack.c.0.s8 %v3228
  %v3230 = vlaneseq
  %v3231 = vshrl.u32 %v3230, 7
  %v3232 = vsub.s32 %v3229, %v3231
  %v3233 = vrot.slane %v3225, %v3232
  %3234 = vset.pattern.permute.xlu0 7
  %3235 = vperm.xlu0 %3234, %v75
  %v3236 = vpop.permute.xlu0 %3235
  %v3239 = vunpack.c.l.s4 839922192
  %v3240 = vunpack.c.0.s8 %v3239
  %v3241 = vlaneseq
  %v3242 = vshrl.u32 %v3241, 7
  %v3243 = vsub.s32 %v3240, %v3242
  %v3244 = vrot.slane %v3236, %v3243
  %3245 = vset.pattern.permute.xlu0 7
  %3246 = vperm.xlu0 %3245, %v76
  %v3247 = vpop.permute.xlu0 %3246
  %v3250 = vunpack.c.l.s4 839922192
  %v3251 = vunpack.c.0.s8 %v3250
  %v3252 = vlaneseq
  %v3253 = vshrl.u32 %v3252, 7
  %v3254 = vsub.s32 %v3251, %v3253
  %v3255 = vrot.slane %v3247, %v3254
  %3256 = vset.pattern.permute.xlu0 7
  %3257 = vperm.xlu0 %3256, %v77
  %v3258 = vpop.permute.xlu0 %3257
  %v3261 = vunpack.c.l.s4 839922192
  %v3262 = vunpack.c.0.s8 %v3261
  %v3263 = vlaneseq
  %v3264 = vshrl.u32 %v3263, 7
  %v3265 = vsub.s32 %v3262, %v3264
  %v3266 = vrot.slane %v3258, %v3265
  %3267 = vset.pattern.permute.xlu0 7
  %3268 = vperm.xlu0 %3267, %v78
  %v3269 = vpop.permute.xlu0 %3268
  %v3272 = vunpack.c.l.s4 839922192
  %v3273 = vunpack.c.0.s8 %v3272
  %v3274 = vlaneseq
  %v3275 = vshrl.u32 %v3274, 7
  %v3276 = vsub.s32 %v3273, %v3275
  %v3277 = vrot.slane %v3269, %v3276
  %3278 = vset.pattern.permute.xlu0 7
  %3279 = vperm.xlu0 %3278, %v79
  %v3280 = vpop.permute.xlu0 %3279
  %v3283 = vunpack.c.l.s4 839922192
  %v3284 = vunpack.c.0.s8 %v3283
  %v3285 = vlaneseq
  %v3286 = vshrl.u32 %v3285, 7
  %v3287 = vsub.s32 %v3284, %v3286
  %v3288 = vrot.slane %v3280, %v3287
  %3289 = vset.pattern.permute.xlu0 7
  %3290 = vperm.xlu0 %3289, %v80
  %v3291 = vpop.permute.xlu0 %3290
  %v3294 = vunpack.c.l.s4 839922192
  %v3295 = vunpack.c.0.s8 %v3294
  %v3296 = vlaneseq
  %v3297 = vshrl.u32 %v3296, 7
  %v3298 = vsub.s32 %v3295, %v3297
  %v3299 = vrot.slane %v3291, %v3298
  %3300 = vset.pattern.permute.xlu0 7
  %3301 = vperm.xlu0 %3300, %v81
  %v3302 = vpop.permute.xlu0 %3301
  %v3305 = vunpack.c.l.s4 839922192
  %v3306 = vunpack.c.0.s8 %v3305
  %v3307 = vlaneseq
  %v3308 = vshrl.u32 %v3307, 7
  %v3309 = vsub.s32 %v3306, %v3308
  %v3310 = vrot.slane %v3302, %v3309
  %3311 = vset.pattern.permute.xlu0 7
  %3312 = vperm.xlu0 %3311, %v82
  %v3313 = vpop.permute.xlu0 %3312
  %v3316 = vunpack.c.l.s4 839922192
  %v3317 = vunpack.c.0.s8 %v3316
  %v3318 = vlaneseq
  %v3319 = vshrl.u32 %v3318, 7
  %v3320 = vsub.s32 %v3317, %v3319
  %v3321 = vrot.slane %v3313, %v3320
  %3322 = vset.pattern.permute.xlu0 7
  %3323 = vperm.xlu0 %3322, %v83
  %v3324 = vpop.permute.xlu0 %3323
  %v3327 = vunpack.c.l.s4 839922192
  %v3328 = vunpack.c.0.s8 %v3327
  %v3329 = vlaneseq
  %v3330 = vshrl.u32 %v3329, 7
  %v3331 = vsub.s32 %v3328, %v3330
  %v3332 = vrot.slane %v3324, %v3331
  %3333 = vset.pattern.permute.xlu0 7
  %3334 = vperm.xlu0 %3333, %v84
  %v3335 = vpop.permute.xlu0 %3334
  %v3338 = vunpack.c.l.s4 839922192
  %v3339 = vunpack.c.0.s8 %v3338
  %v3340 = vlaneseq
  %v3341 = vshrl.u32 %v3340, 7
  %v3342 = vsub.s32 %v3339, %v3341
  %v3343 = vrot.slane %v3335, %v3342
  %3344 = vset.pattern.permute.xlu0 7
  %3345 = vperm.xlu0 %3344, %v85
  %v3346 = vpop.permute.xlu0 %3345
  %v3349 = vunpack.c.l.s4 839922192
  %v3350 = vunpack.c.0.s8 %v3349
  %v3351 = vlaneseq
  %v3352 = vshrl.u32 %v3351, 7
  %v3353 = vsub.s32 %v3350, %v3352
  %v3354 = vrot.slane %v3346, %v3353
  %3355 = vset.pattern.permute.xlu0 7
  %3356 = vperm.xlu0 %3355, %v86
  %v3357 = vpop.permute.xlu0 %3356
  %v3360 = vunpack.c.l.s4 839922192
  %v3361 = vunpack.c.0.s8 %v3360
  %v3362 = vlaneseq
  %v3363 = vshrl.u32 %v3362, 7
  %v3364 = vsub.s32 %v3361, %v3363
  %v3365 = vrot.slane %v3357, %v3364
  %v3390 = vunpack.c.l.b16 %v3112
  %v3391 = vunpack.c.l.b16 %v3123
  %v3392 = vunpack.c.l.b16 %v3134
  %v3393 = vunpack.c.l.b16 %v3145
  %v3394 = vunpack.c.l.b16 %v3156
  %v3395 = vunpack.c.l.b16 %v3167
  %v3396 = vunpack.c.l.b16 %v3178
  %v3397 = vunpack.c.l.b16 %v3189
  %v3398 = vunpack.c.l.b16 %v3200
  %v3399 = vunpack.c.l.b16 %v3211
  %v3400 = vunpack.c.l.b16 %v3222
  %v3401 = vunpack.c.l.b16 %v3233
  %v3402 = vunpack.c.l.b16 %v3244
  %v3403 = vunpack.c.l.b16 %v3255
  %v3404 = vunpack.c.l.b16 %v3266
  %v3405 = vunpack.c.l.b16 %v3277
  %v3406 = vunpack.c.l.b16 %v3288
  %v3407 = vunpack.c.l.b16 %v3299
  %v3408 = vunpack.c.l.b16 %v3310
  %v3409 = vunpack.c.l.b16 %v3321
  %v3410 = vunpack.c.l.b16 %v3332
  %v3411 = vunpack.c.l.b16 %v3343
  %v3412 = vunpack.c.l.b16 %v3354
  %v3413 = vunpack.c.l.b16 %v3365
  %v3414 = vpack.c.b16 %v3390, %v3390
  %v3415 = vpack.c.b16 %v3392, %v3391
  %v3416 = vpack.c.b16 %v3394, %v3393
  %v3417 = vpack.c.b16 %v3396, %v3395
  %v3418 = vpack.c.b16 %v3398, %v3397
  %v3419 = vpack.c.b16 %v3400, %v3399
  %v3420 = vpack.c.b16 %v3402, %v3401
  %v3421 = vpack.c.b16 %v3404, %v3403
  %v3422 = vpack.c.b16 %v3406, %v3405
  %v3423 = vpack.c.b16 %v3408, %v3407
  %v3424 = vpack.c.b16 %v3410, %v3409
  %v3425 = vpack.c.b16 %v3412, %v3411
  %v3426 = vpack.c.b16 %v3413, %v3413
  %v3440 = vmul.bf16 %v47, %v3414
  %v3441 = vmul.bf16 %v48, %v3415
  %v3442 = vmul.bf16 %v49, %v3416
  %v3443 = vmul.bf16 %v50, %v3417
  %v3444 = vmul.bf16 %v51, %v3418
  %v3445 = vmul.bf16 %v52, %v3419
  %v3446 = vmul.bf16 %v53, %v3420
  %v3447 = vmul.bf16 %v54, %v3421
  %v3448 = vmul.bf16 %v55, %v3422
  %v3449 = vmul.bf16 %v56, %v3423
  %v3450 = vmul.bf16 %v57, %v3424
  %v3451 = vmul.bf16 %v58, %v3425
  %v3452 = vmul.bf16 %v59, %v3426
  %3453 = vset.pattern.permute.xlu0 8
  %3454 = vperm.xlu0 %3453, %v63
  %v3455 = vpop.permute.xlu0 %3454
  %v3458 = vunpack.c.l.s4 839922192
  %v3459 = vunpack.c.0.s8 %v3458
  %v3460 = vlaneseq
  %v3461 = vshrl.u32 %v3460, 7
  %v3462 = vsub.s32 %v3459, %v3461
  %v3463 = vrot.slane %v3455, %v3462
  %3464 = vset.pattern.permute.xlu0 8
  %3465 = vperm.xlu0 %3464, %v64
  %v3466 = vpop.permute.xlu0 %3465
  %v3469 = vunpack.c.l.s4 839922192
  %v3470 = vunpack.c.0.s8 %v3469
  %v3471 = vlaneseq
  %v3472 = vshrl.u32 %v3471, 7
  %v3473 = vsub.s32 %v3470, %v3472
  %v3474 = vrot.slane %v3466, %v3473
  %3475 = vset.pattern.permute.xlu0 8
  %3476 = vperm.xlu0 %3475, %v65
  %v3477 = vpop.permute.xlu0 %3476
  %v3480 = vunpack.c.l.s4 839922192
  %v3481 = vunpack.c.0.s8 %v3480
  %v3482 = vlaneseq
  %v3483 = vshrl.u32 %v3482, 7
  %v3484 = vsub.s32 %v3481, %v3483
  %v3485 = vrot.slane %v3477, %v3484
  %3486 = vset.pattern.permute.xlu0 8
  %3487 = vperm.xlu0 %3486, %v66
  %v3488 = vpop.permute.xlu0 %3487
  %v3491 = vunpack.c.l.s4 839922192
  %v3492 = vunpack.c.0.s8 %v3491
  %v3493 = vlaneseq
  %v3494 = vshrl.u32 %v3493, 7
  %v3495 = vsub.s32 %v3492, %v3494
  %v3496 = vrot.slane %v3488, %v3495
  %3497 = vset.pattern.permute.xlu0 8
  %3498 = vperm.xlu0 %3497, %v67
  %v3499 = vpop.permute.xlu0 %3498
  %v3502 = vunpack.c.l.s4 839922192
  %v3503 = vunpack.c.0.s8 %v3502
  %v3504 = vlaneseq
  %v3505 = vshrl.u32 %v3504, 7
  %v3506 = vsub.s32 %v3503, %v3505
  %v3507 = vrot.slane %v3499, %v3506
  %3508 = vset.pattern.permute.xlu0 8
  %3509 = vperm.xlu0 %3508, %v68
  %v3510 = vpop.permute.xlu0 %3509
  %v3513 = vunpack.c.l.s4 839922192
  %v3514 = vunpack.c.0.s8 %v3513
  %v3515 = vlaneseq
  %v3516 = vshrl.u32 %v3515, 7
  %v3517 = vsub.s32 %v3514, %v3516
  %v3518 = vrot.slane %v3510, %v3517
  %3519 = vset.pattern.permute.xlu0 8
  %3520 = vperm.xlu0 %3519, %v69
  %v3521 = vpop.permute.xlu0 %3520
  %v3524 = vunpack.c.l.s4 839922192
  %v3525 = vunpack.c.0.s8 %v3524
  %v3526 = vlaneseq
  %v3527 = vshrl.u32 %v3526, 7
  %v3528 = vsub.s32 %v3525, %v3527
  %v3529 = vrot.slane %v3521, %v3528
  %3530 = vset.pattern.permute.xlu0 8
  %3531 = vperm.xlu0 %3530, %v70
  %v3532 = vpop.permute.xlu0 %3531
  %v3535 = vunpack.c.l.s4 839922192
  %v3536 = vunpack.c.0.s8 %v3535
  %v3537 = vlaneseq
  %v3538 = vshrl.u32 %v3537, 7
  %v3539 = vsub.s32 %v3536, %v3538
  %v3540 = vrot.slane %v3532, %v3539
  %3541 = vset.pattern.permute.xlu0 8
  %3542 = vperm.xlu0 %3541, %v71
  %v3543 = vpop.permute.xlu0 %3542
  %v3546 = vunpack.c.l.s4 839922192
  %v3547 = vunpack.c.0.s8 %v3546
  %v3548 = vlaneseq
  %v3549 = vshrl.u32 %v3548, 7
  %v3550 = vsub.s32 %v3547, %v3549
  %v3551 = vrot.slane %v3543, %v3550
  %3552 = vset.pattern.permute.xlu0 8
  %3553 = vperm.xlu0 %3552, %v72
  %v3554 = vpop.permute.xlu0 %3553
  %v3557 = vunpack.c.l.s4 839922192
  %v3558 = vunpack.c.0.s8 %v3557
  %v3559 = vlaneseq
  %v3560 = vshrl.u32 %v3559, 7
  %v3561 = vsub.s32 %v3558, %v3560
  %v3562 = vrot.slane %v3554, %v3561
  %3563 = vset.pattern.permute.xlu0 8
  %3564 = vperm.xlu0 %3563, %v73
  %v3565 = vpop.permute.xlu0 %3564
  %v3568 = vunpack.c.l.s4 839922192
  %v3569 = vunpack.c.0.s8 %v3568
  %v3570 = vlaneseq
  %v3571 = vshrl.u32 %v3570, 7
  %v3572 = vsub.s32 %v3569, %v3571
  %v3573 = vrot.slane %v3565, %v3572
  %3574 = vset.pattern.permute.xlu0 8
  %3575 = vperm.xlu0 %3574, %v74
  %v3576 = vpop.permute.xlu0 %3575
  %v3579 = vunpack.c.l.s4 839922192
  %v3580 = vunpack.c.0.s8 %v3579
  %v3581 = vlaneseq
  %v3582 = vshrl.u32 %v3581, 7
  %v3583 = vsub.s32 %v3580, %v3582
  %v3584 = vrot.slane %v3576, %v3583
  %3585 = vset.pattern.permute.xlu0 8
  %3586 = vperm.xlu0 %3585, %v75
  %v3587 = vpop.permute.xlu0 %3586
  %v3590 = vunpack.c.l.s4 839922192
  %v3591 = vunpack.c.0.s8 %v3590
  %v3592 = vlaneseq
  %v3593 = vshrl.u32 %v3592, 7
  %v3594 = vsub.s32 %v3591, %v3593
  %v3595 = vrot.slane %v3587, %v3594
  %3596 = vset.pattern.permute.xlu0 8
  %3597 = vperm.xlu0 %3596, %v76
  %v3598 = vpop.permute.xlu0 %3597
  %v3601 = vunpack.c.l.s4 839922192
  %v3602 = vunpack.c.0.s8 %v3601
  %v3603 = vlaneseq
  %v3604 = vshrl.u32 %v3603, 7
  %v3605 = vsub.s32 %v3602, %v3604
  %v3606 = vrot.slane %v3598, %v3605
  %3607 = vset.pattern.permute.xlu0 8
  %3608 = vperm.xlu0 %3607, %v77
  %v3609 = vpop.permute.xlu0 %3608
  %v3612 = vunpack.c.l.s4 839922192
  %v3613 = vunpack.c.0.s8 %v3612
  %v3614 = vlaneseq
  %v3615 = vshrl.u32 %v3614, 7
  %v3616 = vsub.s32 %v3613, %v3615
  %v3617 = vrot.slane %v3609, %v3616
  %3618 = vset.pattern.permute.xlu0 8
  %3619 = vperm.xlu0 %3618, %v78
  %v3620 = vpop.permute.xlu0 %3619
  %v3623 = vunpack.c.l.s4 839922192
  %v3624 = vunpack.c.0.s8 %v3623
  %v3625 = vlaneseq
  %v3626 = vshrl.u32 %v3625, 7
  %v3627 = vsub.s32 %v3624, %v3626
  %v3628 = vrot.slane %v3620, %v3627
  %3629 = vset.pattern.permute.xlu0 8
  %3630 = vperm.xlu0 %3629, %v79
  %v3631 = vpop.permute.xlu0 %3630
  %v3634 = vunpack.c.l.s4 839922192
  %v3635 = vunpack.c.0.s8 %v3634
  %v3636 = vlaneseq
  %v3637 = vshrl.u32 %v3636, 7
  %v3638 = vsub.s32 %v3635, %v3637
  %v3639 = vrot.slane %v3631, %v3638
  %3640 = vset.pattern.permute.xlu0 8
  %3641 = vperm.xlu0 %3640, %v80
  %v3642 = vpop.permute.xlu0 %3641
  %v3645 = vunpack.c.l.s4 839922192
  %v3646 = vunpack.c.0.s8 %v3645
  %v3647 = vlaneseq
  %v3648 = vshrl.u32 %v3647, 7
  %v3649 = vsub.s32 %v3646, %v3648
  %v3650 = vrot.slane %v3642, %v3649
  %3651 = vset.pattern.permute.xlu0 8
  %3652 = vperm.xlu0 %3651, %v81
  %v3653 = vpop.permute.xlu0 %3652
  %v3656 = vunpack.c.l.s4 839922192
  %v3657 = vunpack.c.0.s8 %v3656
  %v3658 = vlaneseq
  %v3659 = vshrl.u32 %v3658, 7
  %v3660 = vsub.s32 %v3657, %v3659
  %v3661 = vrot.slane %v3653, %v3660
  %3662 = vset.pattern.permute.xlu0 8
  %3663 = vperm.xlu0 %3662, %v82
  %v3664 = vpop.permute.xlu0 %3663
  %v3667 = vunpack.c.l.s4 839922192
  %v3668 = vunpack.c.0.s8 %v3667
  %v3669 = vlaneseq
  %v3670 = vshrl.u32 %v3669, 7
  %v3671 = vsub.s32 %v3668, %v3670
  %v3672 = vrot.slane %v3664, %v3671
  %3673 = vset.pattern.permute.xlu0 8
  %3674 = vperm.xlu0 %3673, %v83
  %v3675 = vpop.permute.xlu0 %3674
  %v3678 = vunpack.c.l.s4 839922192
  %v3679 = vunpack.c.0.s8 %v3678
  %v3680 = vlaneseq
  %v3681 = vshrl.u32 %v3680, 7
  %v3682 = vsub.s32 %v3679, %v3681
  %v3683 = vrot.slane %v3675, %v3682
  %3684 = vset.pattern.permute.xlu0 8
  %3685 = vperm.xlu0 %3684, %v84
  %v3686 = vpop.permute.xlu0 %3685
  %v3689 = vunpack.c.l.s4 839922192
  %v3690 = vunpack.c.0.s8 %v3689
  %v3691 = vlaneseq
  %v3692 = vshrl.u32 %v3691, 7
  %v3693 = vsub.s32 %v3690, %v3692
  %v3694 = vrot.slane %v3686, %v3693
  %3695 = vset.pattern.permute.xlu0 8
  %3696 = vperm.xlu0 %3695, %v85
  %v3697 = vpop.permute.xlu0 %3696
  %v3700 = vunpack.c.l.s4 839922192
  %v3701 = vunpack.c.0.s8 %v3700
  %v3702 = vlaneseq
  %v3703 = vshrl.u32 %v3702, 7
  %v3704 = vsub.s32 %v3701, %v3703
  %v3705 = vrot.slane %v3697, %v3704
  %3706 = vset.pattern.permute.xlu0 8
  %3707 = vperm.xlu0 %3706, %v86
  %v3708 = vpop.permute.xlu0 %3707
  %v3711 = vunpack.c.l.s4 839922192
  %v3712 = vunpack.c.0.s8 %v3711
  %v3713 = vlaneseq
  %v3714 = vshrl.u32 %v3713, 7
  %v3715 = vsub.s32 %v3712, %v3714
  %v3716 = vrot.slane %v3708, %v3715
  %v3741 = vunpack.c.l.b16 %v3463
  %v3742 = vunpack.c.l.b16 %v3474
  %v3743 = vunpack.c.l.b16 %v3485
  %v3744 = vunpack.c.l.b16 %v3496
  %v3745 = vunpack.c.l.b16 %v3507
  %v3746 = vunpack.c.l.b16 %v3518
  %v3747 = vunpack.c.l.b16 %v3529
  %v3748 = vunpack.c.l.b16 %v3540
  %v3749 = vunpack.c.l.b16 %v3551
  %v3750 = vunpack.c.l.b16 %v3562
  %v3751 = vunpack.c.l.b16 %v3573
  %v3752 = vunpack.c.l.b16 %v3584
  %v3753 = vunpack.c.l.b16 %v3595
  %v3754 = vunpack.c.l.b16 %v3606
  %v3755 = vunpack.c.l.b16 %v3617
  %v3756 = vunpack.c.l.b16 %v3628
  %v3757 = vunpack.c.l.b16 %v3639
  %v3758 = vunpack.c.l.b16 %v3650
  %v3759 = vunpack.c.l.b16 %v3661
  %v3760 = vunpack.c.l.b16 %v3672
  %v3761 = vunpack.c.l.b16 %v3683
  %v3762 = vunpack.c.l.b16 %v3694
  %v3763 = vunpack.c.l.b16 %v3705
  %v3764 = vunpack.c.l.b16 %v3716
  %v3765 = vpack.c.b16 %v3742, %v3741
  %v3766 = vpack.c.b16 %v3744, %v3743
  %v3767 = vpack.c.b16 %v3746, %v3745
  %v3768 = vpack.c.b16 %v3748, %v3747
  %v3769 = vpack.c.b16 %v3750, %v3749
  %v3770 = vpack.c.b16 %v3752, %v3751
  %v3771 = vpack.c.b16 %v3754, %v3753
  %v3772 = vpack.c.b16 %v3756, %v3755
  %v3773 = vpack.c.b16 %v3758, %v3757
  %v3774 = vpack.c.b16 %v3760, %v3759
  %v3775 = vpack.c.b16 %v3762, %v3761
  %v3776 = vpack.c.b16 %v3764, %v3763
  %v3778 = vshrl.u32 %v3765, 16
  %v3780 = vrot.slane %v3778, 3
  %v3781 = vshll.u32 %v3765, 16
  %v3783 = vrot.slane %v3781, 4
  %v3784 = vor.u32 %v3780, %v3783
  %v3786 = vshrl.u32 %v3766, 16
  %v3788 = vrot.slane %v3786, 3
  %v3789 = vshll.u32 %v3766, 16
  %v3791 = vrot.slane %v3789, 4
  %v3792 = vor.u32 %v3788, %v3791
  %v3793 = vsel %vm1246, %v3784, %v3792
  %v3795 = vshrl.u32 %v3767, 16
  %v3797 = vrot.slane %v3795, 3
  %v3798 = vshll.u32 %v3767, 16
  %v3800 = vrot.slane %v3798, 4
  %v3801 = vor.u32 %v3797, %v3800
  %v3802 = vsel %vm1246, %v3792, %v3801
  %v3804 = vshrl.u32 %v3768, 16
  %v3806 = vrot.slane %v3804, 3
  %v3807 = vshll.u32 %v3768, 16
  %v3809 = vrot.slane %v3807, 4
  %v3810 = vor.u32 %v3806, %v3809
  %v3811 = vsel %vm1246, %v3801, %v3810
  %v3813 = vshrl.u32 %v3769, 16
  %v3815 = vrot.slane %v3813, 3
  %v3816 = vshll.u32 %v3769, 16
  %v3818 = vrot.slane %v3816, 4
  %v3819 = vor.u32 %v3815, %v3818
  %v3820 = vsel %vm1246, %v3810, %v3819
  %v3822 = vshrl.u32 %v3770, 16
  %v3824 = vrot.slane %v3822, 3
  %v3825 = vshll.u32 %v3770, 16
  %v3827 = vrot.slane %v3825, 4
  %v3828 = vor.u32 %v3824, %v3827
  %v3829 = vsel %vm1246, %v3819, %v3828
  %v3831 = vshrl.u32 %v3771, 16
  %v3833 = vrot.slane %v3831, 3
  %v3834 = vshll.u32 %v3771, 16
  %v3836 = vrot.slane %v3834, 4
  %v3837 = vor.u32 %v3833, %v3836
  %v3838 = vsel %vm1246, %v3828, %v3837
  %v3840 = vshrl.u32 %v3772, 16
  %v3842 = vrot.slane %v3840, 3
  %v3843 = vshll.u32 %v3772, 16
  %v3845 = vrot.slane %v3843, 4
  %v3846 = vor.u32 %v3842, %v3845
  %v3847 = vsel %vm1246, %v3837, %v3846
  %v3849 = vshrl.u32 %v3773, 16
  %v3851 = vrot.slane %v3849, 3
  %v3852 = vshll.u32 %v3773, 16
  %v3854 = vrot.slane %v3852, 4
  %v3855 = vor.u32 %v3851, %v3854
  %v3856 = vsel %vm1246, %v3846, %v3855
  %v3858 = vshrl.u32 %v3774, 16
  %v3860 = vrot.slane %v3858, 3
  %v3861 = vshll.u32 %v3774, 16
  %v3863 = vrot.slane %v3861, 4
  %v3864 = vor.u32 %v3860, %v3863
  %v3865 = vsel %vm1246, %v3855, %v3864
  %v3867 = vshrl.u32 %v3775, 16
  %v3869 = vrot.slane %v3867, 3
  %v3870 = vshll.u32 %v3775, 16
  %v3872 = vrot.slane %v3870, 4
  %v3873 = vor.u32 %v3869, %v3872
  %v3874 = vsel %vm1246, %v3864, %v3873
  %v3876 = vshrl.u32 %v3776, 16
  %v3878 = vrot.slane %v3876, 3
  %v3879 = vshll.u32 %v3776, 16
  %v3881 = vrot.slane %v3879, 4
  %v3882 = vor.u32 %v3878, %v3881
  %v3883 = vsel %vm1246, %v3873, %v3882
  %v3897 = vmul.bf16 %v47, %v3784
  %v3898 = vmul.bf16 %v48, %v3793
  %v3899 = vmul.bf16 %v49, %v3802
  %v3900 = vmul.bf16 %v50, %v3811
  %v3901 = vmul.bf16 %v51, %v3820
  %v3902 = vmul.bf16 %v52, %v3829
  %v3903 = vmul.bf16 %v53, %v3838
  %v3904 = vmul.bf16 %v54, %v3847
  %v3905 = vmul.bf16 %v55, %v3856
  %v3906 = vmul.bf16 %v56, %v3865
  %v3907 = vmul.bf16 %v57, %v3874
  %v3908 = vmul.bf16 %v58, %v3883
  %v3909 = vmul.bf16 %v59, %v3882
  %vm3910 = vsmask.f32 7424
  %v3912 = vshrl.u32 %v909, 16
  %v3914 = vshll.u32 %v909, 16
  %v3916 = vrot.slane %v3914, 1
  %v3917 = vor.u32 %v3912, %v3916
  %v3919 = vshll.u32 %v910, 16
  %v3921 = vrot.slane %v3919, 1
  %v3922 = vsel %vm3910, %v3917, %v3921
  %v3923 = vshrl.u32 %v910, 16
  %v3925 = vor.u32 %v3923, %v3921
  %v3927 = vshll.u32 %v911, 16
  %v3929 = vrot.slane %v3927, 1
  %v3930 = vsel %vm3910, %v3925, %v3929
  %v3931 = vshrl.u32 %v911, 16
  %v3933 = vor.u32 %v3931, %v3929
  %v3935 = vshll.u32 %v912, 16
  %v3937 = vrot.slane %v3935, 1
  %v3938 = vsel %vm3910, %v3933, %v3937
  %v3939 = vshrl.u32 %v912, 16
  %v3941 = vor.u32 %v3939, %v3937
  %v3943 = vshll.u32 %v913, 16
  %v3945 = vrot.slane %v3943, 1
  %v3946 = vsel %vm3910, %v3941, %v3945
  %v3947 = vshrl.u32 %v913, 16
  %v3949 = vor.u32 %v3947, %v3945
  %v3951 = vshll.u32 %v914, 16
  %v3953 = vrot.slane %v3951, 1
  %v3954 = vsel %vm3910, %v3949, %v3953
  %v3955 = vshrl.u32 %v914, 16
  %v3957 = vor.u32 %v3955, %v3953
  %v3959 = vshll.u32 %v915, 16
  %v3961 = vrot.slane %v3959, 1
  %v3962 = vsel %vm3910, %v3957, %v3961
  %v3963 = vshrl.u32 %v915, 16
  %v3965 = vor.u32 %v3963, %v3961
  %v3967 = vshll.u32 %v916, 16
  %v3969 = vrot.slane %v3967, 1
  %v3970 = vsel %vm3910, %v3965, %v3969
  %v3971 = vshrl.u32 %v916, 16
  %v3973 = vor.u32 %v3971, %v3969
  %v3975 = vshll.u32 %v917, 16
  %v3977 = vrot.slane %v3975, 1
  %v3978 = vsel %vm3910, %v3973, %v3977
  %v3979 = vshrl.u32 %v917, 16
  %v3981 = vor.u32 %v3979, %v3977
  %v3983 = vshll.u32 %v918, 16
  %v3985 = vrot.slane %v3983, 1
  %v3986 = vsel %vm3910, %v3981, %v3985
  %v3987 = vshrl.u32 %v918, 16
  %v3989 = vor.u32 %v3987, %v3985
  %v3991 = vshll.u32 %v919, 16
  %v3993 = vrot.slane %v3991, 1
  %v3994 = vsel %vm3910, %v3989, %v3993
  %v3995 = vshrl.u32 %v919, 16
  %v3997 = vor.u32 %v3995, %v3993
  %v3999 = vshll.u32 %v920, 16
  %v4001 = vrot.slane %v3999, 1
  %v4002 = vsel %vm3910, %v3997, %v4001
  %v4003 = vshrl.u32 %v920, 16
  %v4005 = vor.u32 %v4003, %v4001
  %v4007 = vshll.u32 %v921, 16
  %v4009 = vrot.slane %v4007, 1
  %v4010 = vsel %vm3910, %v4005, %v4009
  %v4011 = vshrl.u32 %v921, 16
  %v4013 = vor.u32 %v4011, %v4009
  %4014 = vrot.lane.b32.xlu0 %v3922, 2
  %v4015 = vpop.permute.xlu0 %4014
  %4016 = vrot.lane.b32.xlu0 %v3930, 2
  %v4017 = vpop.permute.xlu0 %4016
  %4018 = vrot.lane.b32.xlu0 %v3938, 2
  %v4019 = vpop.permute.xlu0 %4018
  %4020 = vrot.lane.b32.xlu0 %v3946, 2
  %v4021 = vpop.permute.xlu0 %4020
  %4022 = vrot.lane.b32.xlu0 %v3954, 2
  %v4023 = vpop.permute.xlu0 %4022
  %4024 = vrot.lane.b32.xlu0 %v3962, 2
  %v4025 = vpop.permute.xlu0 %4024
  %4026 = vrot.lane.b32.xlu0 %v3970, 2
  %v4027 = vpop.permute.xlu0 %4026
  %4028 = vrot.lane.b32.xlu0 %v3978, 2
  %v4029 = vpop.permute.xlu0 %4028
  %4030 = vrot.lane.b32.xlu0 %v3986, 2
  %v4031 = vpop.permute.xlu0 %4030
  %4032 = vrot.lane.b32.xlu0 %v3994, 2
  %v4033 = vpop.permute.xlu0 %4032
  %4034 = vrot.lane.b32.xlu0 %v4002, 2
  %v4035 = vpop.permute.xlu0 %4034
  %4036 = vrot.lane.b32.xlu0 %v4010, 2
  %v4037 = vpop.permute.xlu0 %4036
  %4038 = vrot.lane.b32.xlu0 %v4013, 2
  %v4039 = vpop.permute.xlu0 %4038
  %vm4053 = vcmask 1046528
  %v4054 = vrot.slane %v1367, 1
  %v4055 = vrot.slane %v1368, 1
  %v4056 = vsel %vm4053, %v4054, %v4055
  %v4057 = vrot.slane %v1369, 1
  %v4058 = vsel %vm4053, %v4055, %v4057
  %v4059 = vrot.slane %v1370, 1
  %v4060 = vsel %vm4053, %v4057, %v4059
  %v4061 = vrot.slane %v1371, 1
  %v4062 = vsel %vm4053, %v4059, %v4061
  %v4063 = vrot.slane %v1372, 1
  %v4064 = vsel %vm4053, %v4061, %v4063
  %v4065 = vrot.slane %v1373, 1
  %v4066 = vsel %vm4053, %v4063, %v4065
  %v4067 = vrot.slane %v1374, 1
  %v4068 = vsel %vm4053, %v4065, %v4067
  %v4069 = vrot.slane %v1375, 1
  %v4070 = vsel %vm4053, %v4067, %v4069
  %v4071 = vrot.slane %v1376, 1
  %v4072 = vsel %vm4053, %v4069, %v4071
  %v4073 = vrot.slane %v1377, 1
  %v4074 = vsel %vm4053, %v4071, %v4073
  %v4075 = vrot.slane %v1378, 1
  %v4076 = vsel %vm4053, %v4073, %v4075
  %v4077 = vrot.slane %v1379, 1
  %v4078 = vsel %vm4053, %v4075, %v4077
  %4079 = vrot.lane.b32.xlu0 %v4056, 4
  %v4080 = vpop.permute.xlu0 %4079
  %4081 = vrot.lane.b32.xlu0 %v4058, 4
  %v4082 = vpop.permute.xlu0 %4081
  %4083 = vrot.lane.b32.xlu0 %v4060, 4
  %v4084 = vpop.permute.xlu0 %4083
  %4085 = vrot.lane.b32.xlu0 %v4062, 4
  %v4086 = vpop.permute.xlu0 %4085
  %4087 = vrot.lane.b32.xlu0 %v4064, 4
  %v4088 = vpop.permute.xlu0 %4087
  %4089 = vrot.lane.b32.xlu0 %v4066, 4
  %v4090 = vpop.permute.xlu0 %4089
  %4091 = vrot.lane.b32.xlu0 %v4068, 4
  %v4092 = vpop.permute.xlu0 %4091
  %4093 = vrot.lane.b32.xlu0 %v4070, 4
  %v4094 = vpop.permute.xlu0 %4093
  %4095 = vrot.lane.b32.xlu0 %v4072, 4
  %v4096 = vpop.permute.xlu0 %4095
  %4097 = vrot.lane.b32.xlu0 %v4074, 4
  %v4098 = vpop.permute.xlu0 %4097
  %4099 = vrot.lane.b32.xlu0 %v4076, 4
  %v4100 = vpop.permute.xlu0 %4099
  %4101 = vrot.lane.b32.xlu0 %v4078, 4
  %v4102 = vpop.permute.xlu0 %4101
  %4103 = vrot.lane.b32.xlu0 %v4077, 4
  %v4104 = vpop.permute.xlu0 %4103
  %4118 = vrot.lane.b32.xlu0 %v1824, 6
  %v4119 = vpop.permute.xlu0 %4118
  %4120 = vrot.lane.b32.xlu0 %v1825, 6
  %v4121 = vpop.permute.xlu0 %4120
  %4122 = vrot.lane.b32.xlu0 %v1826, 6
  %v4123 = vpop.permute.xlu0 %4122
  %4124 = vrot.lane.b32.xlu0 %v1827, 6
  %v4125 = vpop.permute.xlu0 %4124
  %4126 = vrot.lane.b32.xlu0 %v1828, 6
  %v4127 = vpop.permute.xlu0 %4126
  %4128 = vrot.lane.b32.xlu0 %v1829, 6
  %v4129 = vpop.permute.xlu0 %4128
  %4130 = vrot.lane.b32.xlu0 %v1830, 6
  %v4131 = vpop.permute.xlu0 %4130
  %4132 = vrot.lane.b32.xlu0 %v1831, 6
  %v4133 = vpop.permute.xlu0 %4132
  %4134 = vrot.lane.b32.xlu0 %v1832, 6
  %v4135 = vpop.permute.xlu0 %4134
  %4136 = vrot.lane.b32.xlu0 %v1833, 6
  %v4137 = vpop.permute.xlu0 %4136
  %4138 = vrot.lane.b32.xlu0 %v1834, 6
  %v4139 = vpop.permute.xlu0 %4138
  %4140 = vrot.lane.b32.xlu0 %v1835, 6
  %v4141 = vpop.permute.xlu0 %4140
  %4142 = vrot.lane.b32.xlu0 %v1836, 6
  %v4143 = vpop.permute.xlu0 %4142
  %v4145 = vshrl.u32 %v2175, 16
  %v4147 = vshll.u32 %v2175, 16
  %v4149 = vrot.slane %v4147, 1
  %v4150 = vor.u32 %v4145, %v4149
  %v4152 = vshll.u32 %v2176, 16
  %v4154 = vrot.slane %v4152, 1
  %v4155 = vsel %vm3910, %v4150, %v4154
  %v4156 = vshrl.u32 %v2176, 16
  %v4158 = vor.u32 %v4156, %v4154
  %v4160 = vshll.u32 %v2177, 16
  %v4162 = vrot.slane %v4160, 1
  %v4163 = vsel %vm3910, %v4158, %v4162
  %v4164 = vshrl.u32 %v2177, 16
  %v4166 = vor.u32 %v4164, %v4162
  %v4168 = vshll.u32 %v2178, 16
  %v4170 = vrot.slane %v4168, 1
  %v4171 = vsel %vm3910, %v4166, %v4170
  %v4172 = vshrl.u32 %v2178, 16
  %v4174 = vor.u32 %v4172, %v4170
  %v4176 = vshll.u32 %v2179, 16
  %v4178 = vrot.slane %v4176, 1
  %v4179 = vsel %vm3910, %v4174, %v4178
  %v4180 = vshrl.u32 %v2179, 16
  %v4182 = vor.u32 %v4180, %v4178
  %v4184 = vshll.u32 %v2180, 16
  %v4186 = vrot.slane %v4184, 1
  %v4187 = vsel %vm3910, %v4182, %v4186
  %v4188 = vshrl.u32 %v2180, 16
  %v4190 = vor.u32 %v4188, %v4186
  %v4192 = vshll.u32 %v2181, 16
  %v4194 = vrot.slane %v4192, 1
  %v4195 = vsel %vm3910, %v4190, %v4194
  %v4196 = vshrl.u32 %v2181, 16
  %v4198 = vor.u32 %v4196, %v4194
  %v4200 = vshll.u32 %v2182, 16
  %v4202 = vrot.slane %v4200, 1
  %v4203 = vsel %vm3910, %v4198, %v4202
  %v4204 = vshrl.u32 %v2182, 16
  %v4206 = vor.u32 %v4204, %v4202
  %v4208 = vshll.u32 %v2183, 16
  %v4210 = vrot.slane %v4208, 1
  %v4211 = vsel %vm3910, %v4206, %v4210
  %v4212 = vshrl.u32 %v2183, 16
  %v4214 = vor.u32 %v4212, %v4210
  %v4216 = vshll.u32 %v2184, 16
  %v4218 = vrot.slane %v4216, 1
  %v4219 = vsel %vm3910, %v4214, %v4218
  %v4220 = vshrl.u32 %v2184, 16
  %v4222 = vor.u32 %v4220, %v4218
  %v4224 = vshll.u32 %v2185, 16
  %v4226 = vrot.slane %v4224, 1
  %v4227 = vsel %vm3910, %v4222, %v4226
  %v4228 = vshrl.u32 %v2185, 16
  %v4230 = vor.u32 %v4228, %v4226
  %v4232 = vshll.u32 %v2186, 16
  %v4234 = vrot.slane %v4232, 1
  %v4235 = vsel %vm3910, %v4230, %v4234
  %v4236 = vshrl.u32 %v2186, 16
  %v4238 = vor.u32 %v4236, %v4234
  %v4240 = vshll.u32 %v2187, 16
  %v4242 = vrot.slane %v4240, 1
  %v4243 = vsel %vm3910, %v4238, %v4242
  %v4244 = vshrl.u32 %v2187, 16
  %v4246 = vor.u32 %v4244, %v4242
  %4247 = vrot.lane.b32.xlu0 %v4155, 8
  %v4248 = vpop.permute.xlu0 %4247
  %4249 = vrot.lane.b32.xlu0 %v4163, 8
  %v4250 = vpop.permute.xlu0 %4249
  %4251 = vrot.lane.b32.xlu0 %v4171, 8
  %v4252 = vpop.permute.xlu0 %4251
  %4253 = vrot.lane.b32.xlu0 %v4179, 8
  %v4254 = vpop.permute.xlu0 %4253
  %4255 = vrot.lane.b32.xlu0 %v4187, 8
  %v4256 = vpop.permute.xlu0 %4255
  %4257 = vrot.lane.b32.xlu0 %v4195, 8
  %v4258 = vpop.permute.xlu0 %4257
  %4259 = vrot.lane.b32.xlu0 %v4203, 8
  %v4260 = vpop.permute.xlu0 %4259
  %4261 = vrot.lane.b32.xlu0 %v4211, 8
  %v4262 = vpop.permute.xlu0 %4261
  %4263 = vrot.lane.b32.xlu0 %v4219, 8
  %v4264 = vpop.permute.xlu0 %4263
  %4265 = vrot.lane.b32.xlu0 %v4227, 8
  %v4266 = vpop.permute.xlu0 %4265
  %4267 = vrot.lane.b32.xlu0 %v4235, 8
  %v4268 = vpop.permute.xlu0 %4267
  %4269 = vrot.lane.b32.xlu0 %v4243, 8
  %v4270 = vpop.permute.xlu0 %4269
  %4271 = vrot.lane.b32.xlu0 %v4246, 8
  %v4272 = vpop.permute.xlu0 %4271
  %v4286 = vrot.slane %v2632, 1
  %v4287 = vrot.slane %v2633, 1
  %v4288 = vsel %vm4053, %v4286, %v4287
  %v4289 = vrot.slane %v2634, 1
  %v4290 = vsel %vm4053, %v4287, %v4289
  %v4291 = vrot.slane %v2635, 1
  %v4292 = vsel %vm4053, %v4289, %v4291
  %v4293 = vrot.slane %v2636, 1
  %v4294 = vsel %vm4053, %v4291, %v4293
  %v4295 = vrot.slane %v2637, 1
  %v4296 = vsel %vm4053, %v4293, %v4295
  %v4297 = vrot.slane %v2638, 1
  %v4298 = vsel %vm4053, %v4295, %v4297
  %v4299 = vrot.slane %v2639, 1
  %v4300 = vsel %vm4053, %v4297, %v4299
  %v4301 = vrot.slane %v2640, 1
  %v4302 = vsel %vm4053, %v4299, %v4301
  %v4303 = vrot.slane %v2641, 1
  %v4304 = vsel %vm4053, %v4301, %v4303
  %v4305 = vrot.slane %v2642, 1
  %v4306 = vsel %vm4053, %v4303, %v4305
  %v4307 = vrot.slane %v2643, 1
  %v4308 = vsel %vm4053, %v4305, %v4307
  %v4309 = vrot.slane %v2644, 1
  %v4310 = vsel %vm4053, %v4307, %v4309
  %4311 = vrot.lane.b32.xlu0 %v4288, 10
  %v4312 = vpop.permute.xlu0 %4311
  %4313 = vrot.lane.b32.xlu0 %v4290, 10
  %v4314 = vpop.permute.xlu0 %4313
  %4315 = vrot.lane.b32.xlu0 %v4292, 10
  %v4316 = vpop.permute.xlu0 %4315
  %4317 = vrot.lane.b32.xlu0 %v4294, 10
  %v4318 = vpop.permute.xlu0 %4317
  %4319 = vrot.lane.b32.xlu0 %v4296, 10
  %v4320 = vpop.permute.xlu0 %4319
  %4321 = vrot.lane.b32.xlu0 %v4298, 10
  %v4322 = vpop.permute.xlu0 %4321
  %4323 = vrot.lane.b32.xlu0 %v4300, 10
  %v4324 = vpop.permute.xlu0 %4323
  %4325 = vrot.lane.b32.xlu0 %v4302, 10
  %v4326 = vpop.permute.xlu0 %4325
  %4327 = vrot.lane.b32.xlu0 %v4304, 10
  %v4328 = vpop.permute.xlu0 %4327
  %4329 = vrot.lane.b32.xlu0 %v4306, 10
  %v4330 = vpop.permute.xlu0 %4329
  %4331 = vrot.lane.b32.xlu0 %v4308, 10
  %v4332 = vpop.permute.xlu0 %4331
  %4333 = vrot.lane.b32.xlu0 %v4310, 10
  %v4334 = vpop.permute.xlu0 %4333
  %4335 = vrot.lane.b32.xlu0 %v4309, 10
  %v4336 = vpop.permute.xlu0 %4335
  %4350 = vrot.lane.b32.xlu0 %v3089, 12
  %v4351 = vpop.permute.xlu0 %4350
  %4352 = vrot.lane.b32.xlu0 %v3090, 12
  %v4353 = vpop.permute.xlu0 %4352
  %4354 = vrot.lane.b32.xlu0 %v3091, 12
  %v4355 = vpop.permute.xlu0 %4354
  %4356 = vrot.lane.b32.xlu0 %v3092, 12
  %v4357 = vpop.permute.xlu0 %4356
  %4358 = vrot.lane.b32.xlu0 %v3093, 12
  %v4359 = vpop.permute.xlu0 %4358
  %4360 = vrot.lane.b32.xlu0 %v3094, 12
  %v4361 = vpop.permute.xlu0 %4360
  %4362 = vrot.lane.b32.xlu0 %v3095, 12
  %v4363 = vpop.permute.xlu0 %4362
  %4364 = vrot.lane.b32.xlu0 %v3096, 12
  %v4365 = vpop.permute.xlu0 %4364
  %4366 = vrot.lane.b32.xlu0 %v3097, 12
  %v4367 = vpop.permute.xlu0 %4366
  %4368 = vrot.lane.b32.xlu0 %v3098, 12
  %v4369 = vpop.permute.xlu0 %4368
  %4370 = vrot.lane.b32.xlu0 %v3099, 12
  %v4371 = vpop.permute.xlu0 %4370
  %4372 = vrot.lane.b32.xlu0 %v3100, 12
  %v4373 = vpop.permute.xlu0 %4372
  %4374 = vrot.lane.b32.xlu0 %v3101, 12
  %v4375 = vpop.permute.xlu0 %4374
  %v4377 = vshrl.u32 %v3440, 16
  %v4379 = vshll.u32 %v3440, 16
  %v4381 = vrot.slane %v4379, 1
  %v4382 = vor.u32 %v4377, %v4381
  %v4384 = vshll.u32 %v3441, 16
  %v4386 = vrot.slane %v4384, 1
  %v4387 = vsel %vm3910, %v4382, %v4386
  %v4388 = vshrl.u32 %v3441, 16
  %v4390 = vor.u32 %v4388, %v4386
  %v4392 = vshll.u32 %v3442, 16
  %v4394 = vrot.slane %v4392, 1
  %v4395 = vsel %vm3910, %v4390, %v4394
  %v4396 = vshrl.u32 %v3442, 16
  %v4398 = vor.u32 %v4396, %v4394
  %v4400 = vshll.u32 %v3443, 16
  %v4402 = vrot.slane %v4400, 1
  %v4403 = vsel %vm3910, %v4398, %v4402
  %v4404 = vshrl.u32 %v3443, 16
  %v4406 = vor.u32 %v4404, %v4402
  %v4408 = vshll.u32 %v3444, 16
  %v4410 = vrot.slane %v4408, 1
  %v4411 = vsel %vm3910, %v4406, %v4410
  %v4412 = vshrl.u32 %v3444, 16
  %v4414 = vor.u32 %v4412, %v4410
  %v4416 = vshll.u32 %v3445, 16
  %v4418 = vrot.slane %v4416, 1
  %v4419 = vsel %vm3910, %v4414, %v4418
  %v4420 = vshrl.u32 %v3445, 16
  %v4422 = vor.u32 %v4420, %v4418
  %v4424 = vshll.u32 %v3446, 16
  %v4426 = vrot.slane %v4424, 1
  %v4427 = vsel %vm3910, %v4422, %v4426
  %v4428 = vshrl.u32 %v3446, 16
  %v4430 = vor.u32 %v4428, %v4426
  %v4432 = vshll.u32 %v3447, 16
  %v4434 = vrot.slane %v4432, 1
  %v4435 = vsel %vm3910, %v4430, %v4434
  %v4436 = vshrl.u32 %v3447, 16
  %v4438 = vor.u32 %v4436, %v4434
  %v4440 = vshll.u32 %v3448, 16
  %v4442 = vrot.slane %v4440, 1
  %v4443 = vsel %vm3910, %v4438, %v4442
  %v4444 = vshrl.u32 %v3448, 16
  %v4446 = vor.u32 %v4444, %v4442
  %v4448 = vshll.u32 %v3449, 16
  %v4450 = vrot.slane %v4448, 1
  %v4451 = vsel %vm3910, %v4446, %v4450
  %v4452 = vshrl.u32 %v3449, 16
  %v4454 = vor.u32 %v4452, %v4450
  %v4456 = vshll.u32 %v3450, 16
  %v4458 = vrot.slane %v4456, 1
  %v4459 = vsel %vm3910, %v4454, %v4458
  %v4460 = vshrl.u32 %v3450, 16
  %v4462 = vor.u32 %v4460, %v4458
  %v4464 = vshll.u32 %v3451, 16
  %v4466 = vrot.slane %v4464, 1
  %v4467 = vsel %vm3910, %v4462, %v4466
  %v4468 = vshrl.u32 %v3451, 16
  %v4470 = vor.u32 %v4468, %v4466
  %v4472 = vshll.u32 %v3452, 16
  %v4474 = vrot.slane %v4472, 1
  %v4475 = vsel %vm3910, %v4470, %v4474
  %v4476 = vshrl.u32 %v3452, 16
  %v4478 = vor.u32 %v4476, %v4474
  %4479 = vrot.lane.b32.xlu0 %v4387, 14
  %v4480 = vpop.permute.xlu0 %4479
  %4481 = vrot.lane.b32.xlu0 %v4395, 14
  %v4482 = vpop.permute.xlu0 %4481
  %4483 = vrot.lane.b32.xlu0 %v4403, 14
  %v4484 = vpop.permute.xlu0 %4483
  %4485 = vrot.lane.b32.xlu0 %v4411, 14
  %v4486 = vpop.permute.xlu0 %4485
  %4487 = vrot.lane.b32.xlu0 %v4419, 14
  %v4488 = vpop.permute.xlu0 %4487
  %4489 = vrot.lane.b32.xlu0 %v4427, 14
  %v4490 = vpop.permute.xlu0 %4489
  %4491 = vrot.lane.b32.xlu0 %v4435, 14
  %v4492 = vpop.permute.xlu0 %4491
  %4493 = vrot.lane.b32.xlu0 %v4443, 14
  %v4494 = vpop.permute.xlu0 %4493
  %4495 = vrot.lane.b32.xlu0 %v4451, 14
  %v4496 = vpop.permute.xlu0 %4495
  %4497 = vrot.lane.b32.xlu0 %v4459, 14
  %v4498 = vpop.permute.xlu0 %4497
  %4499 = vrot.lane.b32.xlu0 %v4467, 14
  %v4500 = vpop.permute.xlu0 %4499
  %4501 = vrot.lane.b32.xlu0 %v4475, 14
  %v4502 = vpop.permute.xlu0 %4501
  %4503 = vrot.lane.b32.xlu0 %v4478, 14
  %v4504 = vpop.permute.xlu0 %4503
  %v4518 = vrot.slane %v3897, 1
  %v4519 = vrot.slane %v3898, 1
  %v4520 = vsel %vm4053, %v4518, %v4519
  %v4521 = vrot.slane %v3899, 1
  %v4522 = vsel %vm4053, %v4519, %v4521
  %v4523 = vrot.slane %v3900, 1
  %v4524 = vsel %vm4053, %v4521, %v4523
  %v4525 = vrot.slane %v3901, 1
  %v4526 = vsel %vm4053, %v4523, %v4525
  %v4527 = vrot.slane %v3902, 1
  %v4528 = vsel %vm4053, %v4525, %v4527
  %v4529 = vrot.slane %v3903, 1
  %v4530 = vsel %vm4053, %v4527, %v4529
  %v4531 = vrot.slane %v3904, 1
  %v4532 = vsel %vm4053, %v4529, %v4531
  %v4533 = vrot.slane %v3905, 1
  %v4534 = vsel %vm4053, %v4531, %v4533
  %v4535 = vrot.slane %v3906, 1
  %v4536 = vsel %vm4053, %v4533, %v4535
  %v4537 = vrot.slane %v3907, 1
  %v4538 = vsel %vm4053, %v4535, %v4537
  %v4539 = vrot.slane %v3908, 1
  %v4540 = vsel %vm4053, %v4537, %v4539
  %v4541 = vrot.slane %v3909, 1
  %v4542 = vsel %vm4053, %v4539, %v4541
  %4543 = vrot.lane.b32.xlu0 %v4520, 16
  %v4544 = vpop.permute.xlu0 %4543
  %4545 = vrot.lane.b32.xlu0 %v4522, 16
  %v4546 = vpop.permute.xlu0 %4545
  %4547 = vrot.lane.b32.xlu0 %v4524, 16
  %v4548 = vpop.permute.xlu0 %4547
  %4549 = vrot.lane.b32.xlu0 %v4526, 16
  %v4550 = vpop.permute.xlu0 %4549
  %4551 = vrot.lane.b32.xlu0 %v4528, 16
  %v4552 = vpop.permute.xlu0 %4551
  %4553 = vrot.lane.b32.xlu0 %v4530, 16
  %v4554 = vpop.permute.xlu0 %4553
  %4555 = vrot.lane.b32.xlu0 %v4532, 16
  %v4556 = vpop.permute.xlu0 %4555
  %4557 = vrot.lane.b32.xlu0 %v4534, 16
  %v4558 = vpop.permute.xlu0 %4557
  %4559 = vrot.lane.b32.xlu0 %v4536, 16
  %v4560 = vpop.permute.xlu0 %4559
  %4561 = vrot.lane.b32.xlu0 %v4538, 16
  %v4562 = vpop.permute.xlu0 %4561
  %4563 = vrot.lane.b32.xlu0 %v4540, 16
  %v4564 = vpop.permute.xlu0 %4563
  %4565 = vrot.lane.b32.xlu0 %v4542, 16
  %v4566 = vpop.permute.xlu0 %4565
  %4567 = vrot.lane.b32.xlu0 %v4541, 16
  %v4568 = vpop.permute.xlu0 %4567
  %vm4569 = vcmask 15360
  %v4572 = vsel %vm4569, %v558, %v4015
  %v4575 = vsel %vm4569, %v559, %v4017
  %v4578 = vsel %vm4569, %v560, %v4019
  %v4581 = vsel %vm4569, %v561, %v4021
  %v4584 = vsel %vm4569, %v562, %v4023
  %v4587 = vsel %vm4569, %v563, %v4025
  %v4590 = vsel %vm4569, %v564, %v4027
  %v4593 = vsel %vm4569, %v565, %v4029
  %v4596 = vsel %vm4569, %v566, %v4031
  %v4599 = vsel %vm4569, %v567, %v4033
  %v4602 = vsel %vm4569, %v568, %v4035
  %v4605 = vsel %vm4569, %v569, %v4037
  %v4608 = vsel %vm4569, %v570, %v4039
  %vm4609 = vcmask 31744
  %v4611 = vsel %vm4609, %v4572, %v4080
  %v4613 = vsel %vm4609, %v4575, %v4082
  %v4615 = vsel %vm4609, %v4578, %v4084
  %v4617 = vsel %vm4609, %v4581, %v4086
  %v4619 = vsel %vm4609, %v4584, %v4088
  %v4621 = vsel %vm4609, %v4587, %v4090
  %v4623 = vsel %vm4609, %v4590, %v4092
  %v4625 = vsel %vm4609, %v4593, %v4094
  %v4627 = vsel %vm4609, %v4596, %v4096
  %v4629 = vsel %vm4609, %v4599, %v4098
  %v4631 = vsel %vm4609, %v4602, %v4100
  %v4633 = vsel %vm4609, %v4605, %v4102
  %v4635 = vsel %vm4609, %v4608, %v4104
  %vm4636 = vcmask 48128
  %v4638 = vsel %vm4636, %v4611, %v4119
  %v4640 = vsel %vm4636, %v4613, %v4121
  %v4642 = vsel %vm4636, %v4615, %v4123
  %v4644 = vsel %vm4636, %v4617, %v4125
  %v4646 = vsel %vm4636, %v4619, %v4127
  %v4648 = vsel %vm4636, %v4621, %v4129
  %v4650 = vsel %vm4636, %v4623, %v4131
  %v4652 = vsel %vm4636, %v4625, %v4133
  %v4654 = vsel %vm4636, %v4627, %v4135
  %v4656 = vsel %vm4636, %v4629, %v4137
  %v4658 = vsel %vm4636, %v4631, %v4139
  %v4660 = vsel %vm4636, %v4633, %v4141
  %v4662 = vsel %vm4636, %v4635, %v4143
  %vm4663 = vcmask 64512
  %v4665 = vsel %vm4663, %v4638, %v4248
  %v4667 = vsel %vm4663, %v4640, %v4250
  %v4669 = vsel %vm4663, %v4642, %v4252
  %v4671 = vsel %vm4663, %v4644, %v4254
  %v4673 = vsel %vm4663, %v4646, %v4256
  %v4675 = vsel %vm4663, %v4648, %v4258
  %v4677 = vsel %vm4663, %v4650, %v4260
  %v4679 = vsel %vm4663, %v4652, %v4262
  %v4681 = vsel %vm4663, %v4654, %v4264
  %v4683 = vsel %vm4663, %v4656, %v4266
  %v4685 = vsel %vm4663, %v4658, %v4268
  %v4687 = vsel %vm4663, %v4660, %v4270
  %v4689 = vsel %vm4663, %v4662, %v4272
  %vm4690 = vcmask 80896
  %v4692 = vsel %vm4690, %v4665, %v4312
  %v4694 = vsel %vm4690, %v4667, %v4314
  %v4696 = vsel %vm4690, %v4669, %v4316
  %v4698 = vsel %vm4690, %v4671, %v4318
  %v4700 = vsel %vm4690, %v4673, %v4320
  %v4702 = vsel %vm4690, %v4675, %v4322
  %v4704 = vsel %vm4690, %v4677, %v4324
  %v4706 = vsel %vm4690, %v4679, %v4326
  %v4708 = vsel %vm4690, %v4681, %v4328
  %v4710 = vsel %vm4690, %v4683, %v4330
  %v4712 = vsel %vm4690, %v4685, %v4332
  %v4714 = vsel %vm4690, %v4687, %v4334
  %v4716 = vsel %vm4690, %v4689, %v4336
  %vm4717 = vcmask 97280
  %v4719 = vsel %vm4717, %v4692, %v4351
  %v4721 = vsel %vm4717, %v4694, %v4353
  %v4723 = vsel %vm4717, %v4696, %v4355
  %v4725 = vsel %vm4717, %v4698, %v4357
  %v4727 = vsel %vm4717, %v4700, %v4359
  %v4729 = vsel %vm4717, %v4702, %v4361
  %v4731 = vsel %vm4717, %v4704, %v4363
  %v4733 = vsel %vm4717, %v4706, %v4365
  %v4735 = vsel %vm4717, %v4708, %v4367
  %v4737 = vsel %vm4717, %v4710, %v4369
  %v4739 = vsel %vm4717, %v4712, %v4371
  %v4741 = vsel %vm4717, %v4714, %v4373
  %v4743 = vsel %vm4717, %v4716, %v4375
  %vm4744 = vcmask 113664
  %v4746 = vsel %vm4744, %v4719, %v4480
  %v4748 = vsel %vm4744, %v4721, %v4482
  %v4750 = vsel %vm4744, %v4723, %v4484
  %v4752 = vsel %vm4744, %v4725, %v4486
  %v4754 = vsel %vm4744, %v4727, %v4488
  %v4756 = vsel %vm4744, %v4729, %v4490
  %v4758 = vsel %vm4744, %v4731, %v4492
  %v4760 = vsel %vm4744, %v4733, %v4494
  %v4762 = vsel %vm4744, %v4735, %v4496
  %v4764 = vsel %vm4744, %v4737, %v4498
  %v4766 = vsel %vm4744, %v4739, %v4500
  %v4768 = vsel %vm4744, %v4741, %v4502
  %v4770 = vsel %vm4744, %v4743, %v4504
  %vm4771 = vcmask 130048
  %v4773 = vsel %vm4771, %v4746, %v4544
  %v4775 = vsel %vm4771, %v4748, %v4546
  %v4777 = vsel %vm4771, %v4750, %v4548
  %v4779 = vsel %vm4771, %v4752, %v4550
  %v4781 = vsel %vm4771, %v4754, %v4552
  %v4783 = vsel %vm4771, %v4756, %v4554
  %v4785 = vsel %vm4771, %v4758, %v4556
  %v4787 = vsel %vm4771, %v4760, %v4558
  %v4789 = vsel %vm4771, %v4762, %v4560
  %v4791 = vsel %vm4771, %v4764, %v4562
  %v4793 = vsel %vm4771, %v4766, %v4564
  %v4795 = vsel %vm4771, %v4768, %v4566
  %v4797 = vsel %vm4771, %v4770, %v4568
  %v4798 = vshrl.u32 %v4773, 16
  %v4800 = vrot.slane %v4798, 3
  %v4801 = vshll.u32 %v4773, 16
  %v4803 = vrot.slane %v4801, 4
  %v4804 = vor.u32 %v4800, %v4803
  %v4805 = vshrl.u32 %v4775, 16
  %v4807 = vrot.slane %v4805, 3
  %v4808 = vshll.u32 %v4775, 16
  %v4810 = vrot.slane %v4808, 4
  %v4811 = vor.u32 %v4807, %v4810
  %v4812 = vsel %vm1246, %v4804, %v4811
  %v4813 = vshrl.u32 %v4777, 16
  %v4815 = vrot.slane %v4813, 3
  %v4816 = vshll.u32 %v4777, 16
  %v4818 = vrot.slane %v4816, 4
  %v4819 = vor.u32 %v4815, %v4818
  %v4820 = vsel %vm1246, %v4811, %v4819
  %v4821 = vshrl.u32 %v4779, 16
  %v4823 = vrot.slane %v4821, 3
  %v4824 = vshll.u32 %v4779, 16
  %v4826 = vrot.slane %v4824, 4
  %v4827 = vor.u32 %v4823, %v4826
  %v4828 = vsel %vm1246, %v4819, %v4827
  %v4829 = vshrl.u32 %v4781, 16
  %v4831 = vrot.slane %v4829, 3
  %v4832 = vshll.u32 %v4781, 16
  %v4834 = vrot.slane %v4832, 4
  %v4835 = vor.u32 %v4831, %v4834
  %v4836 = vsel %vm1246, %v4827, %v4835
  %v4837 = vshrl.u32 %v4783, 16
  %v4839 = vrot.slane %v4837, 3
  %v4840 = vshll.u32 %v4783, 16
  %v4842 = vrot.slane %v4840, 4
  %v4843 = vor.u32 %v4839, %v4842
  %v4844 = vsel %vm1246, %v4835, %v4843
  %v4845 = vshrl.u32 %v4785, 16
  %v4847 = vrot.slane %v4845, 3
  %v4848 = vshll.u32 %v4785, 16
  %v4850 = vrot.slane %v4848, 4
  %v4851 = vor.u32 %v4847, %v4850
  %v4852 = vsel %vm1246, %v4843, %v4851
  %v4853 = vshrl.u32 %v4787, 16
  %v4855 = vrot.slane %v4853, 3
  %v4856 = vshll.u32 %v4787, 16
  %v4858 = vrot.slane %v4856, 4
  %v4859 = vor.u32 %v4855, %v4858
  %v4860 = vsel %vm1246, %v4851, %v4859
  %v4861 = vshrl.u32 %v4789, 16
  %v4863 = vrot.slane %v4861, 3
  %v4864 = vshll.u32 %v4789, 16
  %v4866 = vrot.slane %v4864, 4
  %v4867 = vor.u32 %v4863, %v4866
  %v4868 = vsel %vm1246, %v4859, %v4867
  %v4869 = vshrl.u32 %v4791, 16
  %v4871 = vrot.slane %v4869, 3
  %v4872 = vshll.u32 %v4791, 16
  %v4874 = vrot.slane %v4872, 4
  %v4875 = vor.u32 %v4871, %v4874
  %v4876 = vsel %vm1246, %v4867, %v4875
  %v4877 = vshrl.u32 %v4793, 16
  %v4879 = vrot.slane %v4877, 3
  %v4880 = vshll.u32 %v4793, 16
  %v4882 = vrot.slane %v4880, 4
  %v4883 = vor.u32 %v4879, %v4882
  %v4884 = vsel %vm1246, %v4875, %v4883
  %v4885 = vshrl.u32 %v4795, 16
  %v4887 = vrot.slane %v4885, 3
  %v4888 = vshll.u32 %v4795, 16
  %v4890 = vrot.slane %v4888, 4
  %v4891 = vor.u32 %v4887, %v4890
  %v4892 = vsel %vm1246, %v4883, %v4891
  %v4893 = vshrl.u32 %v4797, 16
  %v4895 = vrot.slane %v4893, 3
  %v4896 = vshll.u32 %v4797, 16
  %v4898 = vrot.slane %v4896, 4
  %v4899 = vor.u32 %v4895, %v4898
  %v4900 = vsel %vm1246, %v4891, %v4899
  %v4904 = vunpack.c.l.b16 %v60
  %v4905 = vunpack.c.l.b16 %v61
  %v4906 = vunpack.c.l.b16 %v62
  %v4907 = vpack.c.b16 %v4905, %v4904
  %v4908 = vpack.c.b16 %v4906, %v4906
  %vm4910 = vcmask 146432
  %v4912 = vsel %vm4910, %v4812, 0
  %v4915 = vsel %vm4910, %v4820, 0
  %v4918 = vsel %vm4910, %v4828, 0
  %v4921 = vsel %vm4910, %v4836, 0
  %v4924 = vsel %vm4910, %v4844, 0
  %v4927 = vsel %vm4910, %v4852, 0
  %v4930 = vsel %vm4910, %v4860, 0
  %v4933 = vsel %vm4910, %v4868, 0
  %v4936 = vsel %vm4910, %v4876, 0
  %v4939 = vsel %vm4910, %v4884, 0
  %v4942 = vsel %vm4910, %v4892, 0
  %v4945 = vsel %vm4910, %v4900, 0
  %vm4947 = vcmask 1040384
  %v4949 = vsel %vm4947, %v4908, 0
  %4951 = vmatprep.subr.bf16.mxu0 0
  %4952 = vmatpush1.bf16.msra.mxu0 %v4907
  %4953 = vmatprep.subr.bf16.mxu0 0
  %4954 = vmatpush1.bf16.msra.mxu0 %v4949
  %4955 = vmatprep.subr.bf16.mxu0 0
  %4956 = vmatpush1.bf16.msra.mxu0 0
  %4957 = vmatprep.subr.bf16.mxu0 0
  %4958 = vmatpush1.bf16.msra.mxu0 0
  %4959 = vmatprep.subr.bf16.mxu0 0
  %4960 = vmatpush1.bf16.msra.mxu0 0
  %4961 = vmatprep.subr.bf16.mxu0 0
  %4962 = vmatpush1.bf16.msra.mxu0 0
  %4963 = vmatprep.subr.bf16.mxu0 0
  %4964 = vmatpush1.bf16.msra.mxu0 0
  %4965 = vmatprep.subr.bf16.mxu0 0
  %4966 = vmatpush1.bf16.msra.mxu0 0
  %4967 = vmatprep.subr.bf16.mxu0 0
  %4968 = vmatpush1.bf16.msra.mxu0 0
  %4969 = vmatprep.subr.bf16.mxu0 0
  %4970 = vmatpush1.bf16.msra.mxu0 0
  %4971 = vmatprep.subr.bf16.mxu0 0
  %4972 = vmatpush1.bf16.msra.mxu0 0
  %4973 = vmatprep.subr.bf16.mxu0 0
  %4974 = vmatpush1.bf16.msra.mxu0 0
  %4975 = vmatprep.subr.bf16.mxu0 0
  %4976 = vmatpush1.bf16.msra.mxu0 0
  %4977 = vmatprep.subr.bf16.mxu0 0
  %4978 = vmatpush1.bf16.msra.mxu0 0
  %4979 = vmatprep.subr.bf16.mxu0 0
  %4980 = vmatpush1.bf16.msra.mxu0 0
  %4981 = vmatprep.subr.bf16.mxu0 0
  %4982 = vmatpush1.bf16.msra.mxu0 0
  %4983 = vmatprep.mubr.bf16.mxu0 0
  %4984 = vmatmul.mubr.bf16.gmra.mrb[0].mxu0 %v4912
  %v4985 = vpop.f32.mrb[0].mxu0
  %v4986 = vadd.f32 0.0, %v4985
  %v4987 = vpop.f32.mrb[0].mxu0
  %v4988 = vpop.f32.mrb[0].mxu0
  %v4989 = vadd.f32 0.0, %v4988
  %v4990 = vpop.f32.mrb[0].mxu0
  %4991 = vmatprep.mubr.bf16.mxu0 0
  %4992 = vmatmul.mubr.bf16.gmra.mrb[0].mxu0 %v4915
  %v4993 = vpop.f32.mrb[0].mxu0
  %v4994 = vadd.f32 0.0, %v4993
  %v4995 = vpop.f32.mrb[0].mxu0
  %v4996 = vpop.f32.mrb[0].mxu0
  %v4997 = vadd.f32 0.0, %v4996
  %v4998 = vpop.f32.mrb[0].mxu0
  %4999 = vmatprep.mubr.bf16.mxu0 0
  %5000 = vmatmul.mubr.bf16.gmra.mrb[0].mxu0 %v4918
  %v5001 = vpop.f32.mrb[0].mxu0
  %v5002 = vadd.f32 0.0, %v5001
  %v5003 = vpop.f32.mrb[0].mxu0
  %v5004 = vpop.f32.mrb[0].mxu0
  %v5005 = vadd.f32 0.0, %v5004
  %v5006 = vpop.f32.mrb[0].mxu0
  %5007 = vmatprep.mubr.bf16.mxu0 0
  %5008 = vmatmul.mubr.bf16.gmra.mrb[0].mxu0 %v4921
  %v5009 = vpop.f32.mrb[0].mxu0
  %v5010 = vadd.f32 0.0, %v5009
  %v5011 = vpop.f32.mrb[0].mxu0
  %v5012 = vpop.f32.mrb[0].mxu0
  %v5013 = vadd.f32 0.0, %v5012
  %v5014 = vpop.f32.mrb[0].mxu0
  %5015 = vmatprep.mubr.bf16.mxu0 0
  %5016 = vmatmul.mubr.bf16.gmra.mrb[0].mxu0 %v4924
  %v5017 = vpop.f32.mrb[0].mxu0
  %v5018 = vadd.f32 0.0, %v5017
  %v5019 = vpop.f32.mrb[0].mxu0
  %v5020 = vpop.f32.mrb[0].mxu0
  %v5021 = vadd.f32 0.0, %v5020
  %v5022 = vpop.f32.mrb[0].mxu0
  %5023 = vmatprep.mubr.bf16.mxu0 0
  %5024 = vmatmul.mubr.bf16.gmra.mrb[0].mxu0 %v4927
  %v5025 = vpop.f32.mrb[0].mxu0
  %v5026 = vadd.f32 0.0, %v5025
  %v5027 = vpop.f32.mrb[0].mxu0
  %v5028 = vpop.f32.mrb[0].mxu0
  %v5029 = vadd.f32 0.0, %v5028
  %v5030 = vpop.f32.mrb[0].mxu0
  %5031 = vmatprep.mubr.bf16.mxu0 0
  %5032 = vmatmul.mubr.bf16.gmra.mrb[0].mxu0 %v4930
  %v5033 = vpop.f32.mrb[0].mxu0
  %v5034 = vadd.f32 0.0, %v5033
  %v5035 = vpop.f32.mrb[0].mxu0
  %v5036 = vpop.f32.mrb[0].mxu0
  %v5037 = vadd.f32 0.0, %v5036
  %v5038 = vpop.f32.mrb[0].mxu0
  %5039 = vmatprep.mubr.bf16.mxu0 0
  %5040 = vmatmul.mubr.bf16.gmra.mrb[0].mxu0 %v4933
  %v5041 = vpop.f32.mrb[0].mxu0
  %v5042 = vadd.f32 0.0, %v5041
  %v5043 = vpop.f32.mrb[0].mxu0
  %v5044 = vpop.f32.mrb[0].mxu0
  %v5045 = vadd.f32 0.0, %v5044
  %v5046 = vpop.f32.mrb[0].mxu0
  %5047 = vmatprep.mubr.bf16.mxu0 0
  %5048 = vmatmul.mubr.bf16.gmra.mrb[0].mxu0 %v4936
  %v5049 = vpop.f32.mrb[0].mxu0
  %v5050 = vadd.f32 0.0, %v5049
  %v5051 = vpop.f32.mrb[0].mxu0
  %v5052 = vpop.f32.mrb[0].mxu0
  %v5053 = vadd.f32 0.0, %v5052
  %v5054 = vpop.f32.mrb[0].mxu0
  %5055 = vmatprep.mubr.bf16.mxu0 0
  %5056 = vmatmul.mubr.bf16.gmra.mrb[0].mxu0 %v4939
  %v5057 = vpop.f32.mrb[0].mxu0
  %v5058 = vadd.f32 0.0, %v5057
  %v5059 = vpop.f32.mrb[0].mxu0
  %v5060 = vpop.f32.mrb[0].mxu0
  %v5061 = vadd.f32 0.0, %v5060
  %v5062 = vpop.f32.mrb[0].mxu0
  %5063 = vmatprep.mubr.bf16.mxu0 0
  %5064 = vmatmul.mubr.bf16.gmra.mrb[0].mxu0 %v4942
  %v5065 = vpop.f32.mrb[0].mxu0
  %v5066 = vadd.f32 0.0, %v5065
  %v5067 = vpop.f32.mrb[0].mxu0
  %v5068 = vpop.f32.mrb[0].mxu0
  %v5069 = vadd.f32 0.0, %v5068
  %v5070 = vpop.f32.mrb[0].mxu0
  %5071 = vmatprep.mubr.bf16.mxu0 0
  %5072 = vmatmul.mubr.bf16.gmra.mrb[0].mxu0 %v4945
  %v5073 = vpop.f32.mrb[0].mxu0
  %v5074 = vadd.f32 0.0, %v5073
  %v5075 = vpop.f32.mrb[0].mxu0
  %v5076 = vpop.f32.mrb[0].mxu0
  %v5077 = vadd.f32 0.0, %v5076
  %v5078 = vpop.f32.mrb[0].mxu0
  %5079 = vdwg.mxu0
  %v5080 = vlaneseq
  %v5081 = vshrl.u32 %v5080, 7
  %v5082 = vsub.s32 0, %v5081
  %v5083 = vrot.slane %v87, %v5082
  %v5084 = vmul.f32 %v4986, %v5083
  %v5085 = vmul.f32 %v4989, %v5083
  %v5086 = vmul.f32 %v4994, %v5083
  %v5087 = vmul.f32 %v4997, %v5083
  %v5088 = vmul.f32 %v5002, %v5083
  %v5089 = vmul.f32 %v5005, %v5083
  %v5090 = vmul.f32 %v5010, %v5083
  %v5091 = vmul.f32 %v5013, %v5083
  %v5092 = vmul.f32 %v5018, %v5083
  %v5093 = vmul.f32 %v5021, %v5083
  %v5094 = vmul.f32 %v5026, %v5083
  %v5095 = vmul.f32 %v5029, %v5083
  %v5096 = vmul.f32 %v5034, %v5083
  %v5097 = vmul.f32 %v5037, %v5083
  %v5098 = vmul.f32 %v5042, %v5083
  %v5099 = vmul.f32 %v5045, %v5083
  %v5100 = vmul.f32 %v5050, %v5083
  %v5101 = vmul.f32 %v5053, %v5083
  %v5102 = vmul.f32 %v5058, %v5083
  %v5103 = vmul.f32 %v5061, %v5083
  %v5104 = vmul.f32 %v5066, %v5083
  %v5105 = vmul.f32 %v5069, %v5083
  %v5106 = vmul.f32 %v5074, %v5083
  %v5107 = vmul.f32 %v5077, %v5083
  %v5108 = vlaneseq
  %v5109 = vshrl.u32 %v5108, 7
  %v5110 = vsub.s32 0, %v5109
  %v5111 = vrot.slane %v88, %v5110
  %v5112 = vadd.f32 %v5084, %v5111
  %v5113 = vadd.f32 %v5085, %v5111
  %v5114 = vadd.f32 %v5086, %v5111
  %v5115 = vadd.f32 %v5087, %v5111
  %v5116 = vadd.f32 %v5088, %v5111
  %v5117 = vadd.f32 %v5089, %v5111
  %v5118 = vadd.f32 %v5090, %v5111
  %v5119 = vadd.f32 %v5091, %v5111
  %v5120 = vadd.f32 %v5092, %v5111
  %v5121 = vadd.f32 %v5093, %v5111
  %v5122 = vadd.f32 %v5094, %v5111
  %v5123 = vadd.f32 %v5095, %v5111
  %v5124 = vadd.f32 %v5096, %v5111
  %v5125 = vadd.f32 %v5097, %v5111
  %v5126 = vadd.f32 %v5098, %v5111
  %v5127 = vadd.f32 %v5099, %v5111
  %v5128 = vadd.f32 %v5100, %v5111
  %v5129 = vadd.f32 %v5101, %v5111
  %v5130 = vadd.f32 %v5102, %v5111
  %v5131 = vadd.f32 %v5103, %v5111
  %v5132 = vadd.f32 %v5104, %v5111
  %v5133 = vadd.f32 %v5105, %v5111
  %v5134 = vadd.f32 %v5106, %v5111
  %v5135 = vadd.f32 %v5107, %v5111
  %v5136 = vmax.f32 %v5112, 0.0
  %v5137 = vmax.f32 %v5113, 0.0
  %v5138 = vmax.f32 %v5114, 0.0
  %v5139 = vmax.f32 %v5115, 0.0
  %v5140 = vmax.f32 %v5116, 0.0
  %v5141 = vmax.f32 %v5117, 0.0
  %v5142 = vmax.f32 %v5118, 0.0
  %v5143 = vmax.f32 %v5119, 0.0
  %v5144 = vmax.f32 %v5120, 0.0
  %v5145 = vmax.f32 %v5121, 0.0
  %v5146 = vmax.f32 %v5122, 0.0
  %v5147 = vmax.f32 %v5123, 0.0
  %v5148 = vmax.f32 %v5124, 0.0
  %v5149 = vmax.f32 %v5125, 0.0
  %v5150 = vmax.f32 %v5126, 0.0
  %v5151 = vmax.f32 %v5127, 0.0
  %v5152 = vmax.f32 %v5128, 0.0
  %v5153 = vmax.f32 %v5129, 0.0
  %v5154 = vmax.f32 %v5130, 0.0
  %v5155 = vmax.f32 %v5131, 0.0
  %v5156 = vmax.f32 %v5132, 0.0
  %v5157 = vmax.f32 %v5133, 0.0
  %v5158 = vmax.f32 %v5134, 0.0
  %v5159 = vmax.f32 %v5135, 0.0
  %5160 = vst.msk [vmem:[#allocation2] sm:$0xff] %vm4771, %v5136
  %5161 = vst.msk [vmem:[#allocation2 + $0x8] sm:$0xff] %vm4771, %v5137
  %5162 = vst.msk [vmem:[#allocation2 + $0x10] sm:$0xff] %vm4771, %v5138
  %5163 = vst.msk [vmem:[#allocation2 + $0x18] sm:$0xff] %vm4771, %v5139
  %5164 = vst.msk [vmem:[#allocation2 + $0x20] sm:$0xff] %vm4771, %v5140
  %5165 = vst.msk [vmem:[#allocation2 + $0x28] sm:$0xff] %vm4771, %v5141
  %5166 = vst.msk [vmem:[#allocation2 + $0x30] sm:$0xff] %vm4771, %v5142
  %5167 = vst.msk [vmem:[#allocation2 + $0x38] sm:$0xff] %vm4771, %v5143
  %5168 = vst.msk [vmem:[#allocation2 + $0x40] sm:$0xff] %vm4771, %v5144
  %5169 = vst.msk [vmem:[#allocation2 + $0x48] sm:$0xff] %vm4771, %v5145
  %5170 = vst.msk [vmem:[#allocation2 + $0x50] sm:$0xff] %vm4771, %v5146
  %5171 = vst.msk [vmem:[#allocation2 + $0x58] sm:$0xff] %vm4771, %v5147
  %5172 = vst.msk [vmem:[#allocation2 + $0x60] sm:$0xff] %vm4771, %v5148
  %5173 = vst.msk [vmem:[#allocation2 + $0x68] sm:$0xff] %vm4771, %v5149
  %5174 = vst.msk [vmem:[#allocation2 + $0x70] sm:$0xff] %vm4771, %v5150
  %5175 = vst.msk [vmem:[#allocation2 + $0x78] sm:$0xff] %vm4771, %v5151
  %5176 = vst.msk [vmem:[#allocation2 + $0x80] sm:$0xff] %vm4771, %v5152
  %5177 = vst.msk [vmem:[#allocation2 + $0x88] sm:$0xff] %vm4771, %v5153
  %5178 = vst.msk [vmem:[#allocation2 + $0x90] sm:$0xff] %vm4771, %v5154
  %5179 = vst.msk [vmem:[#allocation2 + $0x98] sm:$0xff] %vm4771, %v5155
  %5180 = vst.msk [vmem:[#allocation2 + $0xa0] sm:$0xff] %vm4771, %v5156
  %5181 = vst.msk [vmem:[#allocation2 + $0xa8] sm:$0xff] %vm4771, %v5157
  %5182 = vst.msk [vmem:[#allocation2 + $0xb0] sm:$0xff] %vm4771, %v5158
  %5183 = vst.msk [vmem:[#allocation2 + $0xb8] sm:$0xff] %vm4771, %v5159
  %v5184 = vld [vmem:[#allocation2] ss:$4 sm:$0xff]
  %s5185 = scalar_lea.vmem [#allocation2], 32
  %v5186 = vld [vmem:[%s5185] ss:$4 sm:$0xff]
  %s5187 = scalar_lea.vmem [#allocation2], 64
  %v5188 = vld [vmem:[%s5187] ss:$4 sm:$0xff]
  %s5189 = scalar_lea.vmem [#allocation2], 96
  %v5190 = vld [vmem:[%s5189] ss:$4 sm:$0xff]
  %s5191 = scalar_lea.vmem [#allocation2], 128
  %v5192 = vld [vmem:[%s5191] ss:$4 sm:$0xff]
  %s5193 = scalar_lea.vmem [#allocation2], 160
  %v5194 = vld [vmem:[%s5193] ss:$4 sm:$0xff]
  %s5195 = scalar_lea.vmem [#allocation2], 1
  %v5196 = vld [vmem:[%s5195] ss:$4 sm:$0xff]
  %s5197 = scalar_lea.vmem [#allocation2], 33
  %v5198 = vld [vmem:[%s5197] ss:$4 sm:$0xff]
  %s5199 = scalar_lea.vmem [#allocation2], 65
  %v5200 = vld [vmem:[%s5199] ss:$4 sm:$0xff]
  %s5201 = scalar_lea.vmem [#allocation2], 97
  %v5202 = vld [vmem:[%s5201] ss:$4 sm:$0xff]
  %s5203 = scalar_lea.vmem [#allocation2], 129
  %v5204 = vld [vmem:[%s5203] ss:$4 sm:$0xff]
  %s5205 = scalar_lea.vmem [#allocation2], 161
  %v5206 = vld [vmem:[%s5205] ss:$4 sm:$0xff]
  %v5207 = vmax.f32 %v5184, %v5196
  %v5208 = vmax.f32 %v5186, %v5198
  %v5209 = vmax.f32 %v5188, %v5200
  %v5210 = vmax.f32 %v5190, %v5202
  %v5211 = vmax.f32 %v5192, %v5204
  %v5212 = vmax.f32 %v5194, %v5206
  %s5213 = scalar_lea.vmem [#allocation2], 2
  %v5214 = vld [vmem:[%s5213] ss:$4 sm:$0xff]
  %s5215 = scalar_lea.vmem [#allocation2], 34
  %v5216 = vld [vmem:[%s5215] ss:$4 sm:$0xff]
  %s5217 = scalar_lea.vmem [#allocation2], 66
  %v5218 = vld [vmem:[%s5217] ss:$4 sm:$0xff]
  %s5219 = scalar_lea.vmem [#allocation2], 98
  %v5220 = vld [vmem:[%s5219] ss:$4 sm:$0xff]
  %s5221 = scalar_lea.vmem [#allocation2], 130
  %v5222 = vld [vmem:[%s5221] ss:$4 sm:$0xff]
  %s5223 = scalar_lea.vmem [#allocation2], 162
  %v5224 = vld [vmem:[%s5223] ss:$4 sm:$0xff]
  %v5225 = vmax.f32 %v5207, %v5214
  %v5226 = vmax.f32 %v5208, %v5216
  %v5227 = vmax.f32 %v5209, %v5218
  %v5228 = vmax.f32 %v5210, %v5220
  %v5229 = vmax.f32 %v5211, %v5222
  %v5230 = vmax.f32 %v5212, %v5224
  %s5231 = scalar_lea.vmem [#allocation2], 3
  %v5232 = vld [vmem:[%s5231] ss:$4 sm:$0xff]
  %s5233 = scalar_lea.vmem [#allocation2], 35
  %v5234 = vld [vmem:[%s5233] ss:$4 sm:$0xff]
  %s5235 = scalar_lea.vmem [#allocation2], 67
  %v5236 = vld [vmem:[%s5235] ss:$4 sm:$0xff]
  %s5237 = scalar_lea.vmem [#allocation2], 99
  %v5238 = vld [vmem:[%s5237] ss:$4 sm:$0xff]
  %s5239 = scalar_lea.vmem [#allocation2], 131
  %v5240 = vld [vmem:[%s5239] ss:$4 sm:$0xff]
  %s5241 = scalar_lea.vmem [#allocation2], 163
  %v5242 = vld [vmem:[%s5241] ss:$4 sm:$0xff]
  %v5243 = vmax.f32 %v5225, %v5232
  %v5244 = vmax.f32 %v5226, %v5234
  %v5245 = vmax.f32 %v5227, %v5236
  %v5246 = vmax.f32 %v5228, %v5238
  %v5247 = vmax.f32 %v5229, %v5240
  %v5248 = vmax.f32 %v5230, %v5242
  %5249 = vst.msk [vmem:[#allocation3] sm:$0xff] %vm4771, 0.0
  %5250 = vst.msk [vmem:[#allocation3 + $0x8] sm:$0xff] %vm4771, 0.0
  %5251 = vst.msk [vmem:[#allocation3 + $0x10] sm:$0xff] %vm4771, 0.0
  %5252 = vst.msk [vmem:[#allocation3 + $0x18] sm:$0xff] %vm4771, 0.0
  %5253 = vst.msk [vmem:[#allocation3 + $0x20] sm:$0xff] %vm4771, 0.0
  %5254 = vst.msk [vmem:[#allocation3 + $0x28] sm:$0xff] %vm4771, 0.0
  %5255 = vst.msk [vmem:[#allocation3 + $0x30] sm:$0xff] %vm4771, 0.0
  %5256 = vst.msk [vmem:[#allocation3 + $0x38] sm:$0xff] %vm4771, 0.0
  %5257 = vst.msk [vmem:[#allocation3 + $0x8] sm:$0xff] %vm4771, %v5243
  %5258 = vst.msk [vmem:[#allocation3 + $0x10] sm:$0xff] %vm4771, %v5244
  %5259 = vst.msk [vmem:[#allocation3 + $0x18] sm:$0xff] %vm4771, %v5245
  %5260 = vst.msk [vmem:[#allocation3 + $0x20] sm:$0xff] %vm4771, %v5246
  %5261 = vst.msk [vmem:[#allocation3 + $0x28] sm:$0xff] %vm4771, %v5247
  %5262 = vst.msk [vmem:[#allocation3 + $0x30] sm:$0xff] %vm4771, %v5248
  %v5263 = vld [vmem:[#allocation3] sm:$0xff]
  %v5264 = vld [vmem:[#allocation3 + $0x8] sm:$0xff]
  %v5265 = vld [vmem:[#allocation3 + $0x10] sm:$0xff]
  %v5266 = vld [vmem:[#allocation3 + $0x18] sm:$0xff]
  %v5267 = vld [vmem:[#allocation3 + $0x20] sm:$0xff]
  %v5268 = vld [vmem:[#allocation3 + $0x28] sm:$0xff]
  %v5269 = vld [vmem:[#allocation3 + $0x30] sm:$0xff]
  %v5270 = vld [vmem:[#allocation3 + $0x38] sm:$0xff]
  %v5271 = vpack.c.bf16 %v5264, %v5263
  %v5272 = vpack.c.bf16 %v5266, %v5265
  %v5273 = vpack.c.bf16 %v5268, %v5267
  %v5274 = vpack.c.bf16 %v5270, %v5269
  %v5275 = vld [vmem:[%s1 + $0xc] sm:$0xf]
  %v5276 = vld [vmem:[%s1 + $0x10] sm:$0xf]
  %v5277 = vld [vmem:[%s1 + $0x14] sm:$0xf]
  %v5278 = vld [vmem:[%s1 + $0x18] sm:$0xf]
  %v5279 = vld [vmem:[%s1 + $0x1c] sm:$0xf]
  %v5280 = vld [vmem:[%s1 + $0x20] sm:$0xf]
  %v5281 = vld [vmem:[%s1 + $0x24] sm:$0xf]
  %v5282 = vld [vmem:[%s1 + $0x28] sm:$0xf]
  %v5283 = vld [vmem:[%s1 + $0x2c] sm:$0xf]
  %v5284 = vld [vmem:[%s1 + $0x30] sm:$0xf]
  %v5285 = vld [vmem:[%s1 + $0x34] sm:$0xf]
  %v5286 = vld [vmem:[%s1 + $0x38] sm:$0xf]
  %v5287 = vld [vmem:[%s1 + $0x3c] sm:$0xf]
  %v5288 = vld [vmem:[%s1 + $0x40] sm:$0xf]
  %v5289 = vld [vmem:[%s1 + $0x44] sm:$0xf]
  %v5290 = vld [vmem:[%s1 + $0x48] sm:$0xf]
  %v5291 = vld [vmem:[%s1 + $0x4c] sm:$0xf]
  %v5292 = vld [vmem:[%s1 + $0x50] sm:$0xf]
  %v5293 = vld [vmem:[%s1 + $0x1bc] sm:$0xf]
  %v5294 = vld [vmem:[%s1 + $0x1c0] sm:$0xf]
  %v5295 = vld [vmem:[%s1 + $0x1c4] sm:$0xf]
  %v5296 = vld [vmem:[%s1 + $0x1c8] sm:$0xf]
  %v5297 = vld [vmem:[%s1 + $0x1cc] sm:$0xf]
  %v5298 = vld [vmem:[%s1 + $0x1d0] sm:$0xf]
  %v5299 = vld [vmem:[%s2 + $0x2] sm:$0x1]
  %v5300 = vld [vmem:[%s2 + $0x3] sm:$0x1]
  %5302 = vset.pattern.permute.xlu0 0
  %5303 = vperm.xlu0 %5302, %v5293
  %v5304 = vpop.permute.xlu0 %5303
  %v5307 = vunpack.c.l.s4 839922192
  %v5308 = vunpack.c.0.s8 %v5307
  %v5309 = vlaneseq
  %v5310 = vshrl.u32 %v5309, 7
  %v5311 = vsub.s32 %v5308, %v5310
  %v5312 = vrot.slane %v5304, %v5311
  %5314 = vset.pattern.permute.xlu0 0
  %5315 = vperm.xlu0 %5314, %v5294
  %v5316 = vpop.permute.xlu0 %5315
  %v5319 = vunpack.c.l.s4 839922192
  %v5320 = vunpack.c.0.s8 %v5319
  %v5321 = vlaneseq
  %v5322 = vshrl.u32 %v5321, 7
  %v5323 = vsub.s32 %v5320, %v5322
  %v5324 = vrot.slane %v5316, %v5323
  %5326 = vset.pattern.permute.xlu0 0
  %5327 = vperm.xlu0 %5326, %v5295
  %v5328 = vpop.permute.xlu0 %5327
  %v5331 = vunpack.c.l.s4 839922192
  %v5332 = vunpack.c.0.s8 %v5331
  %v5333 = vlaneseq
  %v5334 = vshrl.u32 %v5333, 7
  %v5335 = vsub.s32 %v5332, %v5334
  %v5336 = vrot.slane %v5328, %v5335
  %5338 = vset.pattern.permute.xlu0 0
  %5339 = vperm.xlu0 %5338, %v5296
  %v5340 = vpop.permute.xlu0 %5339
  %v5343 = vunpack.c.l.s4 839922192
  %v5344 = vunpack.c.0.s8 %v5343
  %v5345 = vlaneseq
  %v5346 = vshrl.u32 %v5345, 7
  %v5347 = vsub.s32 %v5344, %v5346
  %v5348 = vrot.slane %v5340, %v5347
  %5350 = vset.pattern.permute.xlu0 0
  %5351 = vperm.xlu0 %5350, %v5297
  %v5352 = vpop.permute.xlu0 %5351
  %v5355 = vunpack.c.l.s4 839922192
  %v5356 = vunpack.c.0.s8 %v5355
  %v5357 = vlaneseq
  %v5358 = vshrl.u32 %v5357, 7
  %v5359 = vsub.s32 %v5356, %v5358
  %v5360 = vrot.slane %v5352, %v5359
  %5362 = vset.pattern.permute.xlu0 0
  %5363 = vperm.xlu0 %5362, %v5298
  %v5364 = vpop.permute.xlu0 %5363
  %v5367 = vunpack.c.l.s4 839922192
  %v5368 = vunpack.c.0.s8 %v5367
  %v5369 = vlaneseq
  %v5370 = vshrl.u32 %v5369, 7
  %v5371 = vsub.s32 %v5368, %v5370
  %v5372 = vrot.slane %v5364, %v5371
  %v5379 = vunpack.c.l.b16 %v5312
  %v5380 = vunpack.c.l.b16 %v5324
  %v5381 = vunpack.c.l.b16 %v5336
  %v5382 = vunpack.c.l.b16 %v5348
  %v5383 = vunpack.c.l.b16 %v5360
  %v5384 = vunpack.c.l.b16 %v5372
  %v5385 = vpack.c.b16 %v5380, %v5379
  %v5386 = vpack.c.b16 %v5382, %v5381
  %v5387 = vpack.c.b16 %v5384, %v5383
  %vm5388 = vsmask.f32 1280
  %v5390 = vshrl.u32 %v5385, 16
  %v5392 = vrot.slane %v5390, 6
  %v5393 = vshll.u32 %v5385, 16
  %v5395 = vrot.slane %v5393, 7
  %v5396 = vor.u32 %v5392, %v5395
  %v5398 = vshrl.u32 %v5386, 16
  %v5400 = vrot.slane %v5398, 6
  %v5401 = vshll.u32 %v5386, 16
  %v5403 = vrot.slane %v5401, 7
  %v5404 = vor.u32 %v5400, %v5403
  %v5405 = vsel %vm5388, %v5396, %v5404
  %v5407 = vshrl.u32 %v5387, 16
  %v5409 = vrot.slane %v5407, 6
  %v5410 = vshll.u32 %v5387, 16
  %v5412 = vrot.slane %v5410, 7
  %v5413 = vor.u32 %v5409, %v5412
  %v5414 = vsel %vm5388, %v5404, %v5413
  %v5419 = vmul.bf16 %v5271, %v5396
  %v5420 = vmul.bf16 %v5272, %v5405
  %v5421 = vmul.bf16 %v5273, %v5414
  %v5422 = vmul.bf16 %v5274, %v5413
  %5423 = vset.pattern.permute.xlu0 1
  %5424 = vperm.xlu0 %5423, %v5293
  %v5425 = vpop.permute.xlu0 %5424
  %v5428 = vunpack.c.l.s4 839922192
  %v5429 = vunpack.c.0.s8 %v5428
  %v5430 = vlaneseq
  %v5431 = vshrl.u32 %v5430, 7
  %v5432 = vsub.s32 %v5429, %v5431
  %v5433 = vrot.slane %v5425, %v5432
  %5434 = vset.pattern.permute.xlu0 1
  %5435 = vperm.xlu0 %5434, %v5294
  %v5436 = vpop.permute.xlu0 %5435
  %v5439 = vunpack.c.l.s4 839922192
  %v5440 = vunpack.c.0.s8 %v5439
  %v5441 = vlaneseq
  %v5442 = vshrl.u32 %v5441, 7
  %v5443 = vsub.s32 %v5440, %v5442
  %v5444 = vrot.slane %v5436, %v5443
  %5445 = vset.pattern.permute.xlu0 1
  %5446 = vperm.xlu0 %5445, %v5295
  %v5447 = vpop.permute.xlu0 %5446
  %v5450 = vunpack.c.l.s4 839922192
  %v5451 = vunpack.c.0.s8 %v5450
  %v5452 = vlaneseq
  %v5453 = vshrl.u32 %v5452, 7
  %v5454 = vsub.s32 %v5451, %v5453
  %v5455 = vrot.slane %v5447, %v5454
  %5456 = vset.pattern.permute.xlu0 1
  %5457 = vperm.xlu0 %5456, %v5296
  %v5458 = vpop.permute.xlu0 %5457
  %v5461 = vunpack.c.l.s4 839922192
  %v5462 = vunpack.c.0.s8 %v5461
  %v5463 = vlaneseq
  %v5464 = vshrl.u32 %v5463, 7
  %v5465 = vsub.s32 %v5462, %v5464
  %v5466 = vrot.slane %v5458, %v5465
  %5467 = vset.pattern.permute.xlu0 1
  %5468 = vperm.xlu0 %5467, %v5297
  %v5469 = vpop.permute.xlu0 %5468
  %v5472 = vunpack.c.l.s4 839922192
  %v5473 = vunpack.c.0.s8 %v5472
  %v5474 = vlaneseq
  %v5475 = vshrl.u32 %v5474, 7
  %v5476 = vsub.s32 %v5473, %v5475
  %v5477 = vrot.slane %v5469, %v5476
  %5478 = vset.pattern.permute.xlu0 1
  %5479 = vperm.xlu0 %5478, %v5298
  %v5480 = vpop.permute.xlu0 %5479
  %v5483 = vunpack.c.l.s4 839922192
  %v5484 = vunpack.c.0.s8 %v5483
  %v5485 = vlaneseq
  %v5486 = vshrl.u32 %v5485, 7
  %v5487 = vsub.s32 %v5484, %v5486
  %v5488 = vrot.slane %v5480, %v5487
  %v5495 = vunpack.c.l.b16 %v5433
  %v5496 = vunpack.c.l.b16 %v5444
  %v5497 = vunpack.c.l.b16 %v5455
  %v5498 = vunpack.c.l.b16 %v5466
  %v5499 = vunpack.c.l.b16 %v5477
  %v5500 = vunpack.c.l.b16 %v5488
  %v5501 = vpack.c.b16 %v5496, %v5495
  %v5502 = vpack.c.b16 %v5498, %v5497
  %v5503 = vpack.c.b16 %v5500, %v5499
  %vm5504 = vcmask 1041408
  %v5505 = vrot.slane %v5501, 6
  %v5506 = vrot.slane %v5502, 6
  %v5507 = vsel %vm5504, %v5505, %v5506
  %v5508 = vrot.slane %v5503, 6
  %v5509 = vsel %vm5504, %v5506, %v5508
  %v5514 = vmul.bf16 %v5271, %v5505
  %v5515 = vmul.bf16 %v5272, %v5507
  %v5516 = vmul.bf16 %v5273, %v5509
  %v5517 = vmul.bf16 %v5274, %v5508
  %5518 = vset.pattern.permute.xlu0 2
  %5519 = vperm.xlu0 %5518, %v5293
  %v5520 = vpop.permute.xlu0 %5519
  %v5523 = vunpack.c.l.s4 839922192
  %v5524 = vunpack.c.0.s8 %v5523
  %v5525 = vlaneseq
  %v5526 = vshrl.u32 %v5525, 7
  %v5527 = vsub.s32 %v5524, %v5526
  %v5528 = vrot.slane %v5520, %v5527
  %5529 = vset.pattern.permute.xlu0 2
  %5530 = vperm.xlu0 %5529, %v5294
  %v5531 = vpop.permute.xlu0 %5530
  %v5534 = vunpack.c.l.s4 839922192
  %v5535 = vunpack.c.0.s8 %v5534
  %v5536 = vlaneseq
  %v5537 = vshrl.u32 %v5536, 7
  %v5538 = vsub.s32 %v5535, %v5537
  %v5539 = vrot.slane %v5531, %v5538
  %5540 = vset.pattern.permute.xlu0 2
  %5541 = vperm.xlu0 %5540, %v5295
  %v5542 = vpop.permute.xlu0 %5541
  %v5545 = vunpack.c.l.s4 839922192
  %v5546 = vunpack.c.0.s8 %v5545
  %v5547 = vlaneseq
  %v5548 = vshrl.u32 %v5547, 7
  %v5549 = vsub.s32 %v5546, %v5548
  %v5550 = vrot.slane %v5542, %v5549
  %5551 = vset.pattern.permute.xlu0 2
  %5552 = vperm.xlu0 %5551, %v5296
  %v5553 = vpop.permute.xlu0 %5552
  %v5556 = vunpack.c.l.s4 839922192
  %v5557 = vunpack.c.0.s8 %v5556
  %v5558 = vlaneseq
  %v5559 = vshrl.u32 %v5558, 7
  %v5560 = vsub.s32 %v5557, %v5559
  %v5561 = vrot.slane %v5553, %v5560
  %5562 = vset.pattern.permute.xlu0 2
  %5563 = vperm.xlu0 %5562, %v5297
  %v5564 = vpop.permute.xlu0 %5563
  %v5567 = vunpack.c.l.s4 839922192
  %v5568 = vunpack.c.0.s8 %v5567
  %v5569 = vlaneseq
  %v5570 = vshrl.u32 %v5569, 7
  %v5571 = vsub.s32 %v5568, %v5570
  %v5572 = vrot.slane %v5564, %v5571
  %5573 = vset.pattern.permute.xlu0 2
  %5574 = vperm.xlu0 %5573, %v5298
  %v5575 = vpop.permute.xlu0 %5574
  %v5578 = vunpack.c.l.s4 839922192
  %v5579 = vunpack.c.0.s8 %v5578
  %v5580 = vlaneseq
  %v5581 = vshrl.u32 %v5580, 7
  %v5582 = vsub.s32 %v5579, %v5581
  %v5583 = vrot.slane %v5575, %v5582
  %v5590 = vunpack.c.l.b16 %v5528
  %v5591 = vunpack.c.l.b16 %v5539
  %v5592 = vunpack.c.l.b16 %v5550
  %v5593 = vunpack.c.l.b16 %v5561
  %v5594 = vunpack.c.l.b16 %v5572
  %v5595 = vunpack.c.l.b16 %v5583
  %v5596 = vpack.c.b16 %v5591, %v5590
  %v5597 = vpack.c.b16 %v5593, %v5592
  %v5598 = vpack.c.b16 %v5595, %v5594
  %vm5599 = vsmask.f32 2304
  %v5601 = vshrl.u32 %v5596, 16
  %v5603 = vrot.slane %v5601, 5
  %v5604 = vshll.u32 %v5596, 16
  %v5606 = vrot.slane %v5604, 6
  %v5607 = vor.u32 %v5603, %v5606
  %v5609 = vshrl.u32 %v5597, 16
  %v5611 = vrot.slane %v5609, 5
  %v5612 = vshll.u32 %v5597, 16
  %v5614 = vrot.slane %v5612, 6
  %v5615 = vor.u32 %v5611, %v5614
  %v5616 = vsel %vm5599, %v5607, %v5615
  %v5618 = vshrl.u32 %v5598, 16
  %v5620 = vrot.slane %v5618, 5
  %v5621 = vshll.u32 %v5598, 16
  %v5623 = vrot.slane %v5621, 6
  %v5624 = vor.u32 %v5620, %v5623
  %v5625 = vsel %vm5599, %v5615, %v5624
  %v5630 = vmul.bf16 %v5271, %v5607
  %v5631 = vmul.bf16 %v5272, %v5616
  %v5632 = vmul.bf16 %v5273, %v5625
  %v5633 = vmul.bf16 %v5274, %v5624
  %5634 = vset.pattern.permute.xlu0 3
  %5635 = vperm.xlu0 %5634, %v5293
  %v5636 = vpop.permute.xlu0 %5635
  %v5639 = vunpack.c.l.s4 839922192
  %v5640 = vunpack.c.0.s8 %v5639
  %v5641 = vlaneseq
  %v5642 = vshrl.u32 %v5641, 7
  %v5643 = vsub.s32 %v5640, %v5642
  %v5644 = vrot.slane %v5636, %v5643
  %5645 = vset.pattern.permute.xlu0 3
  %5646 = vperm.xlu0 %5645, %v5294
  %v5647 = vpop.permute.xlu0 %5646
  %v5650 = vunpack.c.l.s4 839922192
  %v5651 = vunpack.c.0.s8 %v5650
  %v5652 = vlaneseq
  %v5653 = vshrl.u32 %v5652, 7
  %v5654 = vsub.s32 %v5651, %v5653
  %v5655 = vrot.slane %v5647, %v5654
  %5656 = vset.pattern.permute.xlu0 3
  %5657 = vperm.xlu0 %5656, %v5295
  %v5658 = vpop.permute.xlu0 %5657
  %v5661 = vunpack.c.l.s4 839922192
  %v5662 = vunpack.c.0.s8 %v5661
  %v5663 = vlaneseq
  %v5664 = vshrl.u32 %v5663, 7
  %v5665 = vsub.s32 %v5662, %v5664
  %v5666 = vrot.slane %v5658, %v5665
  %5667 = vset.pattern.permute.xlu0 3
  %5668 = vperm.xlu0 %5667, %v5296
  %v5669 = vpop.permute.xlu0 %5668
  %v5672 = vunpack.c.l.s4 839922192
  %v5673 = vunpack.c.0.s8 %v5672
  %v5674 = vlaneseq
  %v5675 = vshrl.u32 %v5674, 7
  %v5676 = vsub.s32 %v5673, %v5675
  %v5677 = vrot.slane %v5669, %v5676
  %5678 = vset.pattern.permute.xlu0 3
  %5679 = vperm.xlu0 %5678, %v5297
  %v5680 = vpop.permute.xlu0 %5679
  %v5683 = vunpack.c.l.s4 839922192
  %v5684 = vunpack.c.0.s8 %v5683
  %v5685 = vlaneseq
  %v5686 = vshrl.u32 %v5685, 7
  %v5687 = vsub.s32 %v5684, %v5686
  %v5688 = vrot.slane %v5680, %v5687
  %5689 = vset.pattern.permute.xlu0 3
  %5690 = vperm.xlu0 %5689, %v5298
  %v5691 = vpop.permute.xlu0 %5690
  %v5694 = vunpack.c.l.s4 839922192
  %v5695 = vunpack.c.0.s8 %v5694
  %v5696 = vlaneseq
  %v5697 = vshrl.u32 %v5696, 7
  %v5698 = vsub.s32 %v5695, %v5697
  %v5699 = vrot.slane %v5691, %v5698
  %v5706 = vunpack.c.l.b16 %v5644
  %v5707 = vunpack.c.l.b16 %v5655
  %v5708 = vunpack.c.l.b16 %v5666
  %v5709 = vunpack.c.l.b16 %v5677
  %v5710 = vunpack.c.l.b16 %v5688
  %v5711 = vunpack.c.l.b16 %v5699
  %v5712 = vpack.c.b16 %v5707, %v5706
  %v5713 = vpack.c.b16 %v5709, %v5708
  %v5714 = vpack.c.b16 %v5711, %v5710
  %v5716 = vshrl.u32 %v5712, 16
  %v5718 = vrot.slane %v5716, 4
  %v5719 = vshll.u32 %v5712, 16
  %v5721 = vrot.slane %v5719, 5
  %v5722 = vor.u32 %v5718, %v5721
  %v5724 = vshrl.u32 %v5713, 16
  %v5726 = vrot.slane %v5724, 4
  %v5727 = vshll.u32 %v5713, 16
  %v5729 = vrot.slane %v5727, 5
  %v5730 = vor.u32 %v5726, %v5729
  %v5731 = vsel %vm437, %v5722, %v5730
  %v5733 = vshrl.u32 %v5714, 16
  %v5735 = vrot.slane %v5733, 4
  %v5736 = vshll.u32 %v5714, 16
  %v5738 = vrot.slane %v5736, 5
  %v5739 = vor.u32 %v5735, %v5738
  %v5740 = vsel %vm437, %v5730, %v5739
  %v5745 = vmul.bf16 %v5271, %v5722
  %v5746 = vmul.bf16 %v5272, %v5731
  %v5747 = vmul.bf16 %v5273, %v5740
  %v5748 = vmul.bf16 %v5274, %v5739
  %5749 = vset.pattern.permute.xlu0 4
  %5750 = vperm.xlu0 %5749, %v5293
  %v5751 = vpop.permute.xlu0 %5750
  %v5754 = vunpack.c.l.s4 839922192
  %v5755 = vunpack.c.0.s8 %v5754
  %v5756 = vlaneseq
  %v5757 = vshrl.u32 %v5756, 7
  %v5758 = vsub.s32 %v5755, %v5757
  %v5759 = vrot.slane %v5751, %v5758
  %5760 = vset.pattern.permute.xlu0 4
  %5761 = vperm.xlu0 %5760, %v5294
  %v5762 = vpop.permute.xlu0 %5761
  %v5765 = vunpack.c.l.s4 839922192
  %v5766 = vunpack.c.0.s8 %v5765
  %v5767 = vlaneseq
  %v5768 = vshrl.u32 %v5767, 7
  %v5769 = vsub.s32 %v5766, %v5768
  %v5770 = vrot.slane %v5762, %v5769
  %5771 = vset.pattern.permute.xlu0 4
  %5772 = vperm.xlu0 %5771, %v5295
  %v5773 = vpop.permute.xlu0 %5772
  %v5776 = vunpack.c.l.s4 839922192
  %v5777 = vunpack.c.0.s8 %v5776
  %v5778 = vlaneseq
  %v5779 = vshrl.u32 %v5778, 7
  %v5780 = vsub.s32 %v5777, %v5779
  %v5781 = vrot.slane %v5773, %v5780
  %5782 = vset.pattern.permute.xlu0 4
  %5783 = vperm.xlu0 %5782, %v5296
  %v5784 = vpop.permute.xlu0 %5783
  %v5787 = vunpack.c.l.s4 839922192
  %v5788 = vunpack.c.0.s8 %v5787
  %v5789 = vlaneseq
  %v5790 = vshrl.u32 %v5789, 7
  %v5791 = vsub.s32 %v5788, %v5790
  %v5792 = vrot.slane %v5784, %v5791
  %5793 = vset.pattern.permute.xlu0 4
  %5794 = vperm.xlu0 %5793, %v5297
  %v5795 = vpop.permute.xlu0 %5794
  %v5798 = vunpack.c.l.s4 839922192
  %v5799 = vunpack.c.0.s8 %v5798
  %v5800 = vlaneseq
  %v5801 = vshrl.u32 %v5800, 7
  %v5802 = vsub.s32 %v5799, %v5801
  %v5803 = vrot.slane %v5795, %v5802
  %5804 = vset.pattern.permute.xlu0 4
  %5805 = vperm.xlu0 %5804, %v5298
  %v5806 = vpop.permute.xlu0 %5805
  %v5809 = vunpack.c.l.s4 839922192
  %v5810 = vunpack.c.0.s8 %v5809
  %v5811 = vlaneseq
  %v5812 = vshrl.u32 %v5811, 7
  %v5813 = vsub.s32 %v5810, %v5812
  %v5814 = vrot.slane %v5806, %v5813
  %v5821 = vunpack.c.l.b16 %v5759
  %v5822 = vunpack.c.l.b16 %v5770
  %v5823 = vunpack.c.l.b16 %v5781
  %v5824 = vunpack.c.l.b16 %v5792
  %v5825 = vunpack.c.l.b16 %v5803
  %v5826 = vunpack.c.l.b16 %v5814
  %v5827 = vpack.c.b16 %v5821, %v5821
  %v5828 = vpack.c.b16 %v5823, %v5822
  %v5829 = vpack.c.b16 %v5825, %v5824
  %v5830 = vpack.c.b16 %v5826, %v5826
  %v5835 = vmul.bf16 %v5271, %v5827
  %v5836 = vmul.bf16 %v5272, %v5828
  %v5837 = vmul.bf16 %v5273, %v5829
  %v5838 = vmul.bf16 %v5274, %v5830
  %5839 = vset.pattern.permute.xlu0 5
  %5840 = vperm.xlu0 %5839, %v5293
  %v5841 = vpop.permute.xlu0 %5840
  %v5844 = vunpack.c.l.s4 839922192
  %v5845 = vunpack.c.0.s8 %v5844
  %v5846 = vlaneseq
  %v5847 = vshrl.u32 %v5846, 7
  %v5848 = vsub.s32 %v5845, %v5847
  %v5849 = vrot.slane %v5841, %v5848
  %5850 = vset.pattern.permute.xlu0 5
  %5851 = vperm.xlu0 %5850, %v5294
  %v5852 = vpop.permute.xlu0 %5851
  %v5855 = vunpack.c.l.s4 839922192
  %v5856 = vunpack.c.0.s8 %v5855
  %v5857 = vlaneseq
  %v5858 = vshrl.u32 %v5857, 7
  %v5859 = vsub.s32 %v5856, %v5858
  %v5860 = vrot.slane %v5852, %v5859
  %5861 = vset.pattern.permute.xlu0 5
  %5862 = vperm.xlu0 %5861, %v5295
  %v5863 = vpop.permute.xlu0 %5862
  %v5866 = vunpack.c.l.s4 839922192
  %v5867 = vunpack.c.0.s8 %v5866
  %v5868 = vlaneseq
  %v5869 = vshrl.u32 %v5868, 7
  %v5870 = vsub.s32 %v5867, %v5869
  %v5871 = vrot.slane %v5863, %v5870
  %5872 = vset.pattern.permute.xlu0 5
  %5873 = vperm.xlu0 %5872, %v5296
  %v5874 = vpop.permute.xlu0 %5873
  %v5877 = vunpack.c.l.s4 839922192
  %v5878 = vunpack.c.0.s8 %v5877
  %v5879 = vlaneseq
  %v5880 = vshrl.u32 %v5879, 7
  %v5881 = vsub.s32 %v5878, %v5880
  %v5882 = vrot.slane %v5874, %v5881
  %5883 = vset.pattern.permute.xlu0 5
  %5884 = vperm.xlu0 %5883, %v5297
  %v5885 = vpop.permute.xlu0 %5884
  %v5888 = vunpack.c.l.s4 839922192
  %v5889 = vunpack.c.0.s8 %v5888
  %v5890 = vlaneseq
  %v5891 = vshrl.u32 %v5890, 7
  %v5892 = vsub.s32 %v5889, %v5891
  %v5893 = vrot.slane %v5885, %v5892
  %5894 = vset.pattern.permute.xlu0 5
  %5895 = vperm.xlu0 %5894, %v5298
  %v5896 = vpop.permute.xlu0 %5895
  %v5899 = vunpack.c.l.s4 839922192
  %v5900 = vunpack.c.0.s8 %v5899
  %v5901 = vlaneseq
  %v5902 = vshrl.u32 %v5901, 7
  %v5903 = vsub.s32 %v5900, %v5902
  %v5904 = vrot.slane %v5896, %v5903
  %v5911 = vunpack.c.l.b16 %v5849
  %v5912 = vunpack.c.l.b16 %v5860
  %v5913 = vunpack.c.l.b16 %v5871
  %v5914 = vunpack.c.l.b16 %v5882
  %v5915 = vunpack.c.l.b16 %v5893
  %v5916 = vunpack.c.l.b16 %v5904
  %v5917 = vpack.c.b16 %v5912, %v5911
  %v5918 = vpack.c.b16 %v5914, %v5913
  %v5919 = vpack.c.b16 %v5916, %v5915
  %v5921 = vshrl.u32 %v5917, 16
  %v5923 = vrot.slane %v5921, 3
  %v5924 = vshll.u32 %v5917, 16
  %v5926 = vrot.slane %v5924, 4
  %v5927 = vor.u32 %v5923, %v5926
  %v5929 = vshrl.u32 %v5918, 16
  %v5931 = vrot.slane %v5929, 3
  %v5932 = vshll.u32 %v5918, 16
  %v5934 = vrot.slane %v5932, 4
  %v5935 = vor.u32 %v5931, %v5934
  %v5936 = vsel %vm1246, %v5927, %v5935
  %v5938 = vshrl.u32 %v5919, 16
  %v5940 = vrot.slane %v5938, 3
  %v5941 = vshll.u32 %v5919, 16
  %v5943 = vrot.slane %v5941, 4
  %v5944 = vor.u32 %v5940, %v5943
  %v5945 = vsel %vm1246, %v5935, %v5944
  %v5950 = vmul.bf16 %v5271, %v5927
  %v5951 = vmul.bf16 %v5272, %v5936
  %v5952 = vmul.bf16 %v5273, %v5945
  %v5953 = vmul.bf16 %v5274, %v5944
  %5954 = vset.pattern.permute.xlu0 6
  %5955 = vperm.xlu0 %5954, %v5293
  %v5956 = vpop.permute.xlu0 %5955
  %v5959 = vunpack.c.l.s4 839922192
  %v5960 = vunpack.c.0.s8 %v5959
  %v5961 = vlaneseq
  %v5962 = vshrl.u32 %v5961, 7
  %v5963 = vsub.s32 %v5960, %v5962
  %v5964 = vrot.slane %v5956, %v5963
  %5965 = vset.pattern.permute.xlu0 6
  %5966 = vperm.xlu0 %5965, %v5294
  %v5967 = vpop.permute.xlu0 %5966
  %v5970 = vunpack.c.l.s4 839922192
  %v5971 = vunpack.c.0.s8 %v5970
  %v5972 = vlaneseq
  %v5973 = vshrl.u32 %v5972, 7
  %v5974 = vsub.s32 %v5971, %v5973
  %v5975 = vrot.slane %v5967, %v5974
  %5976 = vset.pattern.permute.xlu0 6
  %5977 = vperm.xlu0 %5976, %v5295
  %v5978 = vpop.permute.xlu0 %5977
  %v5981 = vunpack.c.l.s4 839922192
  %v5982 = vunpack.c.0.s8 %v5981
  %v5983 = vlaneseq
  %v5984 = vshrl.u32 %v5983, 7
  %v5985 = vsub.s32 %v5982, %v5984
  %v5986 = vrot.slane %v5978, %v5985
  %5987 = vset.pattern.permute.xlu0 6
  %5988 = vperm.xlu0 %5987, %v5296
  %v5989 = vpop.permute.xlu0 %5988
  %v5992 = vunpack.c.l.s4 839922192
  %v5993 = vunpack.c.0.s8 %v5992
  %v5994 = vlaneseq
  %v5995 = vshrl.u32 %v5994, 7
  %v5996 = vsub.s32 %v5993, %v5995
  %v5997 = vrot.slane %v5989, %v5996
  %5998 = vset.pattern.permute.xlu0 6
  %5999 = vperm.xlu0 %5998, %v5297
  %v6000 = vpop.permute.xlu0 %5999
  %v6003 = vunpack.c.l.s4 839922192
  %v6004 = vunpack.c.0.s8 %v6003
  %v6005 = vlaneseq
  %v6006 = vshrl.u32 %v6005, 7
  %v6007 = vsub.s32 %v6004, %v6006
  %v6008 = vrot.slane %v6000, %v6007
  %6009 = vset.pattern.permute.xlu0 6
  %6010 = vperm.xlu0 %6009, %v5298
  %v6011 = vpop.permute.xlu0 %6010
  %v6014 = vunpack.c.l.s4 839922192
  %v6015 = vunpack.c.0.s8 %v6014
  %v6016 = vlaneseq
  %v6017 = vshrl.u32 %v6016, 7
  %v6018 = vsub.s32 %v6015, %v6017
  %v6019 = vrot.slane %v6011, %v6018
  %v6026 = vunpack.c.l.b16 %v5964
  %v6027 = vunpack.c.l.b16 %v5975
  %v6028 = vunpack.c.l.b16 %v5986
  %v6029 = vunpack.c.l.b16 %v5997
  %v6030 = vunpack.c.l.b16 %v6008
  %v6031 = vunpack.c.l.b16 %v6019
  %v6032 = vpack.c.b16 %v6027, %v6026
  %v6033 = vpack.c.b16 %v6029, %v6028
  %v6034 = vpack.c.b16 %v6031, %v6030
  %vm6035 = vsmask.f32 5376
  %v6037 = vshrl.u32 %v6032, 16
  %v6039 = vrot.slane %v6037, 2
  %v6040 = vshll.u32 %v6032, 16
  %v6042 = vrot.slane %v6040, 3
  %v6043 = vor.u32 %v6039, %v6042
  %v6045 = vshrl.u32 %v6033, 16
  %v6047 = vrot.slane %v6045, 2
  %v6048 = vshll.u32 %v6033, 16
  %v6050 = vrot.slane %v6048, 3
  %v6051 = vor.u32 %v6047, %v6050
  %v6052 = vsel %vm6035, %v6043, %v6051
  %v6054 = vshrl.u32 %v6034, 16
  %v6056 = vrot.slane %v6054, 2
  %v6057 = vshll.u32 %v6034, 16
  %v6059 = vrot.slane %v6057, 3
  %v6060 = vor.u32 %v6056, %v6059
  %v6061 = vsel %vm6035, %v6051, %v6060
  %v6066 = vmul.bf16 %v5271, %v6043
  %v6067 = vmul.bf16 %v5272, %v6052
  %v6068 = vmul.bf16 %v5273, %v6061
  %v6069 = vmul.bf16 %v5274, %v6060
  %6070 = vset.pattern.permute.xlu0 7
  %6071 = vperm.xlu0 %6070, %v5293
  %v6072 = vpop.permute.xlu0 %6071
  %v6075 = vunpack.c.l.s4 839922192
  %v6076 = vunpack.c.0.s8 %v6075
  %v6077 = vlaneseq
  %v6078 = vshrl.u32 %v6077, 7
  %v6079 = vsub.s32 %v6076, %v6078
  %v6080 = vrot.slane %v6072, %v6079
  %6081 = vset.pattern.permute.xlu0 7
  %6082 = vperm.xlu0 %6081, %v5294
  %v6083 = vpop.permute.xlu0 %6082
  %v6086 = vunpack.c.l.s4 839922192
  %v6087 = vunpack.c.0.s8 %v6086
  %v6088 = vlaneseq
  %v6089 = vshrl.u32 %v6088, 7
  %v6090 = vsub.s32 %v6087, %v6089
  %v6091 = vrot.slane %v6083, %v6090
  %6092 = vset.pattern.permute.xlu0 7
  %6093 = vperm.xlu0 %6092, %v5295
  %v6094 = vpop.permute.xlu0 %6093
  %v6097 = vunpack.c.l.s4 839922192
  %v6098 = vunpack.c.0.s8 %v6097
  %v6099 = vlaneseq
  %v6100 = vshrl.u32 %v6099, 7
  %v6101 = vsub.s32 %v6098, %v6100
  %v6102 = vrot.slane %v6094, %v6101
  %6103 = vset.pattern.permute.xlu0 7
  %6104 = vperm.xlu0 %6103, %v5296
  %v6105 = vpop.permute.xlu0 %6104
  %v6108 = vunpack.c.l.s4 839922192
  %v6109 = vunpack.c.0.s8 %v6108
  %v6110 = vlaneseq
  %v6111 = vshrl.u32 %v6110, 7
  %v6112 = vsub.s32 %v6109, %v6111
  %v6113 = vrot.slane %v6105, %v6112
  %6114 = vset.pattern.permute.xlu0 7
  %6115 = vperm.xlu0 %6114, %v5297
  %v6116 = vpop.permute.xlu0 %6115
  %v6119 = vunpack.c.l.s4 839922192
  %v6120 = vunpack.c.0.s8 %v6119
  %v6121 = vlaneseq
  %v6122 = vshrl.u32 %v6121, 7
  %v6123 = vsub.s32 %v6120, %v6122
  %v6124 = vrot.slane %v6116, %v6123
  %6125 = vset.pattern.permute.xlu0 7
  %6126 = vperm.xlu0 %6125, %v5298
  %v6127 = vpop.permute.xlu0 %6126
  %v6130 = vunpack.c.l.s4 839922192
  %v6131 = vunpack.c.0.s8 %v6130
  %v6132 = vlaneseq
  %v6133 = vshrl.u32 %v6132, 7
  %v6134 = vsub.s32 %v6131, %v6133
  %v6135 = vrot.slane %v6127, %v6134
  %v6142 = vunpack.c.l.b16 %v6080
  %v6143 = vunpack.c.l.b16 %v6091
  %v6144 = vunpack.c.l.b16 %v6102
  %v6145 = vunpack.c.l.b16 %v6113
  %v6146 = vunpack.c.l.b16 %v6124
  %v6147 = vunpack.c.l.b16 %v6135
  %v6148 = vpack.c.b16 %v6143, %v6142
  %v6149 = vpack.c.b16 %v6145, %v6144
  %v6150 = vpack.c.b16 %v6147, %v6146
  %vm6151 = vcmask 1045504
  %v6152 = vrot.slane %v6148, 2
  %v6153 = vrot.slane %v6149, 2
  %v6154 = vsel %vm6151, %v6152, %v6153
  %v6155 = vrot.slane %v6150, 2
  %v6156 = vsel %vm6151, %v6153, %v6155
  %v6161 = vmul.bf16 %v5271, %v6152
  %v6162 = vmul.bf16 %v5272, %v6154
  %v6163 = vmul.bf16 %v5273, %v6156
  %v6164 = vmul.bf16 %v5274, %v6155
  %6165 = vset.pattern.permute.xlu0 8
  %6166 = vperm.xlu0 %6165, %v5293
  %v6167 = vpop.permute.xlu0 %6166
  %v6170 = vunpack.c.l.s4 839922192
  %v6171 = vunpack.c.0.s8 %v6170
  %v6172 = vlaneseq
  %v6173 = vshrl.u32 %v6172, 7
  %v6174 = vsub.s32 %v6171, %v6173
  %v6175 = vrot.slane %v6167, %v6174
  %6176 = vset.pattern.permute.xlu0 8
  %6177 = vperm.xlu0 %6176, %v5294
  %v6178 = vpop.permute.xlu0 %6177
  %v6181 = vunpack.c.l.s4 839922192
  %v6182 = vunpack.c.0.s8 %v6181
  %v6183 = vlaneseq
  %v6184 = vshrl.u32 %v6183, 7
  %v6185 = vsub.s32 %v6182, %v6184
  %v6186 = vrot.slane %v6178, %v6185
  %6187 = vset.pattern.permute.xlu0 8
  %6188 = vperm.xlu0 %6187, %v5295
  %v6189 = vpop.permute.xlu0 %6188
  %v6192 = vunpack.c.l.s4 839922192
  %v6193 = vunpack.c.0.s8 %v6192
  %v6194 = vlaneseq
  %v6195 = vshrl.u32 %v6194, 7
  %v6196 = vsub.s32 %v6193, %v6195
  %v6197 = vrot.slane %v6189, %v6196
  %6198 = vset.pattern.permute.xlu0 8
  %6199 = vperm.xlu0 %6198, %v5296
  %v6200 = vpop.permute.xlu0 %6199
  %v6203 = vunpack.c.l.s4 839922192
  %v6204 = vunpack.c.0.s8 %v6203
  %v6205 = vlaneseq
  %v6206 = vshrl.u32 %v6205, 7
  %v6207 = vsub.s32 %v6204, %v6206
  %v6208 = vrot.slane %v6200, %v6207
  %6209 = vset.pattern.permute.xlu0 8
  %6210 = vperm.xlu0 %6209, %v5297
  %v6211 = vpop.permute.xlu0 %6210
  %v6214 = vunpack.c.l.s4 839922192
  %v6215 = vunpack.c.0.s8 %v6214
  %v6216 = vlaneseq
  %v6217 = vshrl.u32 %v6216, 7
  %v6218 = vsub.s32 %v6215, %v6217
  %v6219 = vrot.slane %v6211, %v6218
  %6220 = vset.pattern.permute.xlu0 8
  %6221 = vperm.xlu0 %6220, %v5298
  %v6222 = vpop.permute.xlu0 %6221
  %v6225 = vunpack.c.l.s4 839922192
  %v6226 = vunpack.c.0.s8 %v6225
  %v6227 = vlaneseq
  %v6228 = vshrl.u32 %v6227, 7
  %v6229 = vsub.s32 %v6226, %v6228
  %v6230 = vrot.slane %v6222, %v6229
  %v6237 = vunpack.c.l.b16 %v6175
  %v6238 = vunpack.c.l.b16 %v6186
  %v6239 = vunpack.c.l.b16 %v6197
  %v6240 = vunpack.c.l.b16 %v6208
  %v6241 = vunpack.c.l.b16 %v6219
  %v6242 = vunpack.c.l.b16 %v6230
  %v6243 = vpack.c.b16 %v6238, %v6237
  %v6244 = vpack.c.b16 %v6240, %v6239
  %v6245 = vpack.c.b16 %v6242, %v6241
  %vm6246 = vsmask.f32 6400
  %v6248 = vshrl.u32 %v6243, 16
  %v6250 = vrot.slane %v6248, 1
  %v6251 = vshll.u32 %v6243, 16
  %v6253 = vrot.slane %v6251, 2
  %v6254 = vor.u32 %v6250, %v6253
  %v6256 = vshrl.u32 %v6244, 16
  %v6258 = vrot.slane %v6256, 1
  %v6259 = vshll.u32 %v6244, 16
  %v6261 = vrot.slane %v6259, 2
  %v6262 = vor.u32 %v6258, %v6261
  %v6263 = vsel %vm6246, %v6254, %v6262
  %v6265 = vshrl.u32 %v6245, 16
  %v6267 = vrot.slane %v6265, 1
  %v6268 = vshll.u32 %v6245, 16
  %v6270 = vrot.slane %v6268, 2
  %v6271 = vor.u32 %v6267, %v6270
  %v6272 = vsel %vm6246, %v6262, %v6271
  %v6277 = vmul.bf16 %v5271, %v6254
  %v6278 = vmul.bf16 %v5272, %v6263
  %v6279 = vmul.bf16 %v5273, %v6272
  %v6280 = vmul.bf16 %v5274, %v6271
  %v6282 = vshrl.u32 %v5514, 16
  %v6284 = vshll.u32 %v5514, 16
  %v6286 = vrot.slane %v6284, 1
  %v6287 = vor.u32 %v6282, %v6286
  %v6289 = vshll.u32 %v5515, 16
  %v6291 = vrot.slane %v6289, 1
  %v6292 = vsel %vm3910, %v6287, %v6291
  %v6293 = vshrl.u32 %v5515, 16
  %v6295 = vor.u32 %v6293, %v6291
  %v6297 = vshll.u32 %v5516, 16
  %v6299 = vrot.slane %v6297, 1
  %v6300 = vsel %vm3910, %v6295, %v6299
  %v6301 = vshrl.u32 %v5516, 16
  %v6303 = vor.u32 %v6301, %v6299
  %v6305 = vshll.u32 %v5517, 16
  %v6307 = vrot.slane %v6305, 1
  %v6308 = vsel %vm3910, %v6303, %v6307
  %v6309 = vshrl.u32 %v5517, 16
  %v6311 = vor.u32 %v6309, %v6307
  %6312 = vrot.lane.b32.xlu0 %v6292, 16
  %v6313 = vpop.permute.xlu0 %6312
  %6314 = vrot.lane.b32.xlu0 %v6300, 16
  %v6315 = vpop.permute.xlu0 %6314
  %6316 = vrot.lane.b32.xlu0 %v6308, 16
  %v6317 = vpop.permute.xlu0 %6316
  %6318 = vrot.lane.b32.xlu0 %v6311, 16
  %v6319 = vpop.permute.xlu0 %6318
  %v6324 = vrot.slane %v5630, 1
  %v6325 = vrot.slane %v5631, 1
  %v6326 = vsel %vm4053, %v6324, %v6325
  %v6327 = vrot.slane %v5632, 1
  %v6328 = vsel %vm4053, %v6325, %v6327
  %v6329 = vrot.slane %v5633, 1
  %v6330 = vsel %vm4053, %v6327, %v6329
  %6331 = vrot.lane.b32.xlu0 %v6326, 32
  %v6332 = vpop.permute.xlu0 %6331
  %6333 = vrot.lane.b32.xlu0 %v6328, 32
  %v6334 = vpop.permute.xlu0 %6333
  %6335 = vrot.lane.b32.xlu0 %v6330, 32
  %v6336 = vpop.permute.xlu0 %6335
  %6337 = vrot.lane.b32.xlu0 %v6329, 32
  %v6338 = vpop.permute.xlu0 %6337
  %v6343 = vrot.slane %v5745, 2
  %v6344 = vrot.slane %v5746, 2
  %v6345 = vsel %vm6151, %v6343, %v6344
  %v6346 = vrot.slane %v5747, 2
  %v6347 = vsel %vm6151, %v6344, %v6346
  %v6348 = vrot.slane %v5748, 2
  %v6349 = vsel %vm6151, %v6346, %v6348
  %6350 = vrot.lane.b32.xlu0 %v6345, 48
  %v6351 = vpop.permute.xlu0 %6350
  %6352 = vrot.lane.b32.xlu0 %v6347, 48
  %v6353 = vpop.permute.xlu0 %6352
  %6354 = vrot.lane.b32.xlu0 %v6349, 48
  %v6355 = vpop.permute.xlu0 %6354
  %6356 = vrot.lane.b32.xlu0 %v6348, 48
  %v6357 = vpop.permute.xlu0 %6356
  %v6359 = vshrl.u32 %v5835, 16
  %v6361 = vrot.slane %v6359, 2
  %v6362 = vshll.u32 %v5835, 16
  %v6364 = vrot.slane %v6362, 3
  %v6365 = vor.u32 %v6361, %v6364
  %v6367 = vshrl.u32 %v5836, 16
  %v6369 = vrot.slane %v6367, 2
  %v6370 = vshll.u32 %v5836, 16
  %v6372 = vrot.slane %v6370, 3
  %v6373 = vor.u32 %v6369, %v6372
  %v6374 = vsel %vm6035, %v6365, %v6373
  %v6376 = vshrl.u32 %v5837, 16
  %v6378 = vrot.slane %v6376, 2
  %v6379 = vshll.u32 %v5837, 16
  %v6381 = vrot.slane %v6379, 3
  %v6382 = vor.u32 %v6378, %v6381
  %v6383 = vsel %vm6035, %v6373, %v6382
  %v6385 = vshrl.u32 %v5838, 16
  %v6387 = vrot.slane %v6385, 2
  %v6388 = vshll.u32 %v5838, 16
  %v6390 = vrot.slane %v6388, 3
  %v6391 = vor.u32 %v6387, %v6390
  %v6392 = vsel %vm6035, %v6382, %v6391
  %6393 = vrot.lane.b32.xlu0 %v6374, 64
  %v6394 = vpop.permute.xlu0 %6393
  %6395 = vrot.lane.b32.xlu0 %v6383, 64
  %v6396 = vpop.permute.xlu0 %6395
  %6397 = vrot.lane.b32.xlu0 %v6392, 64
  %v6398 = vpop.permute.xlu0 %6397
  %6399 = vrot.lane.b32.xlu0 %v6391, 64
  %v6400 = vpop.permute.xlu0 %6399
  %vm6405 = vcmask 1044480
  %v6406 = vrot.slane %v5950, 3
  %v6407 = vrot.slane %v5951, 3
  %v6408 = vsel %vm6405, %v6406, %v6407
  %v6409 = vrot.slane %v5952, 3
  %v6410 = vsel %vm6405, %v6407, %v6409
  %v6411 = vrot.slane %v5953, 3
  %v6412 = vsel %vm6405, %v6409, %v6411
  %6413 = vrot.lane.b32.xlu0 %v6408, 80
  %v6414 = vpop.permute.xlu0 %6413
  %6415 = vrot.lane.b32.xlu0 %v6410, 80
  %v6416 = vpop.permute.xlu0 %6415
  %6417 = vrot.lane.b32.xlu0 %v6412, 80
  %v6418 = vpop.permute.xlu0 %6417
  %6419 = vrot.lane.b32.xlu0 %v6411, 80
  %v6420 = vpop.permute.xlu0 %6419
  %vm6425 = vcmask 1043456
  %v6426 = vrot.slane %v6066, 4
  %v6427 = vrot.slane %v6067, 4
  %v6428 = vsel %vm6425, %v6426, %v6427
  %v6429 = vrot.slane %v6068, 4
  %v6430 = vsel %vm6425, %v6427, %v6429
  %v6431 = vrot.slane %v6069, 4
  %v6432 = vsel %vm6425, %v6429, %v6431
  %6433 = vrot.lane.b32.xlu0 %v6428, 96
  %v6434 = vpop.permute.xlu0 %6433
  %6435 = vrot.lane.b32.xlu0 %v6430, 96
  %v6436 = vpop.permute.xlu0 %6435
  %6437 = vrot.lane.b32.xlu0 %v6432, 96
  %v6438 = vpop.permute.xlu0 %6437
  %6439 = vrot.lane.b32.xlu0 %v6431, 96
  %v6440 = vpop.permute.xlu0 %6439
  %v6442 = vshrl.u32 %v6161, 16
  %v6444 = vrot.slane %v6442, 4
  %v6445 = vshll.u32 %v6161, 16
  %v6447 = vrot.slane %v6445, 5
  %v6448 = vor.u32 %v6444, %v6447
  %v6450 = vshrl.u32 %v6162, 16
  %v6452 = vrot.slane %v6450, 4
  %v6453 = vshll.u32 %v6162, 16
  %v6455 = vrot.slane %v6453, 5
  %v6456 = vor.u32 %v6452, %v6455
  %v6457 = vsel %vm437, %v6448, %v6456
  %v6459 = vshrl.u32 %v6163, 16
  %v6461 = vrot.slane %v6459, 4
  %v6462 = vshll.u32 %v6163, 16
  %v6464 = vrot.slane %v6462, 5
  %v6465 = vor.u32 %v6461, %v6464
  %v6466 = vsel %vm437, %v6456, %v6465
  %v6468 = vshrl.u32 %v6164, 16
  %v6470 = vrot.slane %v6468, 4
  %v6471 = vshll.u32 %v6164, 16
  %v6473 = vrot.slane %v6471, 5
  %v6474 = vor.u32 %v6470, %v6473
  %v6475 = vsel %vm437, %v6465, %v6474
  %6476 = vrot.lane.b32.xlu0 %v6457, 112
  %v6477 = vpop.permute.xlu0 %6476
  %6478 = vrot.lane.b32.xlu0 %v6466, 112
  %v6479 = vpop.permute.xlu0 %6478
  %6480 = vrot.lane.b32.xlu0 %v6475, 112
  %v6481 = vpop.permute.xlu0 %6480
  %6482 = vrot.lane.b32.xlu0 %v6474, 112
  %v6483 = vpop.permute.xlu0 %6482
  %vm6488 = vcmask 1042432
  %v6489 = vrot.slane %v6277, 5
  %v6490 = vrot.slane %v6278, 5
  %v6491 = vsel %vm6488, %v6489, %v6490
  %v6492 = vrot.slane %v6279, 5
  %v6493 = vsel %vm6488, %v6490, %v6492
  %v6494 = vrot.slane %v6280, 5
  %v6495 = vsel %vm6488, %v6492, %v6494
  %v6498 = vsel %vm4771, %v5419, %v6313
  %v6501 = vsel %vm4771, %v5420, %v6315
  %v6504 = vsel %vm4771, %v5421, %v6317
  %v6507 = vsel %vm4771, %v5422, %v6319
  %vm6508 = vcmask 261120
  %v6510 = vsel %vm6508, %v6498, %v6332
  %v6512 = vsel %vm6508, %v6501, %v6334
  %v6514 = vsel %vm6508, %v6504, %v6336
  %v6516 = vsel %vm6508, %v6507, %v6338
  %vm6517 = vcmask 392192
  %v6519 = vsel %vm6517, %v6510, %v6351
  %v6521 = vsel %vm6517, %v6512, %v6353
  %v6523 = vsel %vm6517, %v6514, %v6355
  %v6525 = vsel %vm6517, %v6516, %v6357
  %vm6526 = vcmask 523264
  %v6528 = vsel %vm6526, %v6519, %v6394
  %v6530 = vsel %vm6526, %v6521, %v6396
  %v6532 = vsel %vm6526, %v6523, %v6398
  %v6534 = vsel %vm6526, %v6525, %v6400
  %vm6535 = vcmask 654336
  %v6537 = vsel %vm6535, %v6528, %v6414
  %v6539 = vsel %vm6535, %v6530, %v6416
  %v6541 = vsel %vm6535, %v6532, %v6418
  %v6543 = vsel %vm6535, %v6534, %v6420
  %vm6544 = vcmask 785408
  %v6546 = vsel %vm6544, %v6537, %v6434
  %v6548 = vsel %vm6544, %v6539, %v6436
  %v6550 = vsel %vm6544, %v6541, %v6438
  %v6552 = vsel %vm6544, %v6543, %v6440
  %vm6553 = vcmask 916480
  %v6555 = vsel %vm6553, %v6546, %v6477
  %v6557 = vsel %vm6553, %v6548, %v6479
  %v6559 = vsel %vm6553, %v6550, %v6481
  %v6561 = vsel %vm6553, %v6552, %v6483
  %v6562 = vshrl.u32 %v6555, 16
  %v6564 = vrot.slane %v6562, 1
  %v6565 = vshll.u32 %v6555, 16
  %v6567 = vrot.slane %v6565, 2
  %v6568 = vor.u32 %v6564, %v6567
  %v6569 = vshrl.u32 %v6557, 16
  %v6571 = vrot.slane %v6569, 1
  %v6572 = vshll.u32 %v6557, 16
  %v6574 = vrot.slane %v6572, 2
  %v6575 = vor.u32 %v6571, %v6574
  %v6576 = vsel %vm6246, %v6568, %v6575
  %v6578 = vshrl.u32 %v6491, 16
  %v6580 = vrot.slane %v6578, 1
  %v6581 = vshll.u32 %v6491, 16
  %v6583 = vrot.slane %v6581, 2
  %v6584 = vor.u32 %v6580, %v6583
  %v6586 = vshrl.u32 %v6493, 16
  %v6588 = vrot.slane %v6586, 1
  %v6589 = vshll.u32 %v6493, 16
  %v6591 = vrot.slane %v6589, 2
  %v6592 = vor.u32 %v6588, %v6591
  %v6593 = vsel %vm6246, %v6584, %v6592
  %v6594 = vshrl.u32 %v6559, 16
  %v6596 = vrot.slane %v6594, 1
  %v6597 = vshll.u32 %v6559, 16
  %v6599 = vrot.slane %v6597, 2
  %v6600 = vor.u32 %v6596, %v6599
  %v6601 = vsel %vm6246, %v6575, %v6600
  %v6603 = vshrl.u32 %v6495, 16
  %v6605 = vrot.slane %v6603, 1
  %v6606 = vshll.u32 %v6495, 16
  %v6608 = vrot.slane %v6606, 2
  %v6609 = vor.u32 %v6605, %v6608
  %v6610 = vsel %vm6246, %v6592, %v6609
  %v6611 = vshrl.u32 %v6561, 16
  %v6613 = vrot.slane %v6611, 1
  %v6614 = vshll.u32 %v6561, 16
  %v6616 = vrot.slane %v6614, 2
  %v6617 = vor.u32 %v6613, %v6616
  %v6618 = vsel %vm6246, %v6600, %v6617
  %v6620 = vshrl.u32 %v6494, 16
  %v6622 = vrot.slane %v6620, 1
  %v6623 = vshll.u32 %v6494, 16
  %v6625 = vrot.slane %v6623, 2
  %v6626 = vor.u32 %v6622, %v6625
  %v6627 = vsel %vm6246, %v6609, %v6626
  %v6649 = vunpack.c.l.b16 %v5275
  %v6650 = vunpack.c.l.b16 %v5276
  %v6651 = vunpack.c.l.b16 %v5277
  %v6652 = vunpack.c.l.b16 %v5278
  %v6653 = vunpack.c.l.b16 %v5279
  %v6654 = vunpack.c.l.b16 %v5280
  %v6655 = vunpack.c.l.b16 %v5281
  %v6656 = vunpack.c.l.b16 %v5282
  %v6657 = vunpack.c.l.b16 %v5283
  %v6658 = vunpack.c.l.b16 %v5284
  %v6659 = vunpack.c.l.b16 %v5285
  %v6660 = vunpack.c.l.b16 %v5286
  %v6661 = vunpack.c.l.b16 %v5287
  %v6662 = vunpack.c.l.b16 %v5288
  %v6663 = vunpack.c.l.b16 %v5289
  %v6664 = vunpack.c.l.b16 %v5290
  %v6665 = vunpack.c.l.b16 %v5291
  %v6666 = vunpack.c.l.b16 %v5292
  %v6667 = vpack.c.b16 %v6650, %v6649
  %v6668 = vpack.c.b16 %v6652, %v6651
  %v6669 = vpack.c.b16 %v6654, %v6653
  %v6670 = vpack.c.b16 %v6656, %v6655
  %v6671 = vpack.c.b16 %v6658, %v6657
  %v6672 = vpack.c.b16 %v6660, %v6659
  %v6673 = vpack.c.b16 %v6662, %v6661
  %v6674 = vpack.c.b16 %v6664, %v6663
  %v6675 = vpack.c.b16 %v6666, %v6665
  %v6686 = vsel %vm4771, %v6593, 0
  %v6689 = vsel %vm4771, %v6610, 0
  %v6692 = vsel %vm4771, %v6627, 0
  %6694 = vmatprep.subr.bf16.mxu0 0
  %6695 = vmatpush1.bf16.msra.mxu0 %v6667
  %6696 = vmatprep.subr.bf16.mxu0 0
  %6697 = vmatpush1.bf16.msra.mxu0 %v6668
  %6698 = vmatprep.subr.bf16.mxu0 0
  %6699 = vmatpush1.bf16.msra.mxu0 %v6669
  %6700 = vmatprep.subr.bf16.mxu0 0
  %6701 = vmatpush1.bf16.msra.mxu0 %v6670
  %6702 = vmatprep.subr.bf16.mxu0 0
  %6703 = vmatpush1.bf16.msra.mxu0 %v6671
  %6704 = vmatprep.subr.bf16.mxu0 0
  %6705 = vmatpush1.bf16.msra.mxu0 %v6672
  %6706 = vmatprep.subr.bf16.mxu0 0
  %6707 = vmatpush1.bf16.msra.mxu0 %v6673
  %6708 = vmatprep.subr.bf16.mxu0 0
  %6709 = vmatpush1.bf16.msra.mxu0 %v6674
  %6710 = vmatprep.subr.bf16.mxu0 0
  %6711 = vmatpush1.bf16.msra.mxu0 %v6675
  %6712 = vmatprep.subr.bf16.mxu0 0
  %6713 = vmatpush1.bf16.msra.mxu0 0
  %6714 = vmatprep.subr.bf16.mxu0 0
  %6715 = vmatpush1.bf16.msra.mxu0 0
  %6716 = vmatprep.subr.bf16.mxu0 0
  %6717 = vmatpush1.bf16.msra.mxu0 0
  %6718 = vmatprep.subr.bf16.mxu0 0
  %6719 = vmatpush1.bf16.msra.mxu0 0
  %6720 = vmatprep.subr.bf16.mxu0 0
  %6721 = vmatpush1.bf16.msra.mxu0 0
  %6722 = vmatprep.subr.bf16.mxu0 0
  %6723 = vmatpush1.bf16.msra.mxu0 0
  %6724 = vmatprep.subr.bf16.mxu0 0
  %6725 = vmatpush1.bf16.msra.mxu0 0
  %6726 = vmatprep.mubr.bf16.mxu0 %v6686
  %6727 = vmatmul.mubr.bf16.gmra.mrb[0].mxu0 %v6576
  %v6728 = vpop.f32.mrb[0].mxu0
  %v6729 = vadd.f32 0.0, %v6728
  %v6730 = vpop.f32.mrb[0].mxu0
  %v6731 = vpop.f32.mrb[0].mxu0
  %v6732 = vadd.f32 0.0, %v6731
  %v6733 = vpop.f32.mrb[0].mxu0
  %6734 = vmatprep.mubr.bf16.mxu0 %v6689
  %6735 = vmatmul.mubr.bf16.gmra.mrb[0].mxu0 %v6601
  %v6736 = vpop.f32.mrb[0].mxu0
  %v6737 = vadd.f32 0.0, %v6736
  %v6738 = vpop.f32.mrb[0].mxu0
  %v6739 = vpop.f32.mrb[0].mxu0
  %v6740 = vadd.f32 0.0, %v6739
  %v6741 = vpop.f32.mrb[0].mxu0
  %6742 = vmatprep.mubr.bf16.mxu0 %v6692
  %6743 = vmatmul.mubr.bf16.gmra.mrb[0].mxu0 %v6618
  %v6744 = vpop.f32.mrb[0].mxu0
  %v6745 = vadd.f32 0.0, %v6744
  %v6746 = vpop.f32.mrb[0].mxu0
  %v6747 = vpop.f32.mrb[0].mxu0
  %v6748 = vadd.f32 0.0, %v6747
  %v6749 = vpop.f32.mrb[0].mxu0
  %6750 = vdwg.mxu0
  %v6751 = vlaneseq
  %v6752 = vshrl.u32 %v6751, 7
  %v6753 = vsub.s32 0, %v6752
  %v6754 = vrot.slane %v5299, %v6753
  %v6755 = vmul.f32 %v6729, %v6754
  %v6756 = vmul.f32 %v6732, %v6754
  %v6757 = vmul.f32 %v6737, %v6754
  %v6758 = vmul.f32 %v6740, %v6754
  %v6759 = vmul.f32 %v6745, %v6754
  %v6760 = vmul.f32 %v6748, %v6754
  %v6761 = vlaneseq
  %v6762 = vshrl.u32 %v6761, 7
  %v6763 = vsub.s32 0, %v6762
  %v6764 = vrot.slane %v5300, %v6763
  %v6765 = vadd.f32 %v6755, %v6764
  %v6766 = vadd.f32 %v6756, %v6764
  %v6767 = vadd.f32 %v6757, %v6764
  %v6768 = vadd.f32 %v6758, %v6764
  %v6769 = vadd.f32 %v6759, %v6764
  %v6770 = vadd.f32 %v6760, %v6764
  %v6771 = vmax.f32 %v6765, 0.0
  %v6772 = vmax.f32 %v6766, 0.0
  %v6773 = vmax.f32 %v6767, 0.0
  %v6774 = vmax.f32 %v6768, 0.0
  %v6775 = vmax.f32 %v6769, 0.0
  %v6776 = vmax.f32 %v6770, 0.0
  %v6777 = vpack.c.bf16 %v6772, %v6771
  %v6778 = vpack.c.bf16 %v6774, %v6773
  %v6779 = vpack.c.bf16 %v6776, %v6775
  %v6780 = vld [vmem:[%s1 + $0xe4] sm:$0xf]
  %v6781 = vld [vmem:[%s1 + $0xe8] sm:$0xf]
  %v6782 = vld [vmem:[%s1 + $0xec] sm:$0xf]
  %v6783 = vld [vmem:[%s1 + $0xf0] sm:$0xf]
  %v6784 = vld [vmem:[%s1 + $0xf4] sm:$0xf]
  %v6785 = vld [vmem:[%s1 + $0xf8] sm:$0xf]
  %v6787 = vsel %vm6517, %v6780, 0
  %6789 = vmatprep.subr.bf16.mxu0 0
  %6790 = vmatpush1.bf16.msra.mxu0 %v6777
  %6791 = vmatprep.subr.bf16.mxu0 0
  %6792 = vmatpush1.bf16.msra.mxu0 %v6778
  %6793 = vmatprep.subr.bf16.mxu0 0
  %6794 = vmatpush1.bf16.msra.mxu0 %v6779
  %6795 = vmatprep.subr.bf16.mxu0 0
  %6796 = vmatpush1.bf16.msra.mxu0 0
  %6797 = vmatprep.subr.bf16.mxu0 0
  %6798 = vmatpush1.bf16.msra.mxu0 0
  %6799 = vmatprep.subr.bf16.mxu0 0
  %6800 = vmatpush1.bf16.msra.mxu0 0
  %6801 = vmatprep.subr.bf16.mxu0 0
  %6802 = vmatpush1.bf16.msra.mxu0 0
  %6803 = vmatprep.subr.bf16.mxu0 0
  %6804 = vmatpush1.bf16.msra.mxu0 0
  %6805 = vmatprep.subr.bf16.mxu0 0
  %6806 = vmatpush1.bf16.msra.mxu0 0
  %6807 = vmatprep.subr.bf16.mxu0 0
  %6808 = vmatpush1.bf16.msra.mxu0 0
  %6809 = vmatprep.subr.bf16.mxu0 0
  %6810 = vmatpush1.bf16.msra.mxu0 0
  %6811 = vmatprep.subr.bf16.mxu0 0
  %6812 = vmatpush1.bf16.msra.mxu0 0
  %6813 = vmatprep.subr.bf16.mxu0 0
  %6814 = vmatpush1.bf16.msra.mxu0 0
  %6815 = vmatprep.subr.bf16.mxu0 0
  %6816 = vmatpush1.bf16.msra.mxu0 0
  %6817 = vmatprep.subr.bf16.mxu0 0
  %6818 = vmatpush1.bf16.msra.mxu0 0
  %6819 = vmatprep.subr.bf16.mxu0 0
  %6820 = vmatpush1.bf16.msra.mxu0 0
  %6821 = vmatprep.mubr.bf16.mxu0 0
  %6822 = vmatmul.mubr.bf16.gmra.mrb[0].mxu0 %v6787
  %v6823 = vpop.f32.mrb[0].mxu0
  %v6824 = vadd.f32 0.0, %v6823
  %v6825 = vpop.f32.mrb[0].mxu0
  %v6826 = vpop.f32.mrb[0].mxu0
  %v6827 = vpop.f32.mrb[0].mxu0
  %6828 = vdwg.mxu0
  %v6830 = vsel %vm6517, %v6781, 0
  %6832 = vmatprep.subr.bf16.mxu0 0
  %6833 = vmatpush1.bf16.msra.mxu0 %v6777
  %6834 = vmatprep.subr.bf16.mxu0 0
  %6835 = vmatpush1.bf16.msra.mxu0 %v6778
  %6836 = vmatprep.subr.bf16.mxu0 0
  %6837 = vmatpush1.bf16.msra.mxu0 %v6779
  %6838 = vmatprep.subr.bf16.mxu0 0
  %6839 = vmatpush1.bf16.msra.mxu0 0
  %6840 = vmatprep.subr.bf16.mxu0 0
  %6841 = vmatpush1.bf16.msra.mxu0 0
  %6842 = vmatprep.subr.bf16.mxu0 0
  %6843 = vmatpush1.bf16.msra.mxu0 0
  %6844 = vmatprep.subr.bf16.mxu0 0
  %6845 = vmatpush1.bf16.msra.mxu0 0
  %6846 = vmatprep.subr.bf16.mxu0 0
  %6847 = vmatpush1.bf16.msra.mxu0 0
  %6848 = vmatprep.subr.bf16.mxu0 0
  %6849 = vmatpush1.bf16.msra.mxu0 0
  %6850 = vmatprep.subr.bf16.mxu0 0
  %6851 = vmatpush1.bf16.msra.mxu0 0
  %6852 = vmatprep.subr.bf16.mxu0 0
  %6853 = vmatpush1.bf16.msra.mxu0 0
  %6854 = vmatprep.subr.bf16.mxu0 0
  %6855 = vmatpush1.bf16.msra.mxu0 0
  %6856 = vmatprep.subr.bf16.mxu0 0
  %6857 = vmatpush1.bf16.msra.mxu0 0
  %6858 = vmatprep.subr.bf16.mxu0 0
  %6859 = vmatpush1.bf16.msra.mxu0 0
  %6860 = vmatprep.subr.bf16.mxu0 0
  %6861 = vmatpush1.bf16.msra.mxu0 0
  %6862 = vmatprep.subr.bf16.mxu0 0
  %6863 = vmatpush1.bf16.msra.mxu0 0
  %6864 = vmatprep.mubr.bf16.mxu0 0
  %6865 = vmatmul.mubr.bf16.gmra.mrb[0].mxu0 %v6830
  %v6866 = vpop.f32.mrb[0].mxu0
  %v6867 = vadd.f32 0.0, %v6866
  %v6868 = vpop.f32.mrb[0].mxu0
  %v6869 = vpop.f32.mrb[0].mxu0
  %v6870 = vpop.f32.mrb[0].mxu0
  %6871 = vdwg.mxu0
  %v6872 = vmax.f32 %v6824, %v6867
  %v6874 = vsel %vm6517, %v6782, 0
  %6876 = vmatprep.subr.bf16.mxu0 0
  %6877 = vmatpush1.bf16.msra.mxu0 %v6777
  %6878 = vmatprep.subr.bf16.mxu0 0
  %6879 = vmatpush1.bf16.msra.mxu0 %v6778
  %6880 = vmatprep.subr.bf16.mxu0 0
  %6881 = vmatpush1.bf16.msra.mxu0 %v6779
  %6882 = vmatprep.subr.bf16.mxu0 0
  %6883 = vmatpush1.bf16.msra.mxu0 0
  %6884 = vmatprep.subr.bf16.mxu0 0
  %6885 = vmatpush1.bf16.msra.mxu0 0
  %6886 = vmatprep.subr.bf16.mxu0 0
  %6887 = vmatpush1.bf16.msra.mxu0 0
  %6888 = vmatprep.subr.bf16.mxu0 0
  %6889 = vmatpush1.bf16.msra.mxu0 0
  %6890 = vmatprep.subr.bf16.mxu0 0
  %6891 = vmatpush1.bf16.msra.mxu0 0
  %6892 = vmatprep.subr.bf16.mxu0 0
  %6893 = vmatpush1.bf16.msra.mxu0 0
  %6894 = vmatprep.subr.bf16.mxu0 0
  %6895 = vmatpush1.bf16.msra.mxu0 0
  %6896 = vmatprep.subr.bf16.mxu0 0
  %6897 = vmatpush1.bf16.msra.mxu0 0
  %6898 = vmatprep.subr.bf16.mxu0 0
  %6899 = vmatpush1.bf16.msra.mxu0 0
  %6900 = vmatprep.subr.bf16.mxu0 0
  %6901 = vmatpush1.bf16.msra.mxu0 0
  %6902 = vmatprep.subr.bf16.mxu0 0
  %6903 = vmatpush1.bf16.msra.mxu0 0
  %6904 = vmatprep.subr.bf16.mxu0 0
  %6905 = vmatpush1.bf16.msra.mxu0 0
  %6906 = vmatprep.subr.bf16.mxu0 0
  %6907 = vmatpush1.bf16.msra.mxu0 0
  %6908 = vmatprep.mubr.bf16.mxu0 0
  %6909 = vmatmul.mubr.bf16.gmra.mrb[0].mxu0 %v6874
  %v6910 = vpop.f32.mrb[0].mxu0
  %v6911 = vadd.f32 0.0, %v6910
  %v6912 = vpop.f32.mrb[0].mxu0
  %v6913 = vpop.f32.mrb[0].mxu0
  %v6914 = vpop.f32.mrb[0].mxu0
  %6915 = vdwg.mxu0
  %v6916 = vmax.f32 %v6872, %v6911
  %v6918 = vsel %vm6517, %v6783, 0
  %6920 = vmatprep.subr.bf16.mxu0 0
  %6921 = vmatpush1.bf16.msra.mxu0 %v6777
  %6922 = vmatprep.subr.bf16.mxu0 0
  %6923 = vmatpush1.bf16.msra.mxu0 %v6778
  %6924 = vmatprep.subr.bf16.mxu0 0
  %6925 = vmatpush1.bf16.msra.mxu0 %v6779
  %6926 = vmatprep.subr.bf16.mxu0 0
  %6927 = vmatpush1.bf16.msra.mxu0 0
  %6928 = vmatprep.subr.bf16.mxu0 0
  %6929 = vmatpush1.bf16.msra.mxu0 0
  %6930 = vmatprep.subr.bf16.mxu0 0
  %6931 = vmatpush1.bf16.msra.mxu0 0
  %6932 = vmatprep.subr.bf16.mxu0 0
  %6933 = vmatpush1.bf16.msra.mxu0 0
  %6934 = vmatprep.subr.bf16.mxu0 0
  %6935 = vmatpush1.bf16.msra.mxu0 0
  %6936 = vmatprep.subr.bf16.mxu0 0
  %6937 = vmatpush1.bf16.msra.mxu0 0
  %6938 = vmatprep.subr.bf16.mxu0 0
  %6939 = vmatpush1.bf16.msra.mxu0 0
  %6940 = vmatprep.subr.bf16.mxu0 0
  %6941 = vmatpush1.bf16.msra.mxu0 0
  %6942 = vmatprep.subr.bf16.mxu0 0
  %6943 = vmatpush1.bf16.msra.mxu0 0
  %6944 = vmatprep.subr.bf16.mxu0 0
  %6945 = vmatpush1.bf16.msra.mxu0 0
  %6946 = vmatprep.subr.bf16.mxu0 0
  %6947 = vmatpush1.bf16.msra.mxu0 0
  %6948 = vmatprep.subr.bf16.mxu0 0
  %6949 = vmatpush1.bf16.msra.mxu0 0
  %6950 = vmatprep.subr.bf16.mxu0 0
  %6951 = vmatpush1.bf16.msra.mxu0 0
  %6952 = vmatprep.mubr.bf16.mxu0 0
  %6953 = vmatmul.mubr.bf16.gmra.mrb[0].mxu0 %v6918
  %v6954 = vpop.f32.mrb[0].mxu0
  %v6955 = vadd.f32 0.0, %v6954
  %v6956 = vpop.f32.mrb[0].mxu0
  %v6957 = vpop.f32.mrb[0].mxu0
  %v6958 = vpop.f32.mrb[0].mxu0
  %6959 = vdwg.mxu0
  %v6960 = vmax.f32 %v6916, %v6955
  %v6962 = vsel %vm6517, %v6784, 0
  %6964 = vmatprep.subr.bf16.mxu0 0
  %6965 = vmatpush1.bf16.msra.mxu0 %v6777
  %6966 = vmatprep.subr.bf16.mxu0 0
  %6967 = vmatpush1.bf16.msra.mxu0 %v6778
  %6968 = vmatprep.subr.bf16.mxu0 0
  %6969 = vmatpush1.bf16.msra.mxu0 %v6779
  %6970 = vmatprep.subr.bf16.mxu0 0
  %6971 = vmatpush1.bf16.msra.mxu0 0
  %6972 = vmatprep.subr.bf16.mxu0 0
  %6973 = vmatpush1.bf16.msra.mxu0 0
  %6974 = vmatprep.subr.bf16.mxu0 0
  %6975 = vmatpush1.bf16.msra.mxu0 0
  %6976 = vmatprep.subr.bf16.mxu0 0
  %6977 = vmatpush1.bf16.msra.mxu0 0
  %6978 = vmatprep.subr.bf16.mxu0 0
  %6979 = vmatpush1.bf16.msra.mxu0 0
  %6980 = vmatprep.subr.bf16.mxu0 0
  %6981 = vmatpush1.bf16.msra.mxu0 0
  %6982 = vmatprep.subr.bf16.mxu0 0
  %6983 = vmatpush1.bf16.msra.mxu0 0
  %6984 = vmatprep.subr.bf16.mxu0 0
  %6985 = vmatpush1.bf16.msra.mxu0 0
  %6986 = vmatprep.subr.bf16.mxu0 0
  %6987 = vmatpush1.bf16.msra.mxu0 0
  %6988 = vmatprep.subr.bf16.mxu0 0
  %6989 = vmatpush1.bf16.msra.mxu0 0
  %6990 = vmatprep.subr.bf16.mxu0 0
  %6991 = vmatpush1.bf16.msra.mxu0 0
  %6992 = vmatprep.subr.bf16.mxu0 0
  %6993 = vmatpush1.bf16.msra.mxu0 0
  %6994 = vmatprep.subr.bf16.mxu0 0
  %6995 = vmatpush1.bf16.msra.mxu0 0
  %6996 = vmatprep.mubr.bf16.mxu0 0
  %6997 = vmatmul.mubr.bf16.gmra.mrb[0].mxu0 %v6962
  %v6998 = vpop.f32.mrb[0].mxu0
  %v6999 = vadd.f32 0.0, %v6998
  %v7000 = vpop.f32.mrb[0].mxu0
  %v7001 = vpop.f32.mrb[0].mxu0
  %v7002 = vpop.f32.mrb[0].mxu0
  %7003 = vdwg.mxu0
  %v7004 = vmax.f32 %v6960, %v6999
  %v7006 = vsel %vm6517, %v6785, 0
  %7008 = vmatprep.subr.bf16.mxu0 0
  %7009 = vmatpush1.bf16.msra.mxu0 %v6777
  %7010 = vmatprep.subr.bf16.mxu0 0
  %7011 = vmatpush1.bf16.msra.mxu0 %v6778
  %7012 = vmatprep.subr.bf16.mxu0 0
  %7013 = vmatpush1.bf16.msra.mxu0 %v6779
  %7014 = vmatprep.subr.bf16.mxu0 0
  %7015 = vmatpush1.bf16.msra.mxu0 0
  %7016 = vmatprep.subr.bf16.mxu0 0
  %7017 = vmatpush1.bf16.msra.mxu0 0
  %7018 = vmatprep.subr.bf16.mxu0 0
  %7019 = vmatpush1.bf16.msra.mxu0 0
  %7020 = vmatprep.subr.bf16.mxu0 0
  %7021 = vmatpush1.bf16.msra.mxu0 0
  %7022 = vmatprep.subr.bf16.mxu0 0
  %7023 = vmatpush1.bf16.msra.mxu0 0
  %7024 = vmatprep.subr.bf16.mxu0 0
  %7025 = vmatpush1.bf16.msra.mxu0 0
  %7026 = vmatprep.subr.bf16.mxu0 0
  %7027 = vmatpush1.bf16.msra.mxu0 0
  %7028 = vmatprep.subr.bf16.mxu0 0
  %7029 = vmatpush1.bf16.msra.mxu0 0
  %7030 = vmatprep.subr.bf16.mxu0 0
  %7031 = vmatpush1.bf16.msra.mxu0 0
  %7032 = vmatprep.subr.bf16.mxu0 0
  %7033 = vmatpush1.bf16.msra.mxu0 0
  %7034 = vmatprep.subr.bf16.mxu0 0
  %7035 = vmatpush1.bf16.msra.mxu0 0
  %7036 = vmatprep.subr.bf16.mxu0 0
  %7037 = vmatpush1.bf16.msra.mxu0 0
  %7038 = vmatprep.subr.bf16.mxu0 0
  %7039 = vmatpush1.bf16.msra.mxu0 0
  %7040 = vmatprep.mubr.bf16.mxu0 0
  %7041 = vmatmul.mubr.bf16.gmra.mrb[0].mxu0 %v7006
  %v7042 = vpop.f32.mrb[0].mxu0
  %v7043 = vadd.f32 0.0, %v7042
  %v7044 = vpop.f32.mrb[0].mxu0
  %v7045 = vpop.f32.mrb[0].mxu0
  %v7046 = vpop.f32.mrb[0].mxu0
  %7047 = vdwg.mxu0
  %v7048 = vmax.f32 %v7004, %v7043
  %7049 = vst.msk [vmem:[#allocation4] sm:$0xff] %vm6508, 0.0
  %7050 = vst.msk [vmem:[#allocation4 + $0x8] sm:$0xff] %vm6508, 0.0
  %7051 = vst.msk [vmem:[#allocation4 + $0x10] sm:$0xff] %vm6508, 0.0
  %7052 = vst.msk [vmem:[#allocation4 + $0x8] sm:$0xff] %vm6508, %v7048
  %v7053 = vld [vmem:[#allocation4] sm:$0xff]
  %v7054 = vld [vmem:[#allocation4 + $0x8] sm:$0xff]
  %v7055 = vld [vmem:[#allocation4 + $0x10] sm:$0xff]
  %v7056 = vpack.c.bf16 %v7054, %v7053
  %v7057 = vpack.c.bf16 %v7055, %v7055
  %v7058 = vld [vmem:[%s1 + $0x54] sm:$0xf]
  %v7059 = vld [vmem:[%s1 + $0x58] sm:$0xf]
  %v7060 = vld [vmem:[%s1 + $0x5c] sm:$0xf]
  %v7061 = vld [vmem:[%s1 + $0x60] sm:$0xf]
  %v7062 = vld [vmem:[%s1 + $0x64] sm:$0xf]
  %v7063 = vld [vmem:[%s1 + $0x68] sm:$0xf]
  %v7064 = vld [vmem:[%s1 + $0x6c] sm:$0xf]
  %v7065 = vld [vmem:[%s1 + $0x70] sm:$0xf]
  %v7066 = vld [vmem:[%s1 + $0x74] sm:$0xf]
  %v7067 = vld [vmem:[%s1 + $0x78] sm:$0xf]
  %v7068 = vld [vmem:[%s1 + $0x7c] sm:$0xf]
  %v7069 = vld [vmem:[%s1 + $0x80] sm:$0xf]
  %v7070 = vld [vmem:[%s1 + $0x84] sm:$0xf]
  %v7071 = vld [vmem:[%s1 + $0x88] sm:$0xf]
  %v7072 = vld [vmem:[%s1 + $0x8c] sm:$0xf]
  %v7073 = vld [vmem:[%s1 + $0x90] sm:$0xf]
  %v7074 = vld [vmem:[%s1 + $0x94] sm:$0xf]
  %v7075 = vld [vmem:[%s1 + $0x98] sm:$0xf]
  %v7076 = vld [vmem:[%s1 + $0x9c] sm:$0xf]
  %v7077 = vld [vmem:[%s1 + $0xa0] sm:$0xf]
  %v7078 = vld [vmem:[%s1 + $0xa4] sm:$0xf]
  %v7079 = vld [vmem:[%s1 + $0xa8] sm:$0xf]
  %v7080 = vld [vmem:[%s1 + $0xac] sm:$0xf]
  %v7081 = vld [vmem:[%s1 + $0xb0] sm:$0xf]
  %v7082 = vld [vmem:[%s1 + $0xb4] sm:$0xf]
  %v7083 = vld [vmem:[%s1 + $0xb8] sm:$0xf]
  %v7084 = vld [vmem:[%s1 + $0xbc] sm:$0xf]
  %v7085 = vld [vmem:[%s1 + $0xc0] sm:$0xf]
  %v7086 = vld [vmem:[%s1 + $0xc4] sm:$0xf]
  %v7087 = vld [vmem:[%s1 + $0xc8] sm:$0xf]
  %v7088 = vld [vmem:[%s1 + $0xcc] sm:$0xf]
  %v7089 = vld [vmem:[%s1 + $0xd0] sm:$0xf]
  %v7090 = vld [vmem:[%s1 + $0xd4] sm:$0xf]
  %v7091 = vld [vmem:[%s1 + $0xd8] sm:$0xf]
  %v7092 = vld [vmem:[%s1 + $0xdc] sm:$0xf]
  %v7093 = vld [vmem:[%s1 + $0xe0] sm:$0xf]
  %v7094 = vld [vmem:[%s1 + $0x1d4] sm:$0xf]
  %v7095 = vld [vmem:[%s2 + $0x4] sm:$0x1]
  %v7096 = vld [vmem:[%s2 + $0x5] sm:$0x1]
  %7098 = vset.pattern.permute.xlu0 0
  %7099 = vperm.xlu0 %7098, %v7094
  %v7100 = vpop.permute.xlu0 %7099
  %v7103 = vunpack.c.l.s4 839922192
  %v7104 = vunpack.c.0.s8 %v7103
  %v7105 = vlaneseq
  %v7106 = vshrl.u32 %v7105, 7
  %v7107 = vsub.s32 %v7104, %v7106
  %v7108 = vrot.slane %v7100, %v7107
  %v7110 = vunpack.c.l.b16 %v7108
  %v7111 = vpack.c.b16 %v7110, %v7110
  %v7113 = vshrl.u32 %v7111, 16
  %v7115 = vrot.slane %v7113, 5
  %v7116 = vshll.u32 %v7111, 16
  %v7118 = vrot.slane %v7116, 6
  %v7119 = vor.u32 %v7115, %v7118
  %v7121 = vmul.bf16 %v7056, %v7119
  %7122 = vset.pattern.permute.xlu0 1
  %7123 = vperm.xlu0 %7122, %v7094
  %v7124 = vpop.permute.xlu0 %7123
  %v7127 = vunpack.c.l.s4 839922192
  %v7128 = vunpack.c.0.s8 %v7127
  %v7129 = vlaneseq
  %v7130 = vshrl.u32 %v7129, 7
  %v7131 = vsub.s32 %v7128, %v7130
  %v7132 = vrot.slane %v7124, %v7131
  %v7134 = vunpack.c.l.b16 %v7132
  %v7135 = vpack.c.b16 %v7134, %v7134
  %v7136 = vrot.slane %v7135, 5
  %v7138 = vmul.bf16 %v7056, %v7136
  %7139 = vset.pattern.permute.xlu0 2
  %7140 = vperm.xlu0 %7139, %v7094
  %v7141 = vpop.permute.xlu0 %7140
  %v7144 = vunpack.c.l.s4 839922192
  %v7145 = vunpack.c.0.s8 %v7144
  %v7146 = vlaneseq
  %v7147 = vshrl.u32 %v7146, 7
  %v7148 = vsub.s32 %v7145, %v7147
  %v7149 = vrot.slane %v7141, %v7148
  %v7151 = vunpack.c.l.b16 %v7149
  %v7152 = vpack.c.b16 %v7151, %v7151
  %v7154 = vshrl.u32 %v7152, 16
  %v7156 = vrot.slane %v7154, 4
  %v7157 = vshll.u32 %v7152, 16
  %v7159 = vrot.slane %v7157, 5
  %v7160 = vor.u32 %v7156, %v7159
  %v7162 = vmul.bf16 %v7056, %v7160
  %7163 = vset.pattern.permute.xlu0 3
  %7164 = vperm.xlu0 %7163, %v7094
  %v7165 = vpop.permute.xlu0 %7164
  %v7168 = vunpack.c.l.s4 839922192
  %v7169 = vunpack.c.0.s8 %v7168
  %v7170 = vlaneseq
  %v7171 = vshrl.u32 %v7170, 7
  %v7172 = vsub.s32 %v7169, %v7171
  %v7173 = vrot.slane %v7165, %v7172
  %v7175 = vunpack.c.l.b16 %v7173
  %v7176 = vpack.c.b16 %v7175, %v7175
  %v7178 = vshrl.u32 %v7176, 16
  %v7180 = vrot.slane %v7178, 4
  %v7181 = vshll.u32 %v7176, 16
  %v7183 = vrot.slane %v7181, 5
  %v7184 = vor.u32 %v7180, %v7183
  %v7186 = vmul.bf16 %v7056, %v7184
  %7187 = vset.pattern.permute.xlu0 4
  %7188 = vperm.xlu0 %7187, %v7094
  %v7189 = vpop.permute.xlu0 %7188
  %v7192 = vunpack.c.l.s4 839922192
  %v7193 = vunpack.c.0.s8 %v7192
  %v7194 = vlaneseq
  %v7195 = vshrl.u32 %v7194, 7
  %v7196 = vsub.s32 %v7193, %v7195
  %v7197 = vrot.slane %v7189, %v7196
  %v7199 = vunpack.c.l.b16 %v7197
  %v7200 = vpack.c.b16 %v7199, %v7199
  %v7202 = vmul.bf16 %v7056, %v7200
  %7203 = vset.pattern.permute.xlu0 5
  %7204 = vperm.xlu0 %7203, %v7094
  %v7205 = vpop.permute.xlu0 %7204
  %v7208 = vunpack.c.l.s4 839922192
  %v7209 = vunpack.c.0.s8 %v7208
  %v7210 = vlaneseq
  %v7211 = vshrl.u32 %v7210, 7
  %v7212 = vsub.s32 %v7209, %v7211
  %v7213 = vrot.slane %v7205, %v7212
  %v7215 = vunpack.c.l.b16 %v7213
  %v7216 = vpack.c.b16 %v7215, %v7215
  %v7218 = vshrl.u32 %v7216, 16
  %v7220 = vrot.slane %v7218, 3
  %v7221 = vshll.u32 %v7216, 16
  %v7223 = vrot.slane %v7221, 4
  %v7224 = vor.u32 %v7220, %v7223
  %v7227 = vmul.bf16 %v7056, %v7224
  %v7228 = vmul.bf16 %v7057, %v7220
  %7229 = vset.pattern.permute.xlu0 6
  %7230 = vperm.xlu0 %7229, %v7094
  %v7231 = vpop.permute.xlu0 %7230
  %v7234 = vunpack.c.l.s4 839922192
  %v7235 = vunpack.c.0.s8 %v7234
  %v7236 = vlaneseq
  %v7237 = vshrl.u32 %v7236, 7
  %v7238 = vsub.s32 %v7235, %v7237
  %v7239 = vrot.slane %v7231, %v7238
  %v7241 = vunpack.c.l.b16 %v7239
  %v7242 = vpack.c.b16 %v7241, %v7241
  %v7244 = vshrl.u32 %v7242, 16
  %v7246 = vrot.slane %v7244, 3
  %v7247 = vshll.u32 %v7242, 16
  %v7249 = vrot.slane %v7247, 4
  %v7250 = vor.u32 %v7246, %v7249
  %v7253 = vmul.bf16 %v7056, %v7250
  %v7254 = vmul.bf16 %v7057, %v7246
  %7255 = vset.pattern.permute.xlu0 7
  %7256 = vperm.xlu0 %7255, %v7094
  %v7257 = vpop.permute.xlu0 %7256
  %v7260 = vunpack.c.l.s4 839922192
  %v7261 = vunpack.c.0.s8 %v7260
  %v7262 = vlaneseq
  %v7263 = vshrl.u32 %v7262, 7
  %v7264 = vsub.s32 %v7261, %v7263
  %v7265 = vrot.slane %v7257, %v7264
  %v7267 = vunpack.c.l.b16 %v7265
  %v7268 = vpack.c.b16 %v7267, %v7267
  %v7269 = vrot.slane %v7268, 3
  %v7271 = vmul.bf16 %v7056, %v7269
  %v7272 = vmul.bf16 %v7057, %v7269
  %7273 = vset.pattern.permute.xlu0 8
  %7274 = vperm.xlu0 %7273, %v7094
  %v7275 = vpop.permute.xlu0 %7274
  %v7278 = vunpack.c.l.s4 839922192
  %v7279 = vunpack.c.0.s8 %v7278
  %v7280 = vlaneseq
  %v7281 = vshrl.u32 %v7280, 7
  %v7282 = vsub.s32 %v7279, %v7281
  %v7283 = vrot.slane %v7275, %v7282
  %v7285 = vunpack.c.l.b16 %v7283
  %v7286 = vpack.c.b16 %v7285, %v7285
  %v7288 = vshrl.u32 %v7286, 16
  %v7290 = vrot.slane %v7288, 2
  %v7291 = vshll.u32 %v7286, 16
  %v7293 = vrot.slane %v7291, 3
  %v7294 = vor.u32 %v7290, %v7293
  %v7296 = vmul.bf16 %v7056, %v7294
  %v7297 = vmul.bf16 %v7057, %v7294
  %v7299 = vshrl.u32 %v7138, 16
  %v7301 = vshll.u32 %v7138, 16
  %v7303 = vrot.slane %v7301, 1
  %v7304 = vor.u32 %v7299, %v7303
  %7305 = vrot.lane.b32.xlu0 %v7304, 32
  %v7306 = vpop.permute.xlu0 %7305
  %v7308 = vrot.slane %v7162, 1
  %7309 = vrot.lane.b32.xlu0 %v7308, 64
  %v7310 = vpop.permute.xlu0 %7309
  %v7312 = vrot.slane %v7186, 1
  %7313 = vrot.lane.b32.xlu0 %v7312, 96
  %v7314 = vpop.permute.xlu0 %7313
  %v7316 = vshrl.u32 %v7202, 16
  %v7318 = vrot.slane %v7316, 1
  %v7319 = vshll.u32 %v7202, 16
  %v7321 = vrot.slane %v7319, 2
  %v7322 = vor.u32 %v7318, %v7321
  %v7325 = vrot.slane %v7227, 2
  %v7326 = vrot.slane %v7228, 2
  %v7327 = vsel %vm6151, %v7325, %v7326
  %7328 = vrot.lane.b32.xlu0 %v7327, 32
  %v7329 = vpop.permute.xlu0 %7328
  %v7332 = vrot.slane %v7253, 2
  %v7333 = vrot.slane %v7254, 2
  %v7334 = vsel %vm6151, %v7332, %v7333
  %7335 = vrot.lane.b32.xlu0 %v7334, 64
  %v7336 = vpop.permute.xlu0 %7335
  %v7338 = vshrl.u32 %v7271, 16
  %v7340 = vrot.slane %v7338, 2
  %v7341 = vshll.u32 %v7271, 16
  %v7343 = vrot.slane %v7341, 3
  %v7344 = vor.u32 %v7340, %v7343
  %v7346 = vshrl.u32 %v7272, 16
  %v7348 = vrot.slane %v7346, 2
  %v7349 = vshll.u32 %v7272, 16
  %v7351 = vrot.slane %v7349, 3
  %v7352 = vor.u32 %v7348, %v7351
  %v7353 = vsel %vm6035, %v7344, %v7352
  %7354 = vrot.lane.b32.xlu0 %v7353, 96
  %v7355 = vpop.permute.xlu0 %7354
  %v7358 = vrot.slane %v7296, 3
  %v7359 = vrot.slane %v7297, 3
  %v7360 = vsel %vm6405, %v7358, %v7359
  %v7363 = vsel %vm6508, %v7121, %v7306
  %v7365 = vsel %vm6526, %v7363, %v7310
  %v7367 = vsel %vm6544, %v7365, %v7314
  %v7370 = vsel %vm6508, %v7322, %v7329
  %v7372 = vsel %vm6526, %v7370, %v7336
  %v7374 = vsel %vm6544, %v7372, %v7355
  %v7375 = vshrl.u32 %v7367, 16
  %v7377 = vrot.slane %v7375, 2
  %v7378 = vshll.u32 %v7367, 16
  %v7380 = vrot.slane %v7378, 3
  %v7381 = vor.u32 %v7377, %v7380
  %v7382 = vshrl.u32 %v7374, 16
  %v7384 = vrot.slane %v7382, 2
  %v7385 = vshll.u32 %v7374, 16
  %v7387 = vrot.slane %v7385, 3
  %v7388 = vor.u32 %v7384, %v7387
  %v7390 = vshrl.u32 %v7360, 16
  %v7392 = vrot.slane %v7390, 2
  %v7393 = vshll.u32 %v7360, 16
  %v7395 = vrot.slane %v7393, 3
  %v7396 = vor.u32 %v7392, %v7395
  %v7435 = vunpack.c.l.b16 %v7058
  %v7436 = vunpack.c.l.b16 %v7059
  %v7437 = vunpack.c.l.b16 %v7060
  %v7438 = vunpack.c.l.b16 %v7061
  %v7439 = vunpack.c.l.b16 %v7062
  %v7440 = vunpack.c.l.b16 %v7063
  %v7441 = vunpack.c.l.b16 %v7064
  %v7442 = vunpack.c.l.b16 %v7065
  %v7443 = vunpack.c.l.b16 %v7066
  %v7444 = vunpack.c.l.b16 %v7067
  %v7445 = vunpack.c.l.b16 %v7068
  %v7446 = vunpack.c.l.b16 %v7069
  %v7447 = vunpack.c.l.b16 %v7070
  %v7448 = vunpack.c.l.b16 %v7071
  %v7449 = vunpack.c.l.b16 %v7072
  %v7450 = vunpack.c.l.b16 %v7073
  %v7451 = vunpack.c.l.b16 %v7074
  %v7452 = vunpack.c.l.b16 %v7075
  %v7453 = vunpack.c.l.b16 %v7076
  %v7454 = vunpack.c.l.b16 %v7077
  %v7455 = vunpack.c.l.b16 %v7078
  %v7456 = vunpack.c.l.b16 %v7079
  %v7457 = vunpack.c.l.b16 %v7080
  %v7458 = vunpack.c.l.b16 %v7081
  %v7459 = vunpack.c.l.b16 %v7082
  %v7460 = vunpack.c.l.b16 %v7083
  %v7461 = vunpack.c.l.b16 %v7084
  %v7462 = vunpack.c.l.b16 %v7085
  %v7463 = vunpack.c.l.b16 %v7086
  %v7464 = vunpack.c.l.b16 %v7087
  %v7465 = vunpack.c.l.b16 %v7088
  %v7466 = vunpack.c.l.b16 %v7089
  %v7467 = vunpack.c.l.b16 %v7090
  %v7468 = vunpack.c.l.b16 %v7091
  %v7469 = vunpack.c.l.b16 %v7092
  %v7470 = vunpack.c.l.b16 %v7093
  %v7471 = vpack.c.b16 %v7436, %v7435
  %v7472 = vpack.c.b16 %v7438, %v7437
  %v7473 = vpack.c.b16 %v7440, %v7439
  %v7474 = vpack.c.b16 %v7442, %v7441
  %v7475 = vpack.c.b16 %v7444, %v7443
  %v7476 = vpack.c.b16 %v7446, %v7445
  %v7477 = vpack.c.b16 %v7448, %v7447
  %v7478 = vpack.c.b16 %v7450, %v7449
  %v7479 = vpack.c.b16 %v7452, %v7451
  %v7480 = vpack.c.b16 %v7454, %v7453
  %v7481 = vpack.c.b16 %v7456, %v7455
  %v7482 = vpack.c.b16 %v7458, %v7457
  %v7483 = vpack.c.b16 %v7460, %v7459
  %v7484 = vpack.c.b16 %v7462, %v7461
  %v7485 = vpack.c.b16 %v7464, %v7463
  %v7486 = vpack.c.b16 %v7466, %v7465
  %v7487 = vpack.c.b16 %v7468, %v7467
  %v7488 = vpack.c.b16 %v7470, %v7469
  %v7508 = vsel %vm6508, %v7396, 0
  %7510 = vmatprep.subr.bf16.mxu0 0
  %7511 = vmatpush1.bf16.msra.mxu0 %v7471
  %7512 = vmatprep.subr.bf16.mxu0 0
  %7513 = vmatpush1.bf16.msra.mxu0 %v7472
  %7514 = vmatprep.subr.bf16.mxu0 0
  %7515 = vmatpush1.bf16.msra.mxu0 %v7473
  %7516 = vmatprep.subr.bf16.mxu0 0
  %7517 = vmatpush1.bf16.msra.mxu0 %v7474
  %7518 = vmatprep.subr.bf16.mxu0 0
  %7519 = vmatpush1.bf16.msra.mxu0 %v7475
  %7520 = vmatprep.subr.bf16.mxu0 0
  %7521 = vmatpush1.bf16.msra.mxu0 %v7476
  %7522 = vmatprep.subr.bf16.mxu0 0
  %7523 = vmatpush1.bf16.msra.mxu0 %v7477
  %7524 = vmatprep.subr.bf16.mxu0 0
  %7525 = vmatpush1.bf16.msra.mxu0 %v7478
  %7526 = vmatprep.subr.bf16.mxu0 0
  %7527 = vmatpush1.bf16.msra.mxu0 %v7479
  %7528 = vmatprep.subr.bf16.mxu0 0
  %7529 = vmatpush1.bf16.msra.mxu0 %v7480
  %7530 = vmatprep.subr.bf16.mxu0 0
  %7531 = vmatpush1.bf16.msra.mxu0 %v7481
  %7532 = vmatprep.subr.bf16.mxu0 0
  %7533 = vmatpush1.bf16.msra.mxu0 %v7482
  %7534 = vmatprep.subr.bf16.mxu0 0
  %7535 = vmatpush1.bf16.msra.mxu0 %v7483
  %7536 = vmatprep.subr.bf16.mxu0 0
  %7537 = vmatpush1.bf16.msra.mxu0 %v7484
  %7538 = vmatprep.subr.bf16.mxu0 0
  %7539 = vmatpush1.bf16.msra.mxu0 %v7485
  %7540 = vmatprep.subr.bf16.mxu0 0
  %7541 = vmatpush1.bf16.msra.mxu0 %v7486
  %7542 = vmatprep.mubr.bf16.mxu0 %v7388
  %7543 = vmatmul.mubr.bf16.gmra.mrb[0].mxu0 %v7381
  %v7544 = vpop.f32.mrb[0].mxu0
  %v7545 = vadd.f32 0.0, %v7544
  %v7546 = vpop.f32.mrb[0].mxu0
  %v7547 = vpop.f32.mrb[0].mxu0
  %v7548 = vpop.f32.mrb[0].mxu0
  %7549 = vdwg.mxu0
  %7550 = vmatprep.subr.bf16.mxu0 0
  %7551 = vmatpush1.bf16.msra.mxu0 %v7487
  %7552 = vmatprep.subr.bf16.mxu0 0
  %7553 = vmatpush1.bf16.msra.mxu0 %v7488
  %7554 = vmatprep.subr.bf16.mxu0 0
  %7555 = vmatpush1.bf16.msra.mxu0 0
  %7556 = vmatprep.subr.bf16.mxu0 0
  %7557 = vmatpush1.bf16.msra.mxu0 0
  %7558 = vmatprep.subr.bf16.mxu0 0
  %7559 = vmatpush1.bf16.msra.mxu0 0
  %7560 = vmatprep.subr.bf16.mxu0 0
  %7561 = vmatpush1.bf16.msra.mxu0 0
  %7562 = vmatprep.subr.bf16.mxu0 0
  %7563 = vmatpush1.bf16.msra.mxu0 0
  %7564 = vmatprep.subr.bf16.mxu0 0
  %7565 = vmatpush1.bf16.msra.mxu0 0
  %7566 = vmatprep.subr.bf16.mxu0 0
  %7567 = vmatpush1.bf16.msra.mxu0 0
  %7568 = vmatprep.subr.bf16.mxu0 0
  %7569 = vmatpush1.bf16.msra.mxu0 0
  %7570 = vmatprep.subr.bf16.mxu0 0
  %7571 = vmatpush1.bf16.msra.mxu0 0
  %7572 = vmatprep.subr.bf16.mxu0 0
  %7573 = vmatpush1.bf16.msra.mxu0 0
  %7574 = vmatprep.subr.bf16.mxu0 0
  %7575 = vmatpush1.bf16.msra.mxu0 0
  %7576 = vmatprep.subr.bf16.mxu0 0
  %7577 = vmatpush1.bf16.msra.mxu0 0
  %7578 = vmatprep.subr.bf16.mxu0 0
  %7579 = vmatpush1.bf16.msra.mxu0 0
  %7580 = vmatprep.subr.bf16.mxu0 0
  %7581 = vmatpush1.bf16.msra.mxu0 0
  %7582 = vmatprep.mubr.bf16.mxu0 0
  %7583 = vmatmul.mubr.bf16.gmra.mrb[0].mxu0 %v7508
  %v7584 = vpop.f32.mrb[0].mxu0
  %v7585 = vadd.f32 %v7545, %v7584
  %v7586 = vpop.f32.mrb[0].mxu0
  %v7587 = vpop.f32.mrb[0].mxu0
  %v7588 = vpop.f32.mrb[0].mxu0
  %7589 = vdwg.mxu0
  %v7590 = vlaneseq
  %v7591 = vshrl.u32 %v7590, 7
  %v7592 = vsub.s32 0, %v7591
  %v7593 = vrot.slane %v7095, %v7592
  %v7594 = vmul.f32 %v7585, %v7593
  %v7595 = vlaneseq
  %v7596 = vshrl.u32 %v7595, 7
  %v7597 = vsub.s32 0, %v7596
  %v7598 = vrot.slane %v7096, %v7597
  %v7599 = vadd.f32 %v7594, %v7598
  %v7600 = vmax.f32 %v7599, 0.0
  %7601 = vst.msk [vmem:[#allocation5] sm:$0xff] %vm6526, %v7600
  %v7602 = vld [vmem:[#allocation5] ss:$4 sm:$0x3]
  %s7603 = scalar_lea.vmem [#allocation5], 1
  %v7604 = vld [vmem:[%s7603] ss:$4 sm:$0x3]
  %v7605 = vadd.f32 %v7602, %v7604
  %s7606 = scalar_lea.vmem [#allocation5], 2
  %v7607 = vld [vmem:[%s7606] ss:$4 sm:$0x3]
  %v7608 = vadd.f32 %v7605, %v7607
  %s7609 = scalar_lea.vmem [#allocation5], 3
  %v7610 = vld [vmem:[%s7609] ss:$4 sm:$0x3]
  %v7611 = vadd.f32 %v7608, %v7610
  %v7612 = vmul.f32 %v7611, 0.25
  %v7613 = vpack.c.bf16 %v7612, %v7612
  %v7614 = vld [vmem:[%s1 + $0xfc] sm:$0xf]
  %v7615 = vld [vmem:[%s1 + $0x100] sm:$0xf]
  %v7616 = vld [vmem:[%s1 + $0x104] sm:$0xf]
  %v7617 = vld [vmem:[%s1 + $0x108] sm:$0xf]
  %v7618 = vld [vmem:[%s1 + $0x10c] sm:$0xf]
  %v7619 = vld [vmem:[%s1 + $0x110] sm:$0xf]
  %v7620 = vld [vmem:[%s1 + $0x114] sm:$0xf]
  %v7621 = vld [vmem:[%s1 + $0x118] sm:$0xf]
  %v7622 = vld [vmem:[%s2 + $0x6] sm:$0x1]
  %v7623 = vlaneseq
  %v7624 = vshrl.u32 %v7623, 7
  %v7625 = vsub.s32 0, %v7624
  %v7626 = vrot.slane %v7622, %v7625
  %v7635 = vunpack.c.l.b16 %v7614
  %v7636 = vunpack.c.l.b16 %v7615
  %v7637 = vunpack.c.l.b16 %v7616
  %v7638 = vunpack.c.l.b16 %v7617
  %v7639 = vunpack.c.l.b16 %v7618
  %v7640 = vunpack.c.l.b16 %v7619
  %v7641 = vunpack.c.l.b16 %v7620
  %v7642 = vunpack.c.l.b16 %v7621
  %v7643 = vpack.c.b16 %v7636, %v7635
  %v7644 = vpack.c.b16 %v7638, %v7637
  %v7645 = vpack.c.b16 %v7640, %v7639
  %v7646 = vpack.c.b16 %v7642, %v7641
  %v7652 = vsel %vm6526, %v7613, 0
  %7654 = vmatprep.subr.bf16.mxu0 0
  %7655 = vmatpush1.bf16.msra.mxu0 %v7643
  %7656 = vmatprep.subr.bf16.mxu0 0
  %7657 = vmatpush1.bf16.msra.mxu0 %v7644
  %7658 = vmatprep.subr.bf16.mxu0 0
  %7659 = vmatpush1.bf16.msra.mxu0 %v7645
  %7660 = vmatprep.subr.bf16.mxu0 0
  %7661 = vmatpush1.bf16.msra.mxu0 %v7646
  %7662 = vmatprep.subr.bf16.mxu0 0
  %7663 = vmatpush1.bf16.msra.mxu0 0
  %7664 = vmatprep.subr.bf16.mxu0 0
  %7665 = vmatpush1.bf16.msra.mxu0 0
  %7666 = vmatprep.subr.bf16.mxu0 0
  %7667 = vmatpush1.bf16.msra.mxu0 0
  %7668 = vmatprep.subr.bf16.mxu0 0
  %7669 = vmatpush1.bf16.msra.mxu0 0
  %7670 = vmatprep.subr.bf16.mxu0 0
  %7671 = vmatpush1.bf16.msra.mxu0 0
  %7672 = vmatprep.subr.bf16.mxu0 0
  %7673 = vmatpush1.bf16.msra.mxu0 0
  %7674 = vmatprep.subr.bf16.mxu0 0
  %7675 = vmatpush1.bf16.msra.mxu0 0
  %7676 = vmatprep.subr.bf16.mxu0 0
  %7677 = vmatpush1.bf16.msra.mxu0 0
  %7678 = vmatprep.subr.bf16.mxu0 0
  %7679 = vmatpush1.bf16.msra.mxu0 0
  %7680 = vmatprep.subr.bf16.mxu0 0
  %7681 = vmatpush1.bf16.msra.mxu0 0
  %7682 = vmatprep.subr.bf16.mxu0 0
  %7683 = vmatpush1.bf16.msra.mxu0 0
  %7684 = vmatprep.subr.bf16.mxu0 0
  %7685 = vmatpush1.bf16.msra.mxu0 0
  %7686 = vmatprep.mubr.bf16.mxu0 0
  %7687 = vmatmul.mubr.bf16.gmra.mrb[0].mxu0 %v7652
  %v7688 = vpop.f32.mrb[0].mxu0
  %v7689 = vadd.f32 %v7626, %v7688
  %v7690 = vpop.f32.mrb[0].mxu0
  %v7691 = vpop.f32.mrb[0].mxu0
  %v7692 = vpop.f32.mrb[0].mxu0
  %7693 = vdwg.mxu0
  %v7694 = vmax.f32 %v7689, 0.0
  %v7695 = vpack.c.bf16 %v7694, %v7694
  %v7696 = vld [vmem:[%s1 + $0x11c] sm:$0xf]
  %v7697 = vld [vmem:[%s1 + $0x120] sm:$0xf]
  %v7698 = vld [vmem:[%s1 + $0x124] sm:$0xf]
  %v7699 = vld [vmem:[%s1 + $0x128] sm:$0xf]
  %v7700 = vld [vmem:[%s1 + $0x12c] sm:$0xf]
  %v7701 = vld [vmem:[%s1 + $0x130] sm:$0xf]
  %v7702 = vld [vmem:[%s1 + $0x134] sm:$0xf]
  %v7703 = vld [vmem:[%s1 + $0x138] sm:$0xf]
  %v7704 = vld [vmem:[%s1 + $0x13c] sm:$0xf]
  %v7705 = vld [vmem:[%s1 + $0x140] sm:$0xf]
  %v7706 = vld [vmem:[%s1 + $0x144] sm:$0xf]
  %v7707 = vld [vmem:[%s1 + $0x148] sm:$0xf]
  %v7708 = vld [vmem:[%s1 + $0x14c] sm:$0xf]
  %v7709 = vld [vmem:[%s1 + $0x150] sm:$0xf]
  %v7710 = vld [vmem:[%s1 + $0x154] sm:$0xf]
  %v7711 = vld [vmem:[%s1 + $0x158] sm:$0xf]
  %v7712 = vld [vmem:[%s2 + $0x7] sm:$0x1]
  %v7713 = vlaneseq
  %v7714 = vshrl.u32 %v7713, 7
  %v7715 = vsub.s32 0, %v7714
  %v7716 = vrot.slane %v7712, %v7715
  %v7733 = vunpack.c.l.b16 %v7696
  %v7734 = vunpack.c.l.b16 %v7697
  %v7735 = vunpack.c.l.b16 %v7698
  %v7736 = vunpack.c.l.b16 %v7699
  %v7737 = vunpack.c.l.b16 %v7700
  %v7738 = vunpack.c.l.b16 %v7701
  %v7739 = vunpack.c.l.b16 %v7702
  %v7740 = vunpack.c.l.b16 %v7703
  %v7741 = vunpack.c.l.b16 %v7704
  %v7742 = vunpack.c.l.b16 %v7705
  %v7743 = vunpack.c.l.b16 %v7706
  %v7744 = vunpack.c.l.b16 %v7707
  %v7745 = vunpack.c.l.b16 %v7708
  %v7746 = vunpack.c.l.b16 %v7709
  %v7747 = vunpack.c.l.b16 %v7710
  %v7748 = vunpack.c.l.b16 %v7711
  %v7749 = vpack.c.b16 %v7734, %v7733
  %v7750 = vpack.c.b16 %v7736, %v7735
  %v7751 = vpack.c.b16 %v7738, %v7737
  %v7752 = vpack.c.b16 %v7740, %v7739
  %v7753 = vpack.c.b16 %v7742, %v7741
  %v7754 = vpack.c.b16 %v7744, %v7743
  %v7755 = vpack.c.b16 %v7746, %v7745
  %v7756 = vpack.c.b16 %v7748, %v7747
  %7765 = vmatprep.subr.bf16.mxu0 0
  %7766 = vmatpush1.bf16.msra.mxu0 %v7749
  %7767 = vmatprep.subr.bf16.mxu0 0
  %7768 = vmatpush1.bf16.msra.mxu0 %v7750
  %7769 = vmatprep.subr.bf16.mxu0 0
  %7770 = vmatpush1.bf16.msra.mxu0 %v7751
  %7771 = vmatprep.subr.bf16.mxu0 0
  %7772 = vmatpush1.bf16.msra.mxu0 %v7752
  %7773 = vmatprep.subr.bf16.mxu0 0
  %7774 = vmatpush1.bf16.msra.mxu0 %v7753
  %7775 = vmatprep.subr.bf16.mxu0 0
  %7776 = vmatpush1.bf16.msra.mxu0 %v7754
  %7777 = vmatprep.subr.bf16.mxu0 0
  %7778 = vmatpush1.bf16.msra.mxu0 %v7755
  %7779 = vmatprep.subr.bf16.mxu0 0
  %7780 = vmatpush1.bf16.msra.mxu0 %v7756
  %7781 = vmatprep.subr.bf16.mxu0 0
  %7782 = vmatpush1.bf16.msra.mxu0 0
  %7783 = vmatprep.subr.bf16.mxu0 0
  %7784 = vmatpush1.bf16.msra.mxu0 0
  %7785 = vmatprep.subr.bf16.mxu0 0
  %7786 = vmatpush1.bf16.msra.mxu0 0
  %7787 = vmatprep.subr.bf16.mxu0 0
  %7788 = vmatpush1.bf16.msra.mxu0 0
  %7789 = vmatprep.subr.bf16.mxu0 0
  %7790 = vmatpush1.bf16.msra.mxu0 0
  %7791 = vmatprep.subr.bf16.mxu0 0
  %7792 = vmatpush1.bf16.msra.mxu0 0
  %7793 = vmatprep.subr.bf16.mxu0 0
  %7794 = vmatpush1.bf16.msra.mxu0 0
  %7795 = vmatprep.subr.bf16.mxu0 0
  %7796 = vmatpush1.bf16.msra.mxu0 0
  %7797 = vmatprep.mubr.bf16.mxu0 0
  %7798 = vmatmul.mubr.bf16.gmra.mrb[0].mxu0 %v7695
  %v7799 = vpop.f32.mrb[0].mxu0
  %v7800 = vadd.f32 %v7716, %v7799
  %v7801 = vpop.f32.mrb[0].mxu0
  %v7802 = vpop.f32.mrb[0].mxu0
  %v7803 = vpop.f32.mrb[0].mxu0
  %7804 = vdwg.mxu0
  %7805 = vst [vmem:[%s3] sm:$0x3] %v7800
  // Predicated region
  $region14: #{forward.1} parent=0 // pred_check
    _
  $region15: #{forward.1} parent=0 // pred_check_branch
    %7807 = sbr.rel (0) target = $region17
  $region16: #{forward.1} parent=0 // pred_region
    _
  $region17: #{forward.1} parent=0 // pred_fallthru
    _
  // Predicated region
  $region18: #{forward.1} parent=0 // pred_check
    _
  $region19: #{forward.1} parent=0 // pred_check_branch
    %7809 = sbr.rel (0) target = $region21
  $region20: #{forward.1} parent=0 // pred_region
    _
  $region21: #{forward.1} parent=0 // pred_fallthru
    _

</llo_original>
